<compile_context>
chip_gen: v7x
topology: tpu7x:2x2x1
jax: 0.10.0
libtpu: 0.0.40
codegen_flags: <defaults>
</compile_context>

<pallas_src>
import math
from functools import partial

import jax
import jax.numpy as jnp
import numpy as np
from jax.experimental import pallas as pl
from jax.experimental.pallas import tpu as pltpu

LN_EPS = 1e-5  # PyTorch nn.LayerNorm default
_GELU_C = math.sqrt(2.0 / math.pi)

# 13 small per-feature vectors (biases + LayerNorm affine), packed into one f32 slab.
_VEC_NAMES = ("bq", "bk", "bv", "biq", "bik", "biv", "bo",
              "ln1_g", "ln1_b", "bf1", "bf2", "ln2_g", "ln2_b")
_VIDX = {n: i for i, n in enumerate(_VEC_NAMES)}
# Matrices with E output columns, stacked along their K (input) axis into one slab.
_SLAB_MAT_NAMES = ("wq", "wk", "wv", "wiq", "wik", "wiv", "wo", "wf2")


def _round_up(x, m):
    return ((x + m - 1) // m) * m


def _gelu_tanh(x):
    # tanh-form GELU: tanh runs on the EUP (otherwise idle slot).
    return 0.5 * x * (1.0 + jnp.tanh(_GELU_C * (x + 0.044715 * x * x * x)))


def _layernorm(x, gamma, beta):
    mu = jnp.mean(x, axis=-1, keepdims=True)
    xm = x - mu
    var = jnp.mean(xm * xm, axis=-1, keepdims=True)
    return xm * jax.lax.rsqrt(var + LN_EPS) * gamma + beta


def transformer_block_kernel(
    emb_ref, inp_ref, wslab_ref, wf1_ref, vslab_ref, out_ref,
    *, num_heads, w_offsets, matmul_dtype,
):
    f32 = jnp.float32
    TB, Lq, Dq = emb_ref.shape
    _, Lk, Dk = inp_ref.shape
    E = wslab_ref.shape[1]
    I = wf1_ref.shape[1]
    P = out_ref.shape[2]          # lane-padded output feature width (multiple of 128)
    H = num_heads
    hd = E // H
    Rq, Rk = TB * Lq, TB * Lk

    # ---- small bias / LayerNorm vectors: one resident slab, sliced once up front ----
    vslab = vslab_ref[...]

    def vec(name, n):
        r = _VIDX[name]
        return vslab[r:r + 1, :n]            # (1, n) f32, broadcasts over rows

    bq, bk, bv = vec("bq", E), vec("bk", E), vec("bv", E)
    biq, bik, biv = vec("biq", E), vec("bik", E), vec("biv", E)
    bo = vec("bo", E)
    ln1_g, ln1_b = vec("ln1_g", E), vec("ln1_b", E)
    ln2_g, ln2_b = vec("ln2_g", E), vec("ln2_b", E)
    bf1, bf2 = vec("bf1", I), vec("bf2", E)

    def mat(name):
        r0, k = w_offsets[name]              # static python ints
        return wslab_ref[r0:r0 + k, :]       # (k, E) slice of the packed weight slab

    def mm(x, w):
        # MXU matmul; operands optionally bf16, accumulation in f32.
        return jnp.dot(x.astype(matmul_dtype), w, preferred_element_type=f32)

    # ---- batch tile flattened into the matmul row (sublane) dimension ----
    emb = emb_ref[...].astype(f32).reshape(Rq, Dq)
    inp = inp_ref[...].astype(f32).reshape(Rk, Dk)

    # pre-projections (self.query / self.key / self.value)
    q = mm(emb, mat("wq")) + bq
    k = mm(inp, mat("wk")) + bk
    v = mm(inp, mat("wv")) + bv

    # nn.MultiheadAttention in-projections (1/sqrt(hd) folded into wiq/biq in wrapper)
    q = mm(q, mat("wiq")) + biq
    k = mm(k, mat("wik")) + bik
    v = mm(v, mat("wiv")) + biv

    # ---- multi-head attention (cast once for all attention matmuls) ----
    q3 = q.reshape(TB, Lq, E).astype(matmul_dtype)
    k3 = k.reshape(TB, Lk, E).astype(matmul_dtype)
    v3 = v.reshape(TB, Lk, E).astype(matmul_dtype)

    heads = []
    for h in range(H):                       # static unroll; each step batched over TB
        lo = h * hd
        qh = q3[:, :, lo:lo + hd]
        kh = k3[:, :, lo:lo + hd]
        vh = v3[:, :, lo:lo + hd]
        s = jnp.einsum("bqd,bkd->bqk", qh, kh, preferred_element_type=f32)
        s = s - jnp.max(s, axis=-1, keepdims=True)
        p = jnp.exp(s)
        # divide -> EUP reciprocal (free slot alongside the exp)
        p = p * pl.reciprocal(jnp.sum(p, axis=-1, keepdims=True), approx=True)
        # attention dropout: identity in eval mode
        oh = jnp.einsum("bqk,bkd->bqd", p.astype(matmul_dtype), vh,
                        preferred_element_type=f32)
        heads.append(oh.reshape(Rq, hd))
    attn_cat = jnp.concatenate(heads, axis=-1)   # (Rq, E), in registers (no scratch)

    # single output projection over the concatenated heads
    attn = mm(attn_cat, mat("wo")) + bo

    # ---- residual + layernorm1 (requires query_dim == embed_dim, as in PyTorch) ----
    inter = _layernorm(attn + emb, ln1_g, ln1_b)

    # ---- feedforward: Linear -> GELU -> Linear -> Dropout(identity) ----
    h1 = _gelu_tanh(mm(inter, wf1_ref[...]) + bf1)
    ff = mm(h1, mat("wf2")) + bf2

    out = _layernorm(inter + ff, ln2_g, ln2_b)

    # ---- lane-dense store: zero-pad features E -> P (multiple of 128) ----
    if P > E:
        out = jnp.concatenate([out, jnp.zeros((Rq, P - E), f32)], axis=-1)
    out_ref[...] = out.reshape(TB, Lq, P).astype(out_ref.dtype)


def _default_batch_tile(B):
    # grid=(1,) on single-TensorCore chips (v5e/v6e): each grid step costs ~0.35 us of
    # pipeline setup with no parallelism to gain.  On v7x (2 TCs/chip), use 2 parallel
    # steps when the batch splits evenly; otherwise fall back to one step (never TB=1).
    try:
        kind = jax.devices()[0].device_kind.lower()
    except Exception:
        kind = ""
    if "v7" in kind and B >= 2 and B % 2 == 0:
        return B // 2
    return B


def transformer_block(emb_for_query, inputs, params, num_heads, *,
                      batch_tile=None, matmul_dtype=jnp.float32):
    B, Lq, Dq = emb_for_query.shape
    Bi, Lk, Dk = inputs.shape
    E = params["wq"].shape[1]
    I = params["wf1"].shape[1]
    assert Bi == B
    assert Dq == E, "residual (attn + emb_for_query) requires query_dim == embed_dim"
    assert E % num_heads == 0
    hd = E // num_heads
    scale = 1.0 / math.sqrt(hd)

    TB = batch_tile if batch_tile is not None else _default_batch_tile(B)
    assert B % TB == 0, "batch_tile must divide the batch"
    nb = B // TB

    P = _round_up(E, 128)        # lane-dense output feature width

    # ---- pack the E-column weight matrices into ONE slab (stacked along K) ----
    # 1/sqrt(hd) attention scale is folded into the q in-projection (static transform).
    mats = {n: params[n] for n in _SLAB_MAT_NAMES}
    mats["wiq"] = params["wiq"] * scale

    w_offsets = {}
    blocks = []
    row = 0
    for name in _SLAB_MAT_NAMES:
        m = mats[name].astype(jnp.float32)
        kdim = m.shape[0]
        w_offsets[name] = (row, kdim)
        kp = _round_up(kdim, 8)              # keep row offsets sublane-aligned
        if kp != kdim:
            m = jnp.concatenate([m, jnp.zeros((kp - kdim, E), m.dtype)], axis=0)
        blocks.append(m)
        row += kp
    wslab = jnp.concatenate(blocks, axis=0).astype(matmul_dtype)   # (sum_K, E)
    wf1 = params["wf1"].astype(matmul_dtype)                       # (E, I) separate slab

    # ---- pack the 13 tiny bias / LayerNorm vectors into a single f32 slab ----
    width = max(E, I)
    vec_src = {n: params[n] for n in _VEC_NAMES}
    vec_src["biq"] = params["biq"] * scale
    rows = []
    for n in _VEC_NAMES:
        vv = vec_src[n].reshape(-1).astype(jnp.float32)
        rows.append(jnp.pad(vv, (0, width - vv.shape[0])))
    vslab = jnp.stack(rows, axis=0)                                # (13, max(E, I))

    def resident(arr):
        nd = arr.ndim
        return pl.BlockSpec(arr.shape, lambda b, _nd=nd: (0,) * _nd)

    in_specs = [
        pl.BlockSpec((TB, Lq, Dq), lambda b: (b, 0, 0)),
        pl.BlockSpec((TB, Lk, Dk), lambda b: (b, 0, 0)),
        resident(wslab),
        resident(wf1),
        resident(vslab),
    ]
    out_spec = pl.BlockSpec((TB, Lq, P), lambda b: (b, 0, 0))

    out = pl.pallas_call(
        partial(transformer_block_kernel, num_heads=num_heads,
                w_offsets=w_offsets, matmul_dtype=matmul_dtype),
        out_shape=jax.ShapeDtypeStruct((B, Lq, P), jnp.float32),
        grid_spec=pltpu.PrefetchScalarGridSpec(
            num_scalar_prefetch=0,
            grid=(nb,),
            in_specs=in_specs,
            out_specs=out_spec,
        ),
        compiler_params=pltpu.CompilerParams(
            dimension_semantics=("parallel",)),
    )(emb_for_query, inputs, wslab, wf1, vslab)

    return out if P == E else out[..., :E]


def reference_forward(emb, inp, params, num_heads):
    """Pure-JAX f32 reference with the same (in, out) weight layout (exact-erf GELU)."""
    q0 = emb @ params["wq"] + params["bq"]
    k0 = inp @ params["wk"] + params["bk"]
    v0 = inp @ params["wv"] + params["bv"]
    q = q0 @ params["wiq"] + params["biq"]
    k = k0 @ params["wik"] + params["bik"]
    v = v0 @ params["wiv"] + params["biv"]
    B, Lq, E = q.shape
    Lk = k.shape[1]
    hd = E // num_heads
    qh = q.reshape(B, Lq, num_heads, hd).transpose(0, 2, 1, 3) / math.sqrt(hd)
    kh = k.reshape(B, Lk, num_heads, hd).transpose(0, 2, 1, 3)
    vh = v.reshape(B, Lk, num_heads, hd).transpose(0, 2, 1, 3)
    s = jnp.einsum("bhqd,bhkd->bhqk", qh, kh)
    p = jax.nn.softmax(s, axis=-1)
    o = jnp.einsum("bhqk,bhkd->bhqd", p, vh).transpose(0, 2, 1, 3).reshape(B, Lq, E)
    attn = o @ params["wo"] + params["bo"]

    def ln(x, g, b):
        mu = x.mean(-1, keepdims=True)
        var = ((x - mu) ** 2).mean(-1, keepdims=True)
        return (x - mu) / jnp.sqrt(var + LN_EPS) * g + b

    inter = ln(attn + emb, params["ln1_g"], params["ln1_b"])
    h1 = jax.nn.gelu(inter @ params["wf1"] + params["bf1"], approximate=False)
    ff = h1 @ params["wf2"] + params["bf2"]
    return ln(inter + ff, params["ln2_g"], params["ln2_b"])


if __name__ == "__main__":
    B, Lq, Lk = 4, 8, 8
    query_dim = embed_dim = 32
    key_dim = 16
    num_heads = 4
    intermediate_dim = 64

    keys = iter(jax.random.split(jax.random.PRNGKey(0), 32))

    def w(shape, scale=0.1):
        return (scale * jax.random.normal(next(keys), shape)).astype(jnp.float32)

    params = {
        "wq": w((query_dim, embed_dim)), "bq": w((1, embed_dim)),
        "wk": w((key_dim, embed_dim)),   "bk": w((1, embed_dim)),
        "wv": w((key_dim, embed_dim)),   "bv": w((1, embed_dim)),
        "wiq": w((embed_dim, embed_dim)), "biq": w((1, embed_dim)),
        "wik": w((embed_dim, embed_dim)), "bik": w((1, embed_dim)),
        "wiv": w((embed_dim, embed_dim)), "biv": w((1, embed_dim)),
        "wo": w((embed_dim, embed_dim)),  "bo": w((1, embed_dim)),
        "ln1_g": jnp.ones((1, embed_dim), jnp.float32),
        "ln1_b": jnp.zeros((1, embed_dim), jnp.float32),
        "wf1": w((embed_dim, intermediate_dim)), "bf1": w((1, intermediate_dim)),
        "wf2": w((intermediate_dim, embed_dim)), "bf2": w((1, embed_dim)),
        "ln2_g": jnp.ones((1, embed_dim), jnp.float32),
        "ln2_b": jnp.zeros((1, embed_dim), jnp.float32),
    }

    emb_for_query = jax.random.normal(next(keys), (B, Lq, query_dim), jnp.float32)
    inputs = jax.random.normal(next(keys), (B, Lk, key_dim), jnp.float32)

    ref = reference_forward(emb_for_query, inputs, params, num_heads)

    # f32 path (default: grid=(1,) on v5e/v6e, 2 parallel steps on v7x)
    out = transformer_block(emb_for_query, inputs, params, num_heads)
    out = jax.block_until_ready(out)
    assert out.shape == (B, Lq, embed_dim)
    # tolerance covers tanh-GELU (vs erf) and approx-reciprocal softmax deviations
    np.testing.assert_allclose(np.asarray(out), np.asarray(ref), rtol=5e-3, atol=5e-3)

    # bf16 matmul path (full MXU rate on v5e/v6e/v7x); accumulation stays f32
    out_bf16 = transformer_block(emb_for_query, inputs, params, num_heads,
                                 matmul_dtype=jnp.bfloat16)
    out_bf16 = jax.block_until_ready(out_bf16)
    np.testing.assert_allclose(np.asarray(out_bf16), np.asarray(ref),
                               rtol=5e-2, atol=5e-2)

    print("KERNEL_OK")
</pallas_src>

<mosaic_0001>
module attributes {stable_mosaic.version = 11 : i64} {
  func.func @transformer_block_kernel(%arg0: i32, %arg1: memref<4x8x32xf32, #tpu.memory_space<vmem>>, %arg2: memref<4x8x16xf32, #tpu.memory_space<vmem>>, %arg3: memref<256x32xf32, #tpu.memory_space<vmem>>, %arg4: memref<32x64xf32, #tpu.memory_space<vmem>>, %arg5: memref<13x64xf32, #tpu.memory_space<vmem>>, %arg6: memref<4x8x128xf32, #tpu.memory_space<vmem>>) attributes {dimension_semantics = [#tpu.dimension_semantics<parallel>], iteration_bounds = array<i64: 1>, scalar_prefetch = 0 : i64, scratch_operands = 0 : i64, tpu.core_type = #tpu.core_type<tc>, window_params = [{transform_indices = @transform_0, window_bounds = array<i64: 4, 8, 32>}, {transform_indices = @transform_1, window_bounds = array<i64: 4, 8, 16>}, {pipeline_mode = #tpu.pipeline_mode<synchronous>, transform_indices = @transform_2, window_bounds = array<i64: 256, 32>}, {pipeline_mode = #tpu.pipeline_mode<synchronous>, transform_indices = @transform_3, window_bounds = array<i64: 32, 64>}, {pipeline_mode = #tpu.pipeline_mode<synchronous>, transform_indices = @transform_4, window_bounds = array<i64: 13, 64>}, {transform_indices = @transform_5, window_bounds = array<i64: 4, 8, 128>}]} {
    %c0 = arith.constant 0 : index
    %c0_0 = arith.constant 0 : index
    %0 = vector.load %arg5[%c0, %c0_0] : memref<13x64xf32, #tpu.memory_space<vmem>>, vector<13x64xf32>
    %1 = vector.extract_strided_slice %0 {offsets = [0, 0], sizes = [1, 32], strides = [1, 1]} : vector<13x64xf32> to vector<1x32xf32>
    %2 = vector.extract_strided_slice %0 {offsets = [1, 0], sizes = [1, 32], strides = [1, 1]} : vector<13x64xf32> to vector<1x32xf32>
    %3 = vector.extract_strided_slice %0 {offsets = [2, 0], sizes = [1, 32], strides = [1, 1]} : vector<13x64xf32> to vector<1x32xf32>
    %4 = vector.extract_strided_slice %0 {offsets = [3, 0], sizes = [1, 32], strides = [1, 1]} : vector<13x64xf32> to vector<1x32xf32>
    %5 = vector.extract_strided_slice %0 {offsets = [4, 0], sizes = [1, 32], strides = [1, 1]} : vector<13x64xf32> to vector<1x32xf32>
    %6 = vector.extract_strided_slice %0 {offsets = [5, 0], sizes = [1, 32], strides = [1, 1]} : vector<13x64xf32> to vector<1x32xf32>
    %7 = vector.extract_strided_slice %0 {offsets = [6, 0], sizes = [1, 32], strides = [1, 1]} : vector<13x64xf32> to vector<1x32xf32>
    %8 = vector.extract_strided_slice %0 {offsets = [7, 0], sizes = [1, 32], strides = [1, 1]} : vector<13x64xf32> to vector<1x32xf32>
    %9 = vector.extract_strided_slice %0 {offsets = [8, 0], sizes = [1, 32], strides = [1, 1]} : vector<13x64xf32> to vector<1x32xf32>
    %10 = vector.extract_strided_slice %0 {offsets = [11, 0], sizes = [1, 32], strides = [1, 1]} : vector<13x64xf32> to vector<1x32xf32>
    %11 = vector.extract_strided_slice %0 {offsets = [12, 0], sizes = [1, 32], strides = [1, 1]} : vector<13x64xf32> to vector<1x32xf32>
    %12 = vector.extract_strided_slice %0 {offsets = [9, 0], sizes = [1, 64], strides = [1, 1]} : vector<13x64xf32> to vector<1x64xf32>
    %13 = vector.extract_strided_slice %0 {offsets = [10, 0], sizes = [1, 32], strides = [1, 1]} : vector<13x64xf32> to vector<1x32xf32>
    %c0_1 = arith.constant 0 : index
    %c0_2 = arith.constant 0 : index
    %c0_3 = arith.constant 0 : index
    %14 = vector.load %arg1[%c0_1, %c0_2, %c0_3] : memref<4x8x32xf32, #tpu.memory_space<vmem>>, vector<4x8x32xf32>
    %15 = vector.shape_cast %14 : vector<4x8x32xf32> to vector<32x32xf32>
    %c0_4 = arith.constant 0 : index
    %c0_5 = arith.constant 0 : index
    %c0_6 = arith.constant 0 : index
    %16 = vector.load %arg2[%c0_4, %c0_5, %c0_6] : memref<4x8x16xf32, #tpu.memory_space<vmem>>, vector<4x8x16xf32>
    %17 = vector.shape_cast %16 : vector<4x8x16xf32> to vector<32x16xf32>
    %c0_7 = arith.constant 0 : index
    %c0_8 = arith.constant 0 : index
    %18 = vector.load %arg3[%c0_7, %c0_8] : memref<256x32xf32, #tpu.memory_space<vmem>>, vector<32x32xf32>
    %cst = arith.constant dense<0.000000e+00> : vector<32x32xf32>
    %19 = tpu.matmul %15, %18, %cst {dimension_numbers = #tpu.dot_dimension_numbers<[1], [0], [0], [1], [0, 0, 1, 1], [], []>} : vector<32x32xf32>, vector<32x32xf32>, vector<32x32xf32> -> vector<32x32xf32>
    %20 = vector.broadcast %1 : vector<1x32xf32> to vector<32x32xf32>
    %21 = arith.addf %19, %20 : vector<32x32xf32>
    %c32 = arith.constant 32 : index
    %c0_9 = arith.constant 0 : index
    %22 = vector.load %arg3[%c32, %c0_9] : memref<256x32xf32, #tpu.memory_space<vmem>>, vector<16x32xf32>
    %cst_10 = arith.constant dense<0.000000e+00> : vector<32x32xf32>
    %23 = tpu.matmul %17, %22, %cst_10 {dimension_numbers = #tpu.dot_dimension_numbers<[1], [0], [0], [1], [0, 0, 1, 1], [], []>} : vector<32x16xf32>, vector<16x32xf32>, vector<32x32xf32> -> vector<32x32xf32>
    %24 = vector.broadcast %2 : vector<1x32xf32> to vector<32x32xf32>
    %25 = arith.addf %23, %24 : vector<32x32xf32>
    %c48 = arith.constant 48 : index
    %c0_11 = arith.constant 0 : index
    %26 = vector.load %arg3[%c48, %c0_11] : memref<256x32xf32, #tpu.memory_space<vmem>>, vector<16x32xf32>
    %cst_12 = arith.constant dense<0.000000e+00> : vector<32x32xf32>
    %27 = tpu.matmul %17, %26, %cst_12 {dimension_numbers = #tpu.dot_dimension_numbers<[1], [0], [0], [1], [0, 0, 1, 1], [], []>} : vector<32x16xf32>, vector<16x32xf32>, vector<32x32xf32> -> vector<32x32xf32>
    %28 = vector.broadcast %3 : vector<1x32xf32> to vector<32x32xf32>
    %29 = arith.addf %27, %28 : vector<32x32xf32>
    %c64 = arith.constant 64 : index
    %c0_13 = arith.constant 0 : index
    %30 = vector.load %arg3[%c64, %c0_13] : memref<256x32xf32, #tpu.memory_space<vmem>>, vector<32x32xf32>
    %cst_14 = arith.constant dense<0.000000e+00> : vector<32x32xf32>
    %31 = tpu.matmul %21, %30, %cst_14 {dimension_numbers = #tpu.dot_dimension_numbers<[1], [0], [0], [1], [0, 0, 1, 1], [], []>} : vector<32x32xf32>, vector<32x32xf32>, vector<32x32xf32> -> vector<32x32xf32>
    %32 = vector.broadcast %4 : vector<1x32xf32> to vector<32x32xf32>
    %33 = arith.addf %31, %32 : vector<32x32xf32>
    %c96 = arith.constant 96 : index
    %c0_15 = arith.constant 0 : index
    %34 = vector.load %arg3[%c96, %c0_15] : memref<256x32xf32, #tpu.memory_space<vmem>>, vector<32x32xf32>
    %cst_16 = arith.constant dense<0.000000e+00> : vector<32x32xf32>
    %35 = tpu.matmul %25, %34, %cst_16 {dimension_numbers = #tpu.dot_dimension_numbers<[1], [0], [0], [1], [0, 0, 1, 1], [], []>} : vector<32x32xf32>, vector<32x32xf32>, vector<32x32xf32> -> vector<32x32xf32>
    %36 = vector.broadcast %5 : vector<1x32xf32> to vector<32x32xf32>
    %37 = arith.addf %35, %36 : vector<32x32xf32>
    %c128 = arith.constant 128 : index
    %c0_17 = arith.constant 0 : index
    %38 = vector.load %arg3[%c128, %c0_17] : memref<256x32xf32, #tpu.memory_space<vmem>>, vector<32x32xf32>
    %cst_18 = arith.constant dense<0.000000e+00> : vector<32x32xf32>
    %39 = tpu.matmul %29, %38, %cst_18 {dimension_numbers = #tpu.dot_dimension_numbers<[1], [0], [0], [1], [0, 0, 1, 1], [], []>} : vector<32x32xf32>, vector<32x32xf32>, vector<32x32xf32> -> vector<32x32xf32>
    %40 = vector.broadcast %6 : vector<1x32xf32> to vector<32x32xf32>
    %41 = arith.addf %39, %40 : vector<32x32xf32>
    %42 = vector.shape_cast %33 : vector<32x32xf32> to vector<4x8x32xf32>
    %43 = vector.shape_cast %37 : vector<32x32xf32> to vector<4x8x32xf32>
    %44 = vector.shape_cast %41 : vector<32x32xf32> to vector<4x8x32xf32>
    %45 = vector.extract_strided_slice %42 {offsets = [0, 0, 0], sizes = [4, 8, 8], strides = [1, 1, 1]} : vector<4x8x32xf32> to vector<4x8x8xf32>
    %46 = vector.extract_strided_slice %43 {offsets = [0, 0, 0], sizes = [4, 8, 8], strides = [1, 1, 1]} : vector<4x8x32xf32> to vector<4x8x8xf32>
    %47 = vector.extract_strided_slice %44 {offsets = [0, 0, 0], sizes = [4, 8, 8], strides = [1, 1, 1]} : vector<4x8x32xf32> to vector<4x8x8xf32>
    "tpu.trace_start"() <{level = 10 : i32, message = "bqd,bkd->bqk"}> : () -> ()
    %cst_19 = arith.constant dense<0.000000e+00> : vector<4x8x8xf32>
    %48 = tpu.matmul %45, %46, %cst_19 {dimension_numbers = #tpu.dot_dimension_numbers<[2], [2], [1], [1], [0, 0, 0, 1, 1, 1], [0], [0]>} : vector<4x8x8xf32>, vector<4x8x8xf32>, vector<4x8x8xf32> -> vector<4x8x8xf32>
    "tpu.trace_stop"() : () -> ()
    %cst_20 = arith.constant dense<0xFF800000> : vector<4x8xf32>
    %49 = vector.multi_reduction <maximumf>, %48, %cst_20 [2] : vector<4x8x8xf32> to vector<4x8xf32>
    %50 = vector.shape_cast %49 : vector<4x8xf32> to vector<4x8x1xf32>
    %51 = vector.broadcast %50 : vector<4x8x1xf32> to vector<4x8x8xf32>
    %52 = arith.subf %48, %51 : vector<4x8x8xf32>
    %53 = math.exp %52 : vector<4x8x8xf32>
    %cst_21 = arith.constant dense<0.000000e+00> : vector<4x8xf32>
    %54 = vector.multi_reduction <add>, %53, %cst_21 [2] : vector<4x8x8xf32> to vector<4x8xf32>
    %55 = vector.shape_cast %54 : vector<4x8xf32> to vector<4x8x1xf32>
    %56 = tpu.reciprocal %55 {approx = true} : vector<4x8x1xf32> -> vector<4x8x1xf32>
    %57 = vector.broadcast %56 : vector<4x8x1xf32> to vector<4x8x8xf32>
    %58 = arith.mulf %53, %57 : vector<4x8x8xf32>
    "tpu.trace_start"() <{level = 10 : i32, message = "bqk,bkd->bqd"}> : () -> ()
    %cst_22 = arith.constant dense<0.000000e+00> : vector<4x8x8xf32>
    %59 = tpu.matmul %58, %47, %cst_22 {dimension_numbers = #tpu.dot_dimension_numbers<[2], [1], [1], [2], [0, 0, 0, 1, 1, 2], [0], [0]>} : vector<4x8x8xf32>, vector<4x8x8xf32>, vector<4x8x8xf32> -> vector<4x8x8xf32>
    "tpu.trace_stop"() : () -> ()
    %60 = vector.shape_cast %59 : vector<4x8x8xf32> to vector<32x8xf32>
    %61 = vector.extract_strided_slice %42 {offsets = [0, 0, 8], sizes = [4, 8, 8], strides = [1, 1, 1]} : vector<4x8x32xf32> to vector<4x8x8xf32>
    %62 = vector.extract_strided_slice %43 {offsets = [0, 0, 8], sizes = [4, 8, 8], strides = [1, 1, 1]} : vector<4x8x32xf32> to vector<4x8x8xf32>
    %63 = vector.extract_strided_slice %44 {offsets = [0, 0, 8], sizes = [4, 8, 8], strides = [1, 1, 1]} : vector<4x8x32xf32> to vector<4x8x8xf32>
    "tpu.trace_start"() <{level = 10 : i32, message = "bqd,bkd->bqk"}> : () -> ()
    %cst_23 = arith.constant dense<0.000000e+00> : vector<4x8x8xf32>
    %64 = tpu.matmul %61, %62, %cst_23 {dimension_numbers = #tpu.dot_dimension_numbers<[2], [2], [1], [1], [0, 0, 0, 1, 1, 1], [0], [0]>} : vector<4x8x8xf32>, vector<4x8x8xf32>, vector<4x8x8xf32> -> vector<4x8x8xf32>
    "tpu.trace_stop"() : () -> ()
    %cst_24 = arith.constant dense<0xFF800000> : vector<4x8xf32>
    %65 = vector.multi_reduction <maximumf>, %64, %cst_24 [2] : vector<4x8x8xf32> to vector<4x8xf32>
    %66 = vector.shape_cast %65 : vector<4x8xf32> to vector<4x8x1xf32>
    %67 = vector.broadcast %66 : vector<4x8x1xf32> to vector<4x8x8xf32>
    %68 = arith.subf %64, %67 : vector<4x8x8xf32>
    %69 = math.exp %68 : vector<4x8x8xf32>
    %cst_25 = arith.constant dense<0.000000e+00> : vector<4x8xf32>
    %70 = vector.multi_reduction <add>, %69, %cst_25 [2] : vector<4x8x8xf32> to vector<4x8xf32>
    %71 = vector.shape_cast %70 : vector<4x8xf32> to vector<4x8x1xf32>
    %72 = tpu.reciprocal %71 {approx = true} : vector<4x8x1xf32> -> vector<4x8x1xf32>
    %73 = vector.broadcast %72 : vector<4x8x1xf32> to vector<4x8x8xf32>
    %74 = arith.mulf %69, %73 : vector<4x8x8xf32>
    "tpu.trace_start"() <{level = 10 : i32, message = "bqk,bkd->bqd"}> : () -> ()
    %cst_26 = arith.constant dense<0.000000e+00> : vector<4x8x8xf32>
    %75 = tpu.matmul %74, %63, %cst_26 {dimension_numbers = #tpu.dot_dimension_numbers<[2], [1], [1], [2], [0, 0, 0, 1, 1, 2], [0], [0]>} : vector<4x8x8xf32>, vector<4x8x8xf32>, vector<4x8x8xf32> -> vector<4x8x8xf32>
    "tpu.trace_stop"() : () -> ()
    %76 = vector.shape_cast %75 : vector<4x8x8xf32> to vector<32x8xf32>
    %77 = vector.extract_strided_slice %42 {offsets = [0, 0, 16], sizes = [4, 8, 8], strides = [1, 1, 1]} : vector<4x8x32xf32> to vector<4x8x8xf32>
    %78 = vector.extract_strided_slice %43 {offsets = [0, 0, 16], sizes = [4, 8, 8], strides = [1, 1, 1]} : vector<4x8x32xf32> to vector<4x8x8xf32>
    %79 = vector.extract_strided_slice %44 {offsets = [0, 0, 16], sizes = [4, 8, 8], strides = [1, 1, 1]} : vector<4x8x32xf32> to vector<4x8x8xf32>
    "tpu.trace_start"() <{level = 10 : i32, message = "bqd,bkd->bqk"}> : () -> ()
    %cst_27 = arith.constant dense<0.000000e+00> : vector<4x8x8xf32>
    %80 = tpu.matmul %77, %78, %cst_27 {dimension_numbers = #tpu.dot_dimension_numbers<[2], [2], [1], [1], [0, 0, 0, 1, 1, 1], [0], [0]>} : vector<4x8x8xf32>, vector<4x8x8xf32>, vector<4x8x8xf32> -> vector<4x8x8xf32>
    "tpu.trace_stop"() : () -> ()
    %cst_28 = arith.constant dense<0xFF800000> : vector<4x8xf32>
    %81 = vector.multi_reduction <maximumf>, %80, %cst_28 [2] : vector<4x8x8xf32> to vector<4x8xf32>
    %82 = vector.shape_cast %81 : vector<4x8xf32> to vector<4x8x1xf32>
    %83 = vector.broadcast %82 : vector<4x8x1xf32> to vector<4x8x8xf32>
    %84 = arith.subf %80, %83 : vector<4x8x8xf32>
    %85 = math.exp %84 : vector<4x8x8xf32>
    %cst_29 = arith.constant dense<0.000000e+00> : vector<4x8xf32>
    %86 = vector.multi_reduction <add>, %85, %cst_29 [2] : vector<4x8x8xf32> to vector<4x8xf32>
    %87 = vector.shape_cast %86 : vector<4x8xf32> to vector<4x8x1xf32>
    %88 = tpu.reciprocal %87 {approx = true} : vector<4x8x1xf32> -> vector<4x8x1xf32>
    %89 = vector.broadcast %88 : vector<4x8x1xf32> to vector<4x8x8xf32>
    %90 = arith.mulf %85, %89 : vector<4x8x8xf32>
    "tpu.trace_start"() <{level = 10 : i32, message = "bqk,bkd->bqd"}> : () -> ()
    %cst_30 = arith.constant dense<0.000000e+00> : vector<4x8x8xf32>
    %91 = tpu.matmul %90, %79, %cst_30 {dimension_numbers = #tpu.dot_dimension_numbers<[2], [1], [1], [2], [0, 0, 0, 1, 1, 2], [0], [0]>} : vector<4x8x8xf32>, vector<4x8x8xf32>, vector<4x8x8xf32> -> vector<4x8x8xf32>
    "tpu.trace_stop"() : () -> ()
    %92 = vector.shape_cast %91 : vector<4x8x8xf32> to vector<32x8xf32>
    %93 = vector.extract_strided_slice %42 {offsets = [0, 0, 24], sizes = [4, 8, 8], strides = [1, 1, 1]} : vector<4x8x32xf32> to vector<4x8x8xf32>
    %94 = vector.extract_strided_slice %43 {offsets = [0, 0, 24], sizes = [4, 8, 8], strides = [1, 1, 1]} : vector<4x8x32xf32> to vector<4x8x8xf32>
    %95 = vector.extract_strided_slice %44 {offsets = [0, 0, 24], sizes = [4, 8, 8], strides = [1, 1, 1]} : vector<4x8x32xf32> to vector<4x8x8xf32>
    "tpu.trace_start"() <{level = 10 : i32, message = "bqd,bkd->bqk"}> : () -> ()
    %cst_31 = arith.constant dense<0.000000e+00> : vector<4x8x8xf32>
    %96 = tpu.matmul %93, %94, %cst_31 {dimension_numbers = #tpu.dot_dimension_numbers<[2], [2], [1], [1], [0, 0, 0, 1, 1, 1], [0], [0]>} : vector<4x8x8xf32>, vector<4x8x8xf32>, vector<4x8x8xf32> -> vector<4x8x8xf32>
    "tpu.trace_stop"() : () -> ()
    %cst_32 = arith.constant dense<0xFF800000> : vector<4x8xf32>
    %97 = vector.multi_reduction <maximumf>, %96, %cst_32 [2] : vector<4x8x8xf32> to vector<4x8xf32>
    %98 = vector.shape_cast %97 : vector<4x8xf32> to vector<4x8x1xf32>
    %99 = vector.broadcast %98 : vector<4x8x1xf32> to vector<4x8x8xf32>
    %100 = arith.subf %96, %99 : vector<4x8x8xf32>
    %101 = math.exp %100 : vector<4x8x8xf32>
    %cst_33 = arith.constant dense<0.000000e+00> : vector<4x8xf32>
    %102 = vector.multi_reduction <add>, %101, %cst_33 [2] : vector<4x8x8xf32> to vector<4x8xf32>
    %103 = vector.shape_cast %102 : vector<4x8xf32> to vector<4x8x1xf32>
    %104 = tpu.reciprocal %103 {approx = true} : vector<4x8x1xf32> -> vector<4x8x1xf32>
    %105 = vector.broadcast %104 : vector<4x8x1xf32> to vector<4x8x8xf32>
    %106 = arith.mulf %101, %105 : vector<4x8x8xf32>
    "tpu.trace_start"() <{level = 10 : i32, message = "bqk,bkd->bqd"}> : () -> ()
    %cst_34 = arith.constant dense<0.000000e+00> : vector<4x8x8xf32>
    %107 = tpu.matmul %106, %95, %cst_34 {dimension_numbers = #tpu.dot_dimension_numbers<[2], [1], [1], [2], [0, 0, 0, 1, 1, 2], [0], [0]>} : vector<4x8x8xf32>, vector<4x8x8xf32>, vector<4x8x8xf32> -> vector<4x8x8xf32>
    "tpu.trace_stop"() : () -> ()
    %108 = vector.shape_cast %107 : vector<4x8x8xf32> to vector<32x8xf32>
    %109 = tpu.concatenate %60, %76, %92, %108 in 1 : vector<32x8xf32>, vector<32x8xf32>, vector<32x8xf32>, vector<32x8xf32> -> vector<32x32xf32>
    %c160 = arith.constant 160 : index
    %c0_35 = arith.constant 0 : index
    %110 = vector.load %arg3[%c160, %c0_35] : memref<256x32xf32, #tpu.memory_space<vmem>>, vector<32x32xf32>
    %cst_36 = arith.constant dense<0.000000e+00> : vector<32x32xf32>
    %111 = tpu.matmul %109, %110, %cst_36 {dimension_numbers = #tpu.dot_dimension_numbers<[1], [0], [0], [1], [0, 0, 1, 1], [], []>} : vector<32x32xf32>, vector<32x32xf32>, vector<32x32xf32> -> vector<32x32xf32>
    %112 = vector.broadcast %7 : vector<1x32xf32> to vector<32x32xf32>
    %113 = arith.addf %111, %112 : vector<32x32xf32>
    %114 = arith.addf %113, %15 : vector<32x32xf32>
    %cst_37 = arith.constant dense<0.000000e+00> : vector<32xf32>
    %115 = vector.multi_reduction <add>, %114, %cst_37 [1] : vector<32x32xf32> to vector<32xf32>
    %116 = vector.shape_cast %115 : vector<32xf32> to vector<32x1xf32>
    %cst_38 = arith.constant 3.200000e+01 : f32
    %117 = vector.broadcast %cst_38 : f32 to vector<32x1xf32>
    %118 = arith.divf %116, %117 : vector<32x1xf32>
    %119 = vector.broadcast %118 : vector<32x1xf32> to vector<32x32xf32>
    %120 = arith.subf %114, %119 : vector<32x32xf32>
    %121 = arith.mulf %120, %120 : vector<32x32xf32>
    %cst_39 = arith.constant dense<0.000000e+00> : vector<32xf32>
    %122 = vector.multi_reduction <add>, %121, %cst_39 [1] : vector<32x32xf32> to vector<32xf32>
    %123 = vector.shape_cast %122 : vector<32xf32> to vector<32x1xf32>
    %cst_40 = arith.constant 3.200000e+01 : f32
    %124 = vector.broadcast %cst_40 : f32 to vector<32x1xf32>
    %125 = arith.divf %123, %124 : vector<32x1xf32>
    %cst_41 = arith.constant 9.99999974E-6 : f32
    %126 = vector.broadcast %cst_41 : f32 to vector<32x1xf32>
    %127 = arith.addf %125, %126 : vector<32x1xf32>
    %128 = math.rsqrt %127 : vector<32x1xf32>
    %129 = vector.broadcast %128 : vector<32x1xf32> to vector<32x32xf32>
    %130 = arith.mulf %120, %129 : vector<32x32xf32>
    %131 = vector.broadcast %8 : vector<1x32xf32> to vector<32x32xf32>
    %132 = arith.mulf %130, %131 : vector<32x32xf32>
    %133 = vector.broadcast %9 : vector<1x32xf32> to vector<32x32xf32>
    %134 = arith.addf %132, %133 : vector<32x32xf32>
    %c0_42 = arith.constant 0 : index
    %c0_43 = arith.constant 0 : index
    %135 = vector.load %arg4[%c0_42, %c0_43] : memref<32x64xf32, #tpu.memory_space<vmem>>, vector<32x64xf32>
    %cst_44 = arith.constant dense<0.000000e+00> : vector<32x64xf32>
    %136 = tpu.matmul %134, %135, %cst_44 {dimension_numbers = #tpu.dot_dimension_numbers<[1], [0], [0], [1], [0, 0, 1, 1], [], []>} : vector<32x32xf32>, vector<32x64xf32>, vector<32x64xf32> -> vector<32x64xf32>
    %137 = vector.broadcast %12 : vector<1x64xf32> to vector<32x64xf32>
    %138 = arith.addf %136, %137 : vector<32x64xf32>
    %cst_45 = arith.constant 5.000000e-01 : f32
    %139 = vector.broadcast %cst_45 : f32 to vector<32x64xf32>
    %140 = arith.mulf %139, %138 : vector<32x64xf32>
    %cst_46 = arith.constant 4.471500e-02 : f32
    %141 = vector.broadcast %cst_46 : f32 to vector<32x64xf32>
    %142 = arith.mulf %141, %138 : vector<32x64xf32>
    %143 = arith.mulf %142, %138 : vector<32x64xf32>
    %144 = arith.mulf %143, %138 : vector<32x64xf32>
    %145 = arith.addf %138, %144 : vector<32x64xf32>
    %cst_47 = arith.constant 0.797884583 : f32
    %146 = vector.broadcast %cst_47 : f32 to vector<32x64xf32>
    %147 = arith.mulf %146, %145 : vector<32x64xf32>
    %148 = math.tanh %147 : vector<32x64xf32>
    %cst_48 = arith.constant 1.000000e+00 : f32
    %149 = vector.broadcast %cst_48 : f32 to vector<32x64xf32>
    %150 = arith.addf %149, %148 : vector<32x64xf32>
    %151 = arith.mulf %140, %150 : vector<32x64xf32>
    %c192 = arith.constant 192 : index
    %c0_49 = arith.constant 0 : index
    %152 = vector.load %arg3[%c192, %c0_49] : memref<256x32xf32, #tpu.memory_space<vmem>>, vector<64x32xf32>
    %cst_50 = arith.constant dense<0.000000e+00> : vector<32x32xf32>
    %153 = tpu.matmul %151, %152, %cst_50 {dimension_numbers = #tpu.dot_dimension_numbers<[1], [0], [0], [1], [0, 0, 1, 1], [], []>} : vector<32x64xf32>, vector<64x32xf32>, vector<32x32xf32> -> vector<32x32xf32>
    %154 = vector.broadcast %13 : vector<1x32xf32> to vector<32x32xf32>
    %155 = arith.addf %153, %154 : vector<32x32xf32>
    %156 = arith.addf %134, %155 : vector<32x32xf32>
    %cst_51 = arith.constant dense<0.000000e+00> : vector<32xf32>
    %157 = vector.multi_reduction <add>, %156, %cst_51 [1] : vector<32x32xf32> to vector<32xf32>
    %158 = vector.shape_cast %157 : vector<32xf32> to vector<32x1xf32>
    %cst_52 = arith.constant 3.200000e+01 : f32
    %159 = vector.broadcast %cst_52 : f32 to vector<32x1xf32>
    %160 = arith.divf %158, %159 : vector<32x1xf32>
    %161 = vector.broadcast %160 : vector<32x1xf32> to vector<32x32xf32>
    %162 = arith.subf %156, %161 : vector<32x32xf32>
    %163 = arith.mulf %162, %162 : vector<32x32xf32>
    %cst_53 = arith.constant dense<0.000000e+00> : vector<32xf32>
    %164 = vector.multi_reduction <add>, %163, %cst_53 [1] : vector<32x32xf32> to vector<32xf32>
    %165 = vector.shape_cast %164 : vector<32xf32> to vector<32x1xf32>
    %cst_54 = arith.constant 3.200000e+01 : f32
    %166 = vector.broadcast %cst_54 : f32 to vector<32x1xf32>
    %167 = arith.divf %165, %166 : vector<32x1xf32>
    %cst_55 = arith.constant 9.99999974E-6 : f32
    %168 = vector.broadcast %cst_55 : f32 to vector<32x1xf32>
    %169 = arith.addf %167, %168 : vector<32x1xf32>
    %170 = math.rsqrt %169 : vector<32x1xf32>
    %171 = vector.broadcast %170 : vector<32x1xf32> to vector<32x32xf32>
    %172 = arith.mulf %162, %171 : vector<32x32xf32>
    %173 = vector.broadcast %10 : vector<1x32xf32> to vector<32x32xf32>
    %174 = arith.mulf %172, %173 : vector<32x32xf32>
    %175 = vector.broadcast %11 : vector<1x32xf32> to vector<32x32xf32>
    %176 = arith.addf %174, %175 : vector<32x32xf32>
    %cst_56 = arith.constant 0.000000e+00 : f32
    %177 = vector.broadcast %cst_56 : f32 to vector<32x96xf32>
    %178 = tpu.concatenate %176, %177 in 1 : vector<32x32xf32>, vector<32x96xf32> -> vector<32x128xf32>
    %179 = vector.shape_cast %178 : vector<32x128xf32> to vector<4x8x128xf32>
    %c0_57 = arith.constant 0 : index
    %c0_58 = arith.constant 0 : index
    %c0_59 = arith.constant 0 : index
    %180 = vector.load %arg6[%c0_57, %c0_58, %c0_59] : memref<4x8x128xf32, #tpu.memory_space<vmem>>, vector<4x8x128xf32>
    tpu.vector_store %arg6[%c0_57, %c0_58, %c0_59], %179 {strides = array<i32>} : memref<4x8x128xf32, #tpu.memory_space<vmem>>, vector<4x8x128xf32>,
    return
  }
  func.func @transform_0(%arg0: i32) -> (i32, i32, i32) {
    %c0_i32 = arith.constant 0 : i32
    %c0_i32_0 = arith.constant 0 : i32
    %c0_i32_1 = arith.constant 0 : i32
    return %arg0, %c0_i32, %c0_i32_0 : i32, i32, i32
  }
  func.func @transform_1(%arg0: i32) -> (i32, i32, i32) {
    %c0_i32 = arith.constant 0 : i32
    %c0_i32_0 = arith.constant 0 : i32
    %c0_i32_1 = arith.constant 0 : i32
    return %arg0, %c0_i32, %c0_i32_0 : i32, i32, i32
  }
  func.func @transform_2(%arg0: i32) -> (i32, i32) {
    %c0_i32 = arith.constant 0 : i32
    %c0_i32_0 = arith.constant 0 : i32
    %c0_i32_1 = arith.constant 0 : i32
    return %c0_i32, %c0_i32_0 : i32, i32
  }
  func.func @transform_3(%arg0: i32) -> (i32, i32) {
    %c0_i32 = arith.constant 0 : i32
    %c0_i32_0 = arith.constant 0 : i32
    %c0_i32_1 = arith.constant 0 : i32
    return %c0_i32, %c0_i32_0 : i32, i32
  }
  func.func @transform_4(%arg0: i32) -> (i32, i32) {
    %c0_i32 = arith.constant 0 : i32
    %c0_i32_0 = arith.constant 0 : i32
    %c0_i32_1 = arith.constant 0 : i32
    return %c0_i32, %c0_i32_0 : i32, i32
  }
  func.func @transform_5(%arg0: i32) -> (i32, i32, i32) {
    %c0_i32 = arith.constant 0 : i32
    %c0_i32_0 = arith.constant 0 : i32
    %c0_i32_1 = arith.constant 0 : i32
    return %arg0, %c0_i32, %c0_i32_0 : i32, i32, i32
  }
}

</mosaic_0001>

<llo_original>
// kernel: tpu_custom_call.1
$region0: #{tpu_custom_call.1}
  #allocation0 [shape = 'u32[]', space=smem, size = 0x4, offset = 0x4, fixed_abs, tag = 'smem constant byte address 0x4 - core index']
  #allocation1 [shape = 'u32[144,128]{1,0:T(1,128)}', space=vmem, size = 0x12000, scoped, tag = 'internal scratch']
  %s0 = inlined_call_operand.vmem [shape: f32[4,8,32], index: 0, kind: input, shape index: {}]
  %s1 = inlined_call_operand.vmem [shape: f32[4,8,16], index: 1, kind: input, shape index: {}]
  %s2 = inlined_call_operand.vmem [shape: f32[256,32], index: 2, kind: input, shape index: {}]
  %s3 = inlined_call_operand.vmem [shape: f32[32,64], index: 3, kind: input, shape index: {}]
  %s4 = inlined_call_operand.vmem [shape: f32[13,64], index: 4, kind: input, shape index: {}]
  %s5 = inlined_call_operand.hbm [shape: f32[4,8,128], index: 5, kind: output, shape index: {}]
  %s6 = sld [smem:[#allocation0]]
  $region30: #{tpu_custom_call.1} parent=0
    _
  %s8 = ssub.s32 1, %s6
  %s9 = scalar_select 0, %s8, %s6
  $region1: #{tpu_custom_call.1} parent=0
    #allocation2 [shape = 'u8[16384]{0}', space=vmem, size = 0x4000, scoped, tag = 'output window, operand 0, single buffered']
    #allocation3 [shape = 's32[1]{0}', space=sflag, size = 0x4, scoped, tag = 'scoped memory for tpu_custom_call.1']
    %10 = vsyncpa [#allocation3], 0
    // Predicated region
    $region2: #{tpu_custom_call.1} parent=1 // pred_check
      _
    $region3: #{tpu_custom_call.1} parent=1 // pred_check_branch
      %12 = sbr.rel (0) target = $region5
    $region4: #{tpu_custom_call.1} parent=1 // pred_region
      _
    $region5: #{tpu_custom_call.1} parent=1 // pred_fallthru
      _
    // Predicated region
    $region6: #{tpu_custom_call.1} parent=1 // pred_check
      _
    $region7: #{tpu_custom_call.1} parent=1 // pred_check_branch
      %14 = sbr.rel (0) target = $region9
    $region8: #{tpu_custom_call.1} parent=1 // pred_region
      _
    $region9: #{tpu_custom_call.1} parent=1 // pred_fallthru
      _
    // Predicated region
    $region10: #{tpu_custom_call.1} parent=1 // pred_check
      _
    $region11: #{tpu_custom_call.1} parent=1 // pred_check_branch
      %16 = sbr.rel (0) target = $region13
    $region12: #{tpu_custom_call.1} parent=1 // pred_region
      _
    $region13: #{tpu_custom_call.1} parent=1 // pred_fallthru
      _
    // Predicated region
    $region14: #{tpu_custom_call.1} parent=1 // pred_check
      _
    $region15: #{tpu_custom_call.1} parent=1 // pred_check_branch
      %18 = sbr.rel (0) target = $region17
    $region16: #{tpu_custom_call.1} parent=1 // pred_region
      _
    $region17: #{tpu_custom_call.1} parent=1 // pred_fallthru
      _
    // Predicated region
    $region18: #{tpu_custom_call.1} parent=1 // pred_check
      _
    $region19: #{tpu_custom_call.1} parent=1 // pred_check_branch
      %20 = sbr.rel (0) target = $region21
    $region20: #{tpu_custom_call.1} parent=1 // pred_region
      _
    $region21: #{tpu_custom_call.1} parent=1 // pred_fallthru
      _
    %v21 = vld [vmem:[%s4] sm:$0xff]
    %v22 = vld [vmem:[%s4 + $0x8] sm:$0x1f]
    %v23 = vld [vmem:[%s0] sm:$0xff]
    %v24 = vld [vmem:[%s0 + $0x8] sm:$0xff]
    %v25 = vld [vmem:[%s0 + $0x10] sm:$0xff]
    %v26 = vld [vmem:[%s0 + $0x18] sm:$0xff]
    %v27 = vld [vmem:[%s1] sm:$0xff]
    %v28 = vld [vmem:[%s1 + $0x8] sm:$0xff]
    %v29 = vld [vmem:[%s1 + $0x10] sm:$0xff]
    %v30 = vld [vmem:[%s1 + $0x18] sm:$0xff]
    %v31 = vld [vmem:[%s2] sm:$0xff]
    %v32 = vld [vmem:[%s2 + $0x8] sm:$0xff]
    %v33 = vld [vmem:[%s2 + $0x10] sm:$0xff]
    %v34 = vld [vmem:[%s2 + $0x18] sm:$0xff]
    %v35 = vlaneseq
    %v36 = vshrl.u32 %v35, 7
    %v37 = vsub.s32 0, %v36
    %v38 = vrot.slane %v21, %v37
    %vm39 = vcmask 261120
    %v41 = vsel %vm39, %v23, 0
    %v44 = vsel %vm39, %v24, 0
    %v47 = vsel %vm39, %v25, 0
    %v50 = vsel %vm39, %v26, 0
    %52 = vmatprep.subr.mxu0 0.0
    %53 = vmatpush1.msra.mxu0 %v31
    %54 = vmatprep.subr.mxu0 0.0
    %55 = vmatpush1.msra.mxu0 %v32
    %56 = vmatprep.subr.mxu0 0.0
    %57 = vmatpush1.msra.mxu0 %v33
    %58 = vmatprep.subr.mxu0 0.0
    %59 = vmatpush1.msra.mxu0 %v34
    %60 = vmatprep.subr.mxu0 0.0
    %61 = vmatpush1.msra.mxu0 0.0
    %62 = vmatprep.subr.mxu0 0.0
    %63 = vmatpush1.msra.mxu0 0.0
    %64 = vmatprep.subr.mxu0 0.0
    %65 = vmatpush1.msra.mxu0 0.0
    %66 = vmatprep.subr.mxu0 0.0
    %67 = vmatpush1.msra.mxu0 0.0
    %68 = vmatprep.subr.mxu0 0.0
    %69 = vmatpush1.msra.mxu0 0.0
    %70 = vmatprep.subr.mxu0 0.0
    %71 = vmatpush1.msra.mxu0 0.0
    %72 = vmatprep.subr.mxu0 0.0
    %73 = vmatpush1.msra.mxu0 0.0
    %74 = vmatprep.subr.mxu0 0.0
    %75 = vmatpush1.msra.mxu0 0.0
    %76 = vmatprep.subr.mxu0 0.0
    %77 = vmatpush1.msra.mxu0 0.0
    %78 = vmatprep.subr.mxu0 0.0
    %79 = vmatpush1.msra.mxu0 0.0
    %80 = vmatprep.subr.mxu0 0.0
    %81 = vmatpush1.msra.mxu0 0.0
    %82 = vmatprep.subr.mxu0 0.0
    %83 = vmatpush1.msra.mxu0 0.0
    %84 = vmatprep.subr.mxu0 0.0
    %85 = vmatpush1.msra.mxu0 0.0
    %86 = vmatprep.subr.mxu0 0.0
    %87 = vmatpush1.msra.mxu0 0.0
    %88 = vmatprep.subr.mxu0 0.0
    %89 = vmatpush1.msra.mxu0 0.0
    %90 = vmatprep.subr.mxu0 0.0
    %91 = vmatpush1.msra.mxu0 0.0
    %92 = vmatprep.subr.mxu0 0.0
    %93 = vmatpush1.msra.mxu0 0.0
    %94 = vmatprep.subr.mxu0 0.0
    %95 = vmatpush1.msra.mxu0 0.0
    %96 = vmatprep.subr.mxu0 0.0
    %97 = vmatpush1.msra.mxu0 0.0
    %98 = vmatprep.subr.mxu0 0.0
    %99 = vmatpush1.msra.mxu0 0.0
    %100 = vmatprep.subr.mxu0 0.0
    %101 = vmatpush1.msra.mxu0 0.0
    %102 = vmatprep.subr.mxu0 0.0
    %103 = vmatpush1.msra.mxu0 0.0
    %104 = vmatprep.subr.mxu0 0.0
    %105 = vmatpush1.msra.mxu0 0.0
    %106 = vmatprep.subr.mxu0 0.0
    %107 = vmatpush1.msra.mxu0 0.0
    %108 = vmatprep.subr.mxu0 0.0
    %109 = vmatpush1.msra.mxu0 0.0
    %110 = vmatprep.subr.mxu0 0.0
    %111 = vmatpush1.msra.mxu0 0.0
    %112 = vmatprep.subr.mxu0 0.0
    %113 = vmatpush1.msra.mxu0 0.0
    %114 = vmatprep.subr.mxu0 0.0
    %115 = vmatpush1.msra.mxu0 0.0
    %116 = vmatprep.mubr.f32.mxu0 0.0
    %117 = vmatmul.mubr.f32.gmra.mrb[0].mxu0 %v41
    %v118 = vpop.f32.mrb[0].mxu0
    %v119 = vadd.f32 %v38, %v118
    %v120 = vpop.f32.mrb[0].mxu0
    %121 = vmatprep.mubr.f32.mxu0 0.0
    %122 = vmatmul.mubr.f32.gmra.mrb[0].mxu0 %v44
    %v123 = vpop.f32.mrb[0].mxu0
    %v124 = vadd.f32 %v38, %v123
    %v125 = vpop.f32.mrb[0].mxu0
    %126 = vmatprep.mubr.f32.mxu0 0.0
    %127 = vmatmul.mubr.f32.gmra.mrb[0].mxu0 %v47
    %v128 = vpop.f32.mrb[0].mxu0
    %v129 = vadd.f32 %v38, %v128
    %v130 = vpop.f32.mrb[0].mxu0
    %131 = vmatprep.mubr.f32.mxu0 0.0
    %132 = vmatmul.mubr.f32.gmra.mrb[0].mxu0 %v50
    %v133 = vpop.f32.mrb[0].mxu0
    %v134 = vadd.f32 %v38, %v133
    %v135 = vpop.f32.mrb[0].mxu0
    %136 = vdwg.mxu0
    %v137 = vld [vmem:[%s2 + $0x20] sm:$0xff]
    %v138 = vld [vmem:[%s2 + $0x28] sm:$0xff]
    %v139 = vlaneseq
    %v140 = vshrl.u32 %v139, 7
    %v141 = vsub.s32 1, %v140
    %v142 = vrot.slane %v21, %v141
    %vm143 = vcmask 130048
    %v145 = vsel %vm143, %v27, 0
    %v148 = vsel %vm143, %v28, 0
    %v151 = vsel %vm143, %v29, 0
    %v154 = vsel %vm143, %v30, 0
    %156 = vmatprep.subr.mxu0 0.0
    %157 = vmatpush1.msra.mxu0 %v137
    %158 = vmatprep.subr.mxu0 0.0
    %159 = vmatpush1.msra.mxu0 %v138
    %160 = vmatprep.subr.mxu0 0.0
    %161 = vmatpush1.msra.mxu0 0.0
    %162 = vmatprep.subr.mxu0 0.0
    %163 = vmatpush1.msra.mxu0 0.0
    %164 = vmatprep.subr.mxu0 0.0
    %165 = vmatpush1.msra.mxu0 0.0
    %166 = vmatprep.subr.mxu0 0.0
    %167 = vmatpush1.msra.mxu0 0.0
    %168 = vmatprep.subr.mxu0 0.0
    %169 = vmatpush1.msra.mxu0 0.0
    %170 = vmatprep.subr.mxu0 0.0
    %171 = vmatpush1.msra.mxu0 0.0
    %172 = vmatprep.subr.mxu0 0.0
    %173 = vmatpush1.msra.mxu0 0.0
    %174 = vmatprep.subr.mxu0 0.0
    %175 = vmatpush1.msra.mxu0 0.0
    %176 = vmatprep.subr.mxu0 0.0
    %177 = vmatpush1.msra.mxu0 0.0
    %178 = vmatprep.subr.mxu0 0.0
    %179 = vmatpush1.msra.mxu0 0.0
    %180 = vmatprep.subr.mxu0 0.0
    %181 = vmatpush1.msra.mxu0 0.0
    %182 = vmatprep.subr.mxu0 0.0
    %183 = vmatpush1.msra.mxu0 0.0
    %184 = vmatprep.subr.mxu0 0.0
    %185 = vmatpush1.msra.mxu0 0.0
    %186 = vmatprep.subr.mxu0 0.0
    %187 = vmatpush1.msra.mxu0 0.0
    %188 = vmatprep.subr.mxu0 0.0
    %189 = vmatpush1.msra.mxu0 0.0
    %190 = vmatprep.subr.mxu0 0.0
    %191 = vmatpush1.msra.mxu0 0.0
    %192 = vmatprep.subr.mxu0 0.0
    %193 = vmatpush1.msra.mxu0 0.0
    %194 = vmatprep.subr.mxu0 0.0
    %195 = vmatpush1.msra.mxu0 0.0
    %196 = vmatprep.subr.mxu0 0.0
    %197 = vmatpush1.msra.mxu0 0.0
    %198 = vmatprep.subr.mxu0 0.0
    %199 = vmatpush1.msra.mxu0 0.0
    %200 = vmatprep.subr.mxu0 0.0
    %201 = vmatpush1.msra.mxu0 0.0
    %202 = vmatprep.subr.mxu0 0.0
    %203 = vmatpush1.msra.mxu0 0.0
    %204 = vmatprep.subr.mxu0 0.0
    %205 = vmatpush1.msra.mxu0 0.0
    %206 = vmatprep.subr.mxu0 0.0
    %207 = vmatpush1.msra.mxu0 0.0
    %208 = vmatprep.subr.mxu0 0.0
    %209 = vmatpush1.msra.mxu0 0.0
    %210 = vmatprep.subr.mxu0 0.0
    %211 = vmatpush1.msra.mxu0 0.0
    %212 = vmatprep.subr.mxu0 0.0
    %213 = vmatpush1.msra.mxu0 0.0
    %214 = vmatprep.subr.mxu0 0.0
    %215 = vmatpush1.msra.mxu0 0.0
    %216 = vmatprep.subr.mxu0 0.0
    %217 = vmatpush1.msra.mxu0 0.0
    %218 = vmatprep.subr.mxu0 0.0
    %219 = vmatpush1.msra.mxu0 0.0
    %220 = vmatprep.mubr.f32.mxu0 0.0
    %221 = vmatmul.mubr.f32.gmra.mrb[0].mxu0 %v145
    %v222 = vpop.f32.mrb[0].mxu0
    %v223 = vadd.f32 %v142, %v222
    %v224 = vpop.f32.mrb[0].mxu0
    %225 = vmatprep.mubr.f32.mxu0 0.0
    %226 = vmatmul.mubr.f32.gmra.mrb[0].mxu0 %v148
    %v227 = vpop.f32.mrb[0].mxu0
    %v228 = vadd.f32 %v142, %v227
    %v229 = vpop.f32.mrb[0].mxu0
    %230 = vmatprep.mubr.f32.mxu0 0.0
    %231 = vmatmul.mubr.f32.gmra.mrb[0].mxu0 %v151
    %v232 = vpop.f32.mrb[0].mxu0
    %v233 = vadd.f32 %v142, %v232
    %v234 = vpop.f32.mrb[0].mxu0
    %235 = vmatprep.mubr.f32.mxu0 0.0
    %236 = vmatmul.mubr.f32.gmra.mrb[0].mxu0 %v154
    %v237 = vpop.f32.mrb[0].mxu0
    %v238 = vadd.f32 %v142, %v237
    %v239 = vpop.f32.mrb[0].mxu0
    %240 = vdwg.mxu0
    %v241 = vld [vmem:[%s2 + $0x30] sm:$0xff]
    %v242 = vld [vmem:[%s2 + $0x38] sm:$0xff]
    %v243 = vlaneseq
    %v244 = vshrl.u32 %v243, 7
    %v245 = vsub.s32 2, %v244
    %v246 = vrot.slane %v21, %v245
    %247 = vmatprep.subr.mxu0 0.0
    %248 = vmatpush1.msra.mxu0 %v241
    %249 = vmatprep.subr.mxu0 0.0
    %250 = vmatpush1.msra.mxu0 %v242
    %251 = vmatprep.subr.mxu0 0.0
    %252 = vmatpush1.msra.mxu0 0.0
    %253 = vmatprep.subr.mxu0 0.0
    %254 = vmatpush1.msra.mxu0 0.0
    %255 = vmatprep.subr.mxu0 0.0
    %256 = vmatpush1.msra.mxu0 0.0
    %257 = vmatprep.subr.mxu0 0.0
    %258 = vmatpush1.msra.mxu0 0.0
    %259 = vmatprep.subr.mxu0 0.0
    %260 = vmatpush1.msra.mxu0 0.0
    %261 = vmatprep.subr.mxu0 0.0
    %262 = vmatpush1.msra.mxu0 0.0
    %263 = vmatprep.subr.mxu0 0.0
    %264 = vmatpush1.msra.mxu0 0.0
    %265 = vmatprep.subr.mxu0 0.0
    %266 = vmatpush1.msra.mxu0 0.0
    %267 = vmatprep.subr.mxu0 0.0
    %268 = vmatpush1.msra.mxu0 0.0
    %269 = vmatprep.subr.mxu0 0.0
    %270 = vmatpush1.msra.mxu0 0.0
    %271 = vmatprep.subr.mxu0 0.0
    %272 = vmatpush1.msra.mxu0 0.0
    %273 = vmatprep.subr.mxu0 0.0
    %274 = vmatpush1.msra.mxu0 0.0
    %275 = vmatprep.subr.mxu0 0.0
    %276 = vmatpush1.msra.mxu0 0.0
    %277 = vmatprep.subr.mxu0 0.0
    %278 = vmatpush1.msra.mxu0 0.0
    %279 = vmatprep.subr.mxu0 0.0
    %280 = vmatpush1.msra.mxu0 0.0
    %281 = vmatprep.subr.mxu0 0.0
    %282 = vmatpush1.msra.mxu0 0.0
    %283 = vmatprep.subr.mxu0 0.0
    %284 = vmatpush1.msra.mxu0 0.0
    %285 = vmatprep.subr.mxu0 0.0
    %286 = vmatpush1.msra.mxu0 0.0
    %287 = vmatprep.subr.mxu0 0.0
    %288 = vmatpush1.msra.mxu0 0.0
    %289 = vmatprep.subr.mxu0 0.0
    %290 = vmatpush1.msra.mxu0 0.0
    %291 = vmatprep.subr.mxu0 0.0
    %292 = vmatpush1.msra.mxu0 0.0
    %293 = vmatprep.subr.mxu0 0.0
    %294 = vmatpush1.msra.mxu0 0.0
    %295 = vmatprep.subr.mxu0 0.0
    %296 = vmatpush1.msra.mxu0 0.0
    %297 = vmatprep.subr.mxu0 0.0
    %298 = vmatpush1.msra.mxu0 0.0
    %299 = vmatprep.subr.mxu0 0.0
    %300 = vmatpush1.msra.mxu0 0.0
    %301 = vmatprep.subr.mxu0 0.0
    %302 = vmatpush1.msra.mxu0 0.0
    %303 = vmatprep.subr.mxu0 0.0
    %304 = vmatpush1.msra.mxu0 0.0
    %305 = vmatprep.subr.mxu0 0.0
    %306 = vmatpush1.msra.mxu0 0.0
    %307 = vmatprep.subr.mxu0 0.0
    %308 = vmatpush1.msra.mxu0 0.0
    %309 = vmatprep.subr.mxu0 0.0
    %310 = vmatpush1.msra.mxu0 0.0
    %311 = vmatprep.mubr.f32.mxu0 0.0
    %312 = vmatmul.mubr.f32.gmra.mrb[0].mxu0 %v145
    %v313 = vpop.f32.mrb[0].mxu0
    %v314 = vadd.f32 %v246, %v313
    %v315 = vpop.f32.mrb[0].mxu0
    %316 = vmatprep.mubr.f32.mxu0 0.0
    %317 = vmatmul.mubr.f32.gmra.mrb[0].mxu0 %v148
    %v318 = vpop.f32.mrb[0].mxu0
    %v319 = vadd.f32 %v246, %v318
    %v320 = vpop.f32.mrb[0].mxu0
    %321 = vmatprep.mubr.f32.mxu0 0.0
    %322 = vmatmul.mubr.f32.gmra.mrb[0].mxu0 %v151
    %v323 = vpop.f32.mrb[0].mxu0
    %v324 = vadd.f32 %v246, %v323
    %v325 = vpop.f32.mrb[0].mxu0
    %326 = vmatprep.mubr.f32.mxu0 0.0
    %327 = vmatmul.mubr.f32.gmra.mrb[0].mxu0 %v154
    %v328 = vpop.f32.mrb[0].mxu0
    %v329 = vadd.f32 %v246, %v328
    %v330 = vpop.f32.mrb[0].mxu0
    %331 = vdwg.mxu0
    %v332 = vld [vmem:[%s2 + $0x40] sm:$0xff]
    %v333 = vld [vmem:[%s2 + $0x48] sm:$0xff]
    %v334 = vld [vmem:[%s2 + $0x50] sm:$0xff]
    %v335 = vld [vmem:[%s2 + $0x58] sm:$0xff]
    %v336 = vlaneseq
    %v337 = vshrl.u32 %v336, 7
    %v338 = vsub.s32 3, %v337
    %v339 = vrot.slane %v21, %v338
    %v341 = vsel %vm39, %v119, 0
    %v344 = vsel %vm39, %v124, 0
    %v347 = vsel %vm39, %v129, 0
    %v350 = vsel %vm39, %v134, 0
    %352 = vmatprep.subr.mxu0 0.0
    %353 = vmatpush1.msra.mxu0 %v332
    %354 = vmatprep.subr.mxu0 0.0
    %355 = vmatpush1.msra.mxu0 %v333
    %356 = vmatprep.subr.mxu0 0.0
    %357 = vmatpush1.msra.mxu0 %v334
    %358 = vmatprep.subr.mxu0 0.0
    %359 = vmatpush1.msra.mxu0 %v335
    %360 = vmatprep.subr.mxu0 0.0
    %361 = vmatpush1.msra.mxu0 0.0
    %362 = vmatprep.subr.mxu0 0.0
    %363 = vmatpush1.msra.mxu0 0.0
    %364 = vmatprep.subr.mxu0 0.0
    %365 = vmatpush1.msra.mxu0 0.0
    %366 = vmatprep.subr.mxu0 0.0
    %367 = vmatpush1.msra.mxu0 0.0
    %368 = vmatprep.subr.mxu0 0.0
    %369 = vmatpush1.msra.mxu0 0.0
    %370 = vmatprep.subr.mxu0 0.0
    %371 = vmatpush1.msra.mxu0 0.0
    %372 = vmatprep.subr.mxu0 0.0
    %373 = vmatpush1.msra.mxu0 0.0
    %374 = vmatprep.subr.mxu0 0.0
    %375 = vmatpush1.msra.mxu0 0.0
    %376 = vmatprep.subr.mxu0 0.0
    %377 = vmatpush1.msra.mxu0 0.0
    %378 = vmatprep.subr.mxu0 0.0
    %379 = vmatpush1.msra.mxu0 0.0
    %380 = vmatprep.subr.mxu0 0.0
    %381 = vmatpush1.msra.mxu0 0.0
    %382 = vmatprep.subr.mxu0 0.0
    %383 = vmatpush1.msra.mxu0 0.0
    %384 = vmatprep.subr.mxu0 0.0
    %385 = vmatpush1.msra.mxu0 0.0
    %386 = vmatprep.subr.mxu0 0.0
    %387 = vmatpush1.msra.mxu0 0.0
    %388 = vmatprep.subr.mxu0 0.0
    %389 = vmatpush1.msra.mxu0 0.0
    %390 = vmatprep.subr.mxu0 0.0
    %391 = vmatpush1.msra.mxu0 0.0
    %392 = vmatprep.subr.mxu0 0.0
    %393 = vmatpush1.msra.mxu0 0.0
    %394 = vmatprep.subr.mxu0 0.0
    %395 = vmatpush1.msra.mxu0 0.0
    %396 = vmatprep.subr.mxu0 0.0
    %397 = vmatpush1.msra.mxu0 0.0
    %398 = vmatprep.subr.mxu0 0.0
    %399 = vmatpush1.msra.mxu0 0.0
    %400 = vmatprep.subr.mxu0 0.0
    %401 = vmatpush1.msra.mxu0 0.0
    %402 = vmatprep.subr.mxu0 0.0
    %403 = vmatpush1.msra.mxu0 0.0
    %404 = vmatprep.subr.mxu0 0.0
    %405 = vmatpush1.msra.mxu0 0.0
    %406 = vmatprep.subr.mxu0 0.0
    %407 = vmatpush1.msra.mxu0 0.0
    %408 = vmatprep.subr.mxu0 0.0
    %409 = vmatpush1.msra.mxu0 0.0
    %410 = vmatprep.subr.mxu0 0.0
    %411 = vmatpush1.msra.mxu0 0.0
    %412 = vmatprep.subr.mxu0 0.0
    %413 = vmatpush1.msra.mxu0 0.0
    %414 = vmatprep.subr.mxu0 0.0
    %415 = vmatpush1.msra.mxu0 0.0
    %416 = vmatprep.mubr.f32.mxu0 0.0
    %417 = vmatmul.mubr.f32.gmra.mrb[0].mxu0 %v341
    %v418 = vpop.f32.mrb[0].mxu0
    %v419 = vadd.f32 %v339, %v418
    %v420 = vpop.f32.mrb[0].mxu0
    %421 = vmatprep.mubr.f32.mxu0 0.0
    %422 = vmatmul.mubr.f32.gmra.mrb[0].mxu0 %v344
    %v423 = vpop.f32.mrb[0].mxu0
    %v424 = vadd.f32 %v339, %v423
    %v425 = vpop.f32.mrb[0].mxu0
    %426 = vmatprep.mubr.f32.mxu0 0.0
    %427 = vmatmul.mubr.f32.gmra.mrb[0].mxu0 %v347
    %v428 = vpop.f32.mrb[0].mxu0
    %v429 = vadd.f32 %v339, %v428
    %v430 = vpop.f32.mrb[0].mxu0
    %431 = vmatprep.mubr.f32.mxu0 0.0
    %432 = vmatmul.mubr.f32.gmra.mrb[0].mxu0 %v350
    %v433 = vpop.f32.mrb[0].mxu0
    %v434 = vadd.f32 %v339, %v433
    %v435 = vpop.f32.mrb[0].mxu0
    %436 = vdwg.mxu0
    %v437 = vld [vmem:[%s2 + $0x60] sm:$0xff]
    %v438 = vld [vmem:[%s2 + $0x68] sm:$0xff]
    %v439 = vld [vmem:[%s2 + $0x70] sm:$0xff]
    %v440 = vld [vmem:[%s2 + $0x78] sm:$0xff]
    %v441 = vlaneseq
    %v442 = vshrl.u32 %v441, 7
    %v443 = vsub.s32 4, %v442
    %v444 = vrot.slane %v21, %v443
    %v446 = vsel %vm39, %v223, 0
    %v449 = vsel %vm39, %v228, 0
    %v452 = vsel %vm39, %v233, 0
    %v455 = vsel %vm39, %v238, 0
    %457 = vmatprep.subr.mxu0 0.0
    %458 = vmatpush1.msra.mxu0 %v437
    %459 = vmatprep.subr.mxu0 0.0
    %460 = vmatpush1.msra.mxu0 %v438
    %461 = vmatprep.subr.mxu0 0.0
    %462 = vmatpush1.msra.mxu0 %v439
    %463 = vmatprep.subr.mxu0 0.0
    %464 = vmatpush1.msra.mxu0 %v440
    %465 = vmatprep.subr.mxu0 0.0
    %466 = vmatpush1.msra.mxu0 0.0
    %467 = vmatprep.subr.mxu0 0.0
    %468 = vmatpush1.msra.mxu0 0.0
    %469 = vmatprep.subr.mxu0 0.0
    %470 = vmatpush1.msra.mxu0 0.0
    %471 = vmatprep.subr.mxu0 0.0
    %472 = vmatpush1.msra.mxu0 0.0
    %473 = vmatprep.subr.mxu0 0.0
    %474 = vmatpush1.msra.mxu0 0.0
    %475 = vmatprep.subr.mxu0 0.0
    %476 = vmatpush1.msra.mxu0 0.0
    %477 = vmatprep.subr.mxu0 0.0
    %478 = vmatpush1.msra.mxu0 0.0
    %479 = vmatprep.subr.mxu0 0.0
    %480 = vmatpush1.msra.mxu0 0.0
    %481 = vmatprep.subr.mxu0 0.0
    %482 = vmatpush1.msra.mxu0 0.0
    %483 = vmatprep.subr.mxu0 0.0
    %484 = vmatpush1.msra.mxu0 0.0
    %485 = vmatprep.subr.mxu0 0.0
    %486 = vmatpush1.msra.mxu0 0.0
    %487 = vmatprep.subr.mxu0 0.0
    %488 = vmatpush1.msra.mxu0 0.0
    %489 = vmatprep.subr.mxu0 0.0
    %490 = vmatpush1.msra.mxu0 0.0
    %491 = vmatprep.subr.mxu0 0.0
    %492 = vmatpush1.msra.mxu0 0.0
    %493 = vmatprep.subr.mxu0 0.0
    %494 = vmatpush1.msra.mxu0 0.0
    %495 = vmatprep.subr.mxu0 0.0
    %496 = vmatpush1.msra.mxu0 0.0
    %497 = vmatprep.subr.mxu0 0.0
    %498 = vmatpush1.msra.mxu0 0.0
    %499 = vmatprep.subr.mxu0 0.0
    %500 = vmatpush1.msra.mxu0 0.0
    %501 = vmatprep.subr.mxu0 0.0
    %502 = vmatpush1.msra.mxu0 0.0
    %503 = vmatprep.subr.mxu0 0.0
    %504 = vmatpush1.msra.mxu0 0.0
    %505 = vmatprep.subr.mxu0 0.0
    %506 = vmatpush1.msra.mxu0 0.0
    %507 = vmatprep.subr.mxu0 0.0
    %508 = vmatpush1.msra.mxu0 0.0
    %509 = vmatprep.subr.mxu0 0.0
    %510 = vmatpush1.msra.mxu0 0.0
    %511 = vmatprep.subr.mxu0 0.0
    %512 = vmatpush1.msra.mxu0 0.0
    %513 = vmatprep.subr.mxu0 0.0
    %514 = vmatpush1.msra.mxu0 0.0
    %515 = vmatprep.subr.mxu0 0.0
    %516 = vmatpush1.msra.mxu0 0.0
    %517 = vmatprep.subr.mxu0 0.0
    %518 = vmatpush1.msra.mxu0 0.0
    %519 = vmatprep.subr.mxu0 0.0
    %520 = vmatpush1.msra.mxu0 0.0
    %521 = vmatprep.mubr.f32.mxu0 0.0
    %522 = vmatmul.mubr.f32.gmra.mrb[0].mxu0 %v446
    %v523 = vpop.f32.mrb[0].mxu0
    %v524 = vadd.f32 %v444, %v523
    %v525 = vpop.f32.mrb[0].mxu0
    %526 = vmatprep.mubr.f32.mxu0 0.0
    %527 = vmatmul.mubr.f32.gmra.mrb[0].mxu0 %v449
    %v528 = vpop.f32.mrb[0].mxu0
    %v529 = vadd.f32 %v444, %v528
    %v530 = vpop.f32.mrb[0].mxu0
    %531 = vmatprep.mubr.f32.mxu0 0.0
    %532 = vmatmul.mubr.f32.gmra.mrb[0].mxu0 %v452
    %v533 = vpop.f32.mrb[0].mxu0
    %v534 = vadd.f32 %v444, %v533
    %v535 = vpop.f32.mrb[0].mxu0
    %536 = vmatprep.mubr.f32.mxu0 0.0
    %537 = vmatmul.mubr.f32.gmra.mrb[0].mxu0 %v455
    %v538 = vpop.f32.mrb[0].mxu0
    %v539 = vadd.f32 %v444, %v538
    %v540 = vpop.f32.mrb[0].mxu0
    %541 = vdwg.mxu0
    %v542 = vld [vmem:[%s2 + $0x80] sm:$0xff]
    %v543 = vld [vmem:[%s2 + $0x88] sm:$0xff]
    %v544 = vld [vmem:[%s2 + $0x90] sm:$0xff]
    %v545 = vld [vmem:[%s2 + $0x98] sm:$0xff]
    %v546 = vlaneseq
    %v547 = vshrl.u32 %v546, 7
    %v548 = vsub.s32 5, %v547
    %v549 = vrot.slane %v21, %v548
    %v551 = vsel %vm39, %v314, 0
    %v554 = vsel %vm39, %v319, 0
    %v557 = vsel %vm39, %v324, 0
    %v560 = vsel %vm39, %v329, 0
    %562 = vmatprep.subr.mxu0 0.0
    %563 = vmatpush1.msra.mxu0 %v542
    %564 = vmatprep.subr.mxu0 0.0
    %565 = vmatpush1.msra.mxu0 %v543
    %566 = vmatprep.subr.mxu0 0.0
    %567 = vmatpush1.msra.mxu0 %v544
    %568 = vmatprep.subr.mxu0 0.0
    %569 = vmatpush1.msra.mxu0 %v545
    %570 = vmatprep.subr.mxu0 0.0
    %571 = vmatpush1.msra.mxu0 0.0
    %572 = vmatprep.subr.mxu0 0.0
    %573 = vmatpush1.msra.mxu0 0.0
    %574 = vmatprep.subr.mxu0 0.0
    %575 = vmatpush1.msra.mxu0 0.0
    %576 = vmatprep.subr.mxu0 0.0
    %577 = vmatpush1.msra.mxu0 0.0
    %578 = vmatprep.subr.mxu0 0.0
    %579 = vmatpush1.msra.mxu0 0.0
    %580 = vmatprep.subr.mxu0 0.0
    %581 = vmatpush1.msra.mxu0 0.0
    %582 = vmatprep.subr.mxu0 0.0
    %583 = vmatpush1.msra.mxu0 0.0
    %584 = vmatprep.subr.mxu0 0.0
    %585 = vmatpush1.msra.mxu0 0.0
    %586 = vmatprep.subr.mxu0 0.0
    %587 = vmatpush1.msra.mxu0 0.0
    %588 = vmatprep.subr.mxu0 0.0
    %589 = vmatpush1.msra.mxu0 0.0
    %590 = vmatprep.subr.mxu0 0.0
    %591 = vmatpush1.msra.mxu0 0.0
    %592 = vmatprep.subr.mxu0 0.0
    %593 = vmatpush1.msra.mxu0 0.0
    %594 = vmatprep.subr.mxu0 0.0
    %595 = vmatpush1.msra.mxu0 0.0
    %596 = vmatprep.subr.mxu0 0.0
    %597 = vmatpush1.msra.mxu0 0.0
    %598 = vmatprep.subr.mxu0 0.0
    %599 = vmatpush1.msra.mxu0 0.0
    %600 = vmatprep.subr.mxu0 0.0
    %601 = vmatpush1.msra.mxu0 0.0
    %602 = vmatprep.subr.mxu0 0.0
    %603 = vmatpush1.msra.mxu0 0.0
    %604 = vmatprep.subr.mxu0 0.0
    %605 = vmatpush1.msra.mxu0 0.0
    %606 = vmatprep.subr.mxu0 0.0
    %607 = vmatpush1.msra.mxu0 0.0
    %608 = vmatprep.subr.mxu0 0.0
    %609 = vmatpush1.msra.mxu0 0.0
    %610 = vmatprep.subr.mxu0 0.0
    %611 = vmatpush1.msra.mxu0 0.0
    %612 = vmatprep.subr.mxu0 0.0
    %613 = vmatpush1.msra.mxu0 0.0
    %614 = vmatprep.subr.mxu0 0.0
    %615 = vmatpush1.msra.mxu0 0.0
    %616 = vmatprep.subr.mxu0 0.0
    %617 = vmatpush1.msra.mxu0 0.0
    %618 = vmatprep.subr.mxu0 0.0
    %619 = vmatpush1.msra.mxu0 0.0
    %620 = vmatprep.subr.mxu0 0.0
    %621 = vmatpush1.msra.mxu0 0.0
    %622 = vmatprep.subr.mxu0 0.0
    %623 = vmatpush1.msra.mxu0 0.0
    %624 = vmatprep.subr.mxu0 0.0
    %625 = vmatpush1.msra.mxu0 0.0
    %626 = vmatprep.mubr.f32.mxu0 0.0
    %627 = vmatmul.mubr.f32.gmra.mrb[0].mxu0 %v551
    %v628 = vpop.f32.mrb[0].mxu0
    %v629 = vadd.f32 %v549, %v628
    %v630 = vpop.f32.mrb[0].mxu0
    %631 = vmatprep.mubr.f32.mxu0 0.0
    %632 = vmatmul.mubr.f32.gmra.mrb[0].mxu0 %v554
    %v633 = vpop.f32.mrb[0].mxu0
    %v634 = vadd.f32 %v549, %v633
    %v635 = vpop.f32.mrb[0].mxu0
    %636 = vmatprep.mubr.f32.mxu0 0.0
    %637 = vmatmul.mubr.f32.gmra.mrb[0].mxu0 %v557
    %v638 = vpop.f32.mrb[0].mxu0
    %v639 = vadd.f32 %v549, %v638
    %v640 = vpop.f32.mrb[0].mxu0
    %641 = vmatprep.mubr.f32.mxu0 0.0
    %642 = vmatmul.mubr.f32.gmra.mrb[0].mxu0 %v560
    %v643 = vpop.f32.mrb[0].mxu0
    %v644 = vadd.f32 %v549, %v643
    %v645 = vpop.f32.mrb[0].mxu0
    %646 = vdwg.mxu0
    %vm647 = vcmask 64512
    %v649 = vsel %vm647, %v419, 0
    %v652 = vsel %vm647, %v524, 0
    %654 = vmatprep.subr.mxu0 0.0
    %655 = vmatpush1.xpose.msra.mxu0 %v652
    %656 = vmatprep.subr.mxu0 0.0
    %657 = vmatpush1.xpose.msra.mxu0 0.0
    %658 = vmatprep.subr.mxu0 0.0
    %659 = vmatpush1.xpose.msra.mxu0 0.0
    %660 = vmatprep.subr.mxu0 0.0
    %661 = vmatpush1.xpose.msra.mxu0 0.0
    %662 = vmatprep.subr.mxu0 0.0
    %663 = vmatpush1.xpose.msra.mxu0 0.0
    %664 = vmatprep.subr.mxu0 0.0
    %665 = vmatpush1.xpose.msra.mxu0 0.0
    %666 = vmatprep.subr.mxu0 0.0
    %667 = vmatpush1.xpose.msra.mxu0 0.0
    %668 = vmatprep.subr.mxu0 0.0
    %669 = vmatpush1.xpose.msra.mxu0 0.0
    %670 = vmatprep.subr.mxu0 0.0
    %671 = vmatpush1.xpose.msra.mxu0 0.0
    %672 = vmatprep.subr.mxu0 0.0
    %673 = vmatpush1.xpose.msra.mxu0 0.0
    %674 = vmatprep.subr.mxu0 0.0
    %675 = vmatpush1.xpose.msra.mxu0 0.0
    %676 = vmatprep.subr.mxu0 0.0
    %677 = vmatpush1.xpose.msra.mxu0 0.0
    %678 = vmatprep.subr.mxu0 0.0
    %679 = vmatpush1.xpose.msra.mxu0 0.0
    %680 = vmatprep.subr.mxu0 0.0
    %681 = vmatpush1.xpose.msra.mxu0 0.0
    %682 = vmatprep.subr.mxu0 0.0
    %683 = vmatpush1.xpose.msra.mxu0 0.0
    %684 = vmatprep.subr.mxu0 0.0
    %685 = vmatpush1.xpose.msra.mxu0 0.0
    %686 = vmatprep.subr.mxu0 0.0
    %687 = vmatpush1.xpose.msra.mxu0 0.0
    %688 = vmatprep.subr.mxu0 0.0
    %689 = vmatpush1.xpose.msra.mxu0 0.0
    %690 = vmatprep.subr.mxu0 0.0
    %691 = vmatpush1.xpose.msra.mxu0 0.0
    %692 = vmatprep.subr.mxu0 0.0
    %693 = vmatpush1.xpose.msra.mxu0 0.0
    %694 = vmatprep.subr.mxu0 0.0
    %695 = vmatpush1.xpose.msra.mxu0 0.0
    %696 = vmatprep.subr.mxu0 0.0
    %697 = vmatpush1.xpose.msra.mxu0 0.0
    %698 = vmatprep.subr.mxu0 0.0
    %699 = vmatpush1.xpose.msra.mxu0 0.0
    %700 = vmatprep.subr.mxu0 0.0
    %701 = vmatpush1.xpose.msra.mxu0 0.0
    %702 = vmatprep.subr.mxu0 0.0
    %703 = vmatpush1.xpose.msra.mxu0 0.0
    %704 = vmatprep.subr.mxu0 0.0
    %705 = vmatpush1.xpose.msra.mxu0 0.0
    %706 = vmatprep.subr.mxu0 0.0
    %707 = vmatpush1.xpose.msra.mxu0 0.0
    %708 = vmatprep.subr.mxu0 0.0
    %709 = vmatpush1.xpose.msra.mxu0 0.0
    %710 = vmatprep.subr.mxu0 0.0
    %711 = vmatpush1.xpose.msra.mxu0 0.0
    %712 = vmatprep.subr.mxu0 0.0
    %713 = vmatpush1.xpose.msra.mxu0 0.0
    %714 = vmatprep.subr.mxu0 0.0
    %715 = vmatpush1.xpose.msra.mxu0 0.0
    %716 = vmatprep.subr.mxu0 0.0
    %717 = vmatpush1.xpose.msra.mxu0 0.0
    %718 = vmatprep.mubr.f32.mxu0 0.0
    %719 = vmatmul.mubr.f32.gmra.mrb[0].mxu0 %v649
    %v720 = vpop.f32.mrb[0].mxu0
    %v721 = vadd.f32 0.0, %v720
    %v722 = vpop.f32.mrb[0].mxu0
    %723 = vdwg.mxu0
    %v725 = vsel %vm647, %v424, 0
    %v728 = vsel %vm647, %v529, 0
    %730 = vmatprep.subr.mxu0 0.0
    %731 = vmatpush1.xpose.msra.mxu0 %v728
    %732 = vmatprep.subr.mxu0 0.0
    %733 = vmatpush1.xpose.msra.mxu0 0.0
    %734 = vmatprep.subr.mxu0 0.0
    %735 = vmatpush1.xpose.msra.mxu0 0.0
    %736 = vmatprep.subr.mxu0 0.0
    %737 = vmatpush1.xpose.msra.mxu0 0.0
    %738 = vmatprep.subr.mxu0 0.0
    %739 = vmatpush1.xpose.msra.mxu0 0.0
    %740 = vmatprep.subr.mxu0 0.0
    %741 = vmatpush1.xpose.msra.mxu0 0.0
    %742 = vmatprep.subr.mxu0 0.0
    %743 = vmatpush1.xpose.msra.mxu0 0.0
    %744 = vmatprep.subr.mxu0 0.0
    %745 = vmatpush1.xpose.msra.mxu0 0.0
    %746 = vmatprep.subr.mxu0 0.0
    %747 = vmatpush1.xpose.msra.mxu0 0.0
    %748 = vmatprep.subr.mxu0 0.0
    %749 = vmatpush1.xpose.msra.mxu0 0.0
    %750 = vmatprep.subr.mxu0 0.0
    %751 = vmatpush1.xpose.msra.mxu0 0.0
    %752 = vmatprep.subr.mxu0 0.0
    %753 = vmatpush1.xpose.msra.mxu0 0.0
    %754 = vmatprep.subr.mxu0 0.0
    %755 = vmatpush1.xpose.msra.mxu0 0.0
    %756 = vmatprep.subr.mxu0 0.0
    %757 = vmatpush1.xpose.msra.mxu0 0.0
    %758 = vmatprep.subr.mxu0 0.0
    %759 = vmatpush1.xpose.msra.mxu0 0.0
    %760 = vmatprep.subr.mxu0 0.0
    %761 = vmatpush1.xpose.msra.mxu0 0.0
    %762 = vmatprep.subr.mxu0 0.0
    %763 = vmatpush1.xpose.msra.mxu0 0.0
    %764 = vmatprep.subr.mxu0 0.0
    %765 = vmatpush1.xpose.msra.mxu0 0.0
    %766 = vmatprep.subr.mxu0 0.0
    %767 = vmatpush1.xpose.msra.mxu0 0.0
    %768 = vmatprep.subr.mxu0 0.0
    %769 = vmatpush1.xpose.msra.mxu0 0.0
    %770 = vmatprep.subr.mxu0 0.0
    %771 = vmatpush1.xpose.msra.mxu0 0.0
    %772 = vmatprep.subr.mxu0 0.0
    %773 = vmatpush1.xpose.msra.mxu0 0.0
    %774 = vmatprep.subr.mxu0 0.0
    %775 = vmatpush1.xpose.msra.mxu0 0.0
    %776 = vmatprep.subr.mxu0 0.0
    %777 = vmatpush1.xpose.msra.mxu0 0.0
    %778 = vmatprep.subr.mxu0 0.0
    %779 = vmatpush1.xpose.msra.mxu0 0.0
    %780 = vmatprep.subr.mxu0 0.0
    %781 = vmatpush1.xpose.msra.mxu0 0.0
    %782 = vmatprep.subr.mxu0 0.0
    %783 = vmatpush1.xpose.msra.mxu0 0.0
    %784 = vmatprep.subr.mxu0 0.0
    %785 = vmatpush1.xpose.msra.mxu0 0.0
    %786 = vmatprep.subr.mxu0 0.0
    %787 = vmatpush1.xpose.msra.mxu0 0.0
    %788 = vmatprep.subr.mxu0 0.0
    %789 = vmatpush1.xpose.msra.mxu0 0.0
    %790 = vmatprep.subr.mxu0 0.0
    %791 = vmatpush1.xpose.msra.mxu0 0.0
    %792 = vmatprep.subr.mxu0 0.0
    %793 = vmatpush1.xpose.msra.mxu0 0.0
    %794 = vmatprep.mubr.f32.mxu0 0.0
    %795 = vmatmul.mubr.f32.gmra.mrb[0].mxu0 %v725
    %v796 = vpop.f32.mrb[0].mxu0
    %v797 = vadd.f32 0.0, %v796
    %v798 = vpop.f32.mrb[0].mxu0
    %799 = vdwg.mxu0
    %v801 = vsel %vm647, %v429, 0
    %v804 = vsel %vm647, %v534, 0
    %806 = vmatprep.subr.mxu0 0.0
    %807 = vmatpush1.xpose.msra.mxu0 %v804
    %808 = vmatprep.subr.mxu0 0.0
    %809 = vmatpush1.xpose.msra.mxu0 0.0
    %810 = vmatprep.subr.mxu0 0.0
    %811 = vmatpush1.xpose.msra.mxu0 0.0
    %812 = vmatprep.subr.mxu0 0.0
    %813 = vmatpush1.xpose.msra.mxu0 0.0
    %814 = vmatprep.subr.mxu0 0.0
    %815 = vmatpush1.xpose.msra.mxu0 0.0
    %816 = vmatprep.subr.mxu0 0.0
    %817 = vmatpush1.xpose.msra.mxu0 0.0
    %818 = vmatprep.subr.mxu0 0.0
    %819 = vmatpush1.xpose.msra.mxu0 0.0
    %820 = vmatprep.subr.mxu0 0.0
    %821 = vmatpush1.xpose.msra.mxu0 0.0
    %822 = vmatprep.subr.mxu0 0.0
    %823 = vmatpush1.xpose.msra.mxu0 0.0
    %824 = vmatprep.subr.mxu0 0.0
    %825 = vmatpush1.xpose.msra.mxu0 0.0
    %826 = vmatprep.subr.mxu0 0.0
    %827 = vmatpush1.xpose.msra.mxu0 0.0
    %828 = vmatprep.subr.mxu0 0.0
    %829 = vmatpush1.xpose.msra.mxu0 0.0
    %830 = vmatprep.subr.mxu0 0.0
    %831 = vmatpush1.xpose.msra.mxu0 0.0
    %832 = vmatprep.subr.mxu0 0.0
    %833 = vmatpush1.xpose.msra.mxu0 0.0
    %834 = vmatprep.subr.mxu0 0.0
    %835 = vmatpush1.xpose.msra.mxu0 0.0
    %836 = vmatprep.subr.mxu0 0.0
    %837 = vmatpush1.xpose.msra.mxu0 0.0
    %838 = vmatprep.subr.mxu0 0.0
    %839 = vmatpush1.xpose.msra.mxu0 0.0
    %840 = vmatprep.subr.mxu0 0.0
    %841 = vmatpush1.xpose.msra.mxu0 0.0
    %842 = vmatprep.subr.mxu0 0.0
    %843 = vmatpush1.xpose.msra.mxu0 0.0
    %844 = vmatprep.subr.mxu0 0.0
    %845 = vmatpush1.xpose.msra.mxu0 0.0
    %846 = vmatprep.subr.mxu0 0.0
    %847 = vmatpush1.xpose.msra.mxu0 0.0
    %848 = vmatprep.subr.mxu0 0.0
    %849 = vmatpush1.xpose.msra.mxu0 0.0
    %850 = vmatprep.subr.mxu0 0.0
    %851 = vmatpush1.xpose.msra.mxu0 0.0
    %852 = vmatprep.subr.mxu0 0.0
    %853 = vmatpush1.xpose.msra.mxu0 0.0
    %854 = vmatprep.subr.mxu0 0.0
    %855 = vmatpush1.xpose.msra.mxu0 0.0
    %856 = vmatprep.subr.mxu0 0.0
    %857 = vmatpush1.xpose.msra.mxu0 0.0
    %858 = vmatprep.subr.mxu0 0.0
    %859 = vmatpush1.xpose.msra.mxu0 0.0
    %860 = vmatprep.subr.mxu0 0.0
    %861 = vmatpush1.xpose.msra.mxu0 0.0
    %862 = vmatprep.subr.mxu0 0.0
    %863 = vmatpush1.xpose.msra.mxu0 0.0
    %864 = vmatprep.subr.mxu0 0.0
    %865 = vmatpush1.xpose.msra.mxu0 0.0
    %866 = vmatprep.subr.mxu0 0.0
    %867 = vmatpush1.xpose.msra.mxu0 0.0
    %868 = vmatprep.subr.mxu0 0.0
    %869 = vmatpush1.xpose.msra.mxu0 0.0
    %870 = vmatprep.mubr.f32.mxu0 0.0
    %871 = vmatmul.mubr.f32.gmra.mrb[0].mxu0 %v801
    %v872 = vpop.f32.mrb[0].mxu0
    %v873 = vadd.f32 0.0, %v872
    %v874 = vpop.f32.mrb[0].mxu0
    %875 = vdwg.mxu0
    %v877 = vsel %vm647, %v434, 0
    %v880 = vsel %vm647, %v539, 0
    %882 = vmatprep.subr.mxu0 0.0
    %883 = vmatpush1.xpose.msra.mxu0 %v880
    %884 = vmatprep.subr.mxu0 0.0
    %885 = vmatpush1.xpose.msra.mxu0 0.0
    %886 = vmatprep.subr.mxu0 0.0
    %887 = vmatpush1.xpose.msra.mxu0 0.0
    %888 = vmatprep.subr.mxu0 0.0
    %889 = vmatpush1.xpose.msra.mxu0 0.0
    %890 = vmatprep.subr.mxu0 0.0
    %891 = vmatpush1.xpose.msra.mxu0 0.0
    %892 = vmatprep.subr.mxu0 0.0
    %893 = vmatpush1.xpose.msra.mxu0 0.0
    %894 = vmatprep.subr.mxu0 0.0
    %895 = vmatpush1.xpose.msra.mxu0 0.0
    %896 = vmatprep.subr.mxu0 0.0
    %897 = vmatpush1.xpose.msra.mxu0 0.0
    %898 = vmatprep.subr.mxu0 0.0
    %899 = vmatpush1.xpose.msra.mxu0 0.0
    %900 = vmatprep.subr.mxu0 0.0
    %901 = vmatpush1.xpose.msra.mxu0 0.0
    %902 = vmatprep.subr.mxu0 0.0
    %903 = vmatpush1.xpose.msra.mxu0 0.0
    %904 = vmatprep.subr.mxu0 0.0
    %905 = vmatpush1.xpose.msra.mxu0 0.0
    %906 = vmatprep.subr.mxu0 0.0
    %907 = vmatpush1.xpose.msra.mxu0 0.0
    %908 = vmatprep.subr.mxu0 0.0
    %909 = vmatpush1.xpose.msra.mxu0 0.0
    %910 = vmatprep.subr.mxu0 0.0
    %911 = vmatpush1.xpose.msra.mxu0 0.0
    %912 = vmatprep.subr.mxu0 0.0
    %913 = vmatpush1.xpose.msra.mxu0 0.0
    %914 = vmatprep.subr.mxu0 0.0
    %915 = vmatpush1.xpose.msra.mxu0 0.0
    %916 = vmatprep.subr.mxu0 0.0
    %917 = vmatpush1.xpose.msra.mxu0 0.0
    %918 = vmatprep.subr.mxu0 0.0
    %919 = vmatpush1.xpose.msra.mxu0 0.0
    %920 = vmatprep.subr.mxu0 0.0
    %921 = vmatpush1.xpose.msra.mxu0 0.0
    %922 = vmatprep.subr.mxu0 0.0
    %923 = vmatpush1.xpose.msra.mxu0 0.0
    %924 = vmatprep.subr.mxu0 0.0
    %925 = vmatpush1.xpose.msra.mxu0 0.0
    %926 = vmatprep.subr.mxu0 0.0
    %927 = vmatpush1.xpose.msra.mxu0 0.0
    %928 = vmatprep.subr.mxu0 0.0
    %929 = vmatpush1.xpose.msra.mxu0 0.0
    %930 = vmatprep.subr.mxu0 0.0
    %931 = vmatpush1.xpose.msra.mxu0 0.0
    %932 = vmatprep.subr.mxu0 0.0
    %933 = vmatpush1.xpose.msra.mxu0 0.0
    %934 = vmatprep.subr.mxu0 0.0
    %935 = vmatpush1.xpose.msra.mxu0 0.0
    %936 = vmatprep.subr.mxu0 0.0
    %937 = vmatpush1.xpose.msra.mxu0 0.0
    %938 = vmatprep.subr.mxu0 0.0
    %939 = vmatpush1.xpose.msra.mxu0 0.0
    %940 = vmatprep.subr.mxu0 0.0
    %941 = vmatpush1.xpose.msra.mxu0 0.0
    %942 = vmatprep.subr.mxu0 0.0
    %943 = vmatpush1.xpose.msra.mxu0 0.0
    %944 = vmatprep.subr.mxu0 0.0
    %945 = vmatpush1.xpose.msra.mxu0 0.0
    %946 = vmatprep.mubr.f32.mxu0 0.0
    %947 = vmatmul.mubr.f32.gmra.mrb[0].mxu0 %v877
    %v948 = vpop.f32.mrb[0].mxu0
    %v949 = vadd.f32 0.0, %v948
    %v950 = vpop.f32.mrb[0].mxu0
    %951 = vdwg.mxu0
    %v952 = vsel %vm647, %v721, -inf
    %953 = vmax.xlane.f32.xlu0 %v952
    %v954 = vpop.xlane.xlu0 %953
    %v955 = vsel %vm647, %v797, -inf
    %956 = vmax.xlane.f32.xlu0 %v955
    %v957 = vpop.xlane.xlu0 %956
    %v958 = vsel %vm647, %v873, -inf
    %959 = vmax.xlane.f32.xlu0 %v958
    %v960 = vpop.xlane.xlu0 %959
    %v961 = vsel %vm647, %v949, -inf
    %962 = vmax.xlane.f32.xlu0 %v961
    %v963 = vpop.xlane.xlu0 %962
    %v964 = vsub.f32 %v721, %v954
    %v965 = vsub.f32 %v797, %v957
    %v966 = vsub.f32 %v873, %v960
    %v967 = vsub.f32 %v949, %v963
    %v968 = vmul.f32 %v964, 1.442695
    %v969 = vpow.pop %v968
    %v970 = vmul.f32 %v965, 1.442695
    %v971 = vpow.pop %v970
    %v972 = vmul.f32 %v966, 1.442695
    %v973 = vpow.pop %v972
    %v974 = vmul.f32 %v967, 1.442695
    %v975 = vpow.pop %v974
    %v976 = vsel %vm647, %v969, 0.0
    %977 = vadd.xlane.f32.xlu0 %v976
    %v978 = vpop.xlane.xlu0 %977
    %v979 = vsel %vm647, %v971, 0.0
    %980 = vadd.xlane.f32.xlu0 %v979
    %v981 = vpop.xlane.xlu0 %980
    %v982 = vsel %vm647, %v973, 0.0
    %983 = vadd.xlane.f32.xlu0 %v982
    %v984 = vpop.xlane.xlu0 %983
    %v985 = vsel %vm647, %v975, 0.0
    %986 = vadd.xlane.f32.xlu0 %v985
    %v987 = vpop.xlane.xlu0 %986
    %v988 = vrcp.pop %v978
    %v989 = vrcp.pop %v981
    %v990 = vrcp.pop %v984
    %v991 = vrcp.pop %v987
    %v992 = vmul.f32 %v969, %v988
    %v993 = vmul.f32 %v971, %v989
    %v994 = vmul.f32 %v973, %v990
    %v995 = vmul.f32 %v975, %v991
    %v997 = vsel %vm647, %v992, 0
    %999 = vmatprep.subr.mxu0 0.0
    %1000 = vmatpush1.msra.mxu0 %v629
    %1001 = vmatprep.subr.mxu0 0.0
    %1002 = vmatpush1.msra.mxu0 0.0
    %1003 = vmatprep.subr.mxu0 0.0
    %1004 = vmatpush1.msra.mxu0 0.0
    %1005 = vmatprep.subr.mxu0 0.0
    %1006 = vmatpush1.msra.mxu0 0.0
    %1007 = vmatprep.subr.mxu0 0.0
    %1008 = vmatpush1.msra.mxu0 0.0
    %1009 = vmatprep.subr.mxu0 0.0
    %1010 = vmatpush1.msra.mxu0 0.0
    %1011 = vmatprep.subr.mxu0 0.0
    %1012 = vmatpush1.msra.mxu0 0.0
    %1013 = vmatprep.subr.mxu0 0.0
    %1014 = vmatpush1.msra.mxu0 0.0
    %1015 = vmatprep.subr.mxu0 0.0
    %1016 = vmatpush1.msra.mxu0 0.0
    %1017 = vmatprep.subr.mxu0 0.0
    %1018 = vmatpush1.msra.mxu0 0.0
    %1019 = vmatprep.subr.mxu0 0.0
    %1020 = vmatpush1.msra.mxu0 0.0
    %1021 = vmatprep.subr.mxu0 0.0
    %1022 = vmatpush1.msra.mxu0 0.0
    %1023 = vmatprep.subr.mxu0 0.0
    %1024 = vmatpush1.msra.mxu0 0.0
    %1025 = vmatprep.subr.mxu0 0.0
    %1026 = vmatpush1.msra.mxu0 0.0
    %1027 = vmatprep.subr.mxu0 0.0
    %1028 = vmatpush1.msra.mxu0 0.0
    %1029 = vmatprep.subr.mxu0 0.0
    %1030 = vmatpush1.msra.mxu0 0.0
    %1031 = vmatprep.subr.mxu0 0.0
    %1032 = vmatpush1.msra.mxu0 0.0
    %1033 = vmatprep.subr.mxu0 0.0
    %1034 = vmatpush1.msra.mxu0 0.0
    %1035 = vmatprep.subr.mxu0 0.0
    %1036 = vmatpush1.msra.mxu0 0.0
    %1037 = vmatprep.subr.mxu0 0.0
    %1038 = vmatpush1.msra.mxu0 0.0
    %1039 = vmatprep.subr.mxu0 0.0
    %1040 = vmatpush1.msra.mxu0 0.0
    %1041 = vmatprep.subr.mxu0 0.0
    %1042 = vmatpush1.msra.mxu0 0.0
    %1043 = vmatprep.subr.mxu0 0.0
    %1044 = vmatpush1.msra.mxu0 0.0
    %1045 = vmatprep.subr.mxu0 0.0
    %1046 = vmatpush1.msra.mxu0 0.0
    %1047 = vmatprep.subr.mxu0 0.0
    %1048 = vmatpush1.msra.mxu0 0.0
    %1049 = vmatprep.subr.mxu0 0.0
    %1050 = vmatpush1.msra.mxu0 0.0
    %1051 = vmatprep.subr.mxu0 0.0
    %1052 = vmatpush1.msra.mxu0 0.0
    %1053 = vmatprep.subr.mxu0 0.0
    %1054 = vmatpush1.msra.mxu0 0.0
    %1055 = vmatprep.subr.mxu0 0.0
    %1056 = vmatpush1.msra.mxu0 0.0
    %1057 = vmatprep.subr.mxu0 0.0
    %1058 = vmatpush1.msra.mxu0 0.0
    %1059 = vmatprep.subr.mxu0 0.0
    %1060 = vmatpush1.msra.mxu0 0.0
    %1061 = vmatprep.subr.mxu0 0.0
    %1062 = vmatpush1.msra.mxu0 0.0
    %1063 = vmatprep.mubr.f32.mxu0 0.0
    %1064 = vmatmul.mubr.f32.gmra.mrb[0].mxu0 %v997
    %v1065 = vpop.f32.mrb[0].mxu0
    %v1066 = vadd.f32 0.0, %v1065
    %v1067 = vpop.f32.mrb[0].mxu0
    %1068 = vdwg.mxu0
    %v1070 = vsel %vm647, %v993, 0
    %1072 = vmatprep.subr.mxu0 0.0
    %1073 = vmatpush1.msra.mxu0 %v634
    %1074 = vmatprep.subr.mxu0 0.0
    %1075 = vmatpush1.msra.mxu0 0.0
    %1076 = vmatprep.subr.mxu0 0.0
    %1077 = vmatpush1.msra.mxu0 0.0
    %1078 = vmatprep.subr.mxu0 0.0
    %1079 = vmatpush1.msra.mxu0 0.0
    %1080 = vmatprep.subr.mxu0 0.0
    %1081 = vmatpush1.msra.mxu0 0.0
    %1082 = vmatprep.subr.mxu0 0.0
    %1083 = vmatpush1.msra.mxu0 0.0
    %1084 = vmatprep.subr.mxu0 0.0
    %1085 = vmatpush1.msra.mxu0 0.0
    %1086 = vmatprep.subr.mxu0 0.0
    %1087 = vmatpush1.msra.mxu0 0.0
    %1088 = vmatprep.subr.mxu0 0.0
    %1089 = vmatpush1.msra.mxu0 0.0
    %1090 = vmatprep.subr.mxu0 0.0
    %1091 = vmatpush1.msra.mxu0 0.0
    %1092 = vmatprep.subr.mxu0 0.0
    %1093 = vmatpush1.msra.mxu0 0.0
    %1094 = vmatprep.subr.mxu0 0.0
    %1095 = vmatpush1.msra.mxu0 0.0
    %1096 = vmatprep.subr.mxu0 0.0
    %1097 = vmatpush1.msra.mxu0 0.0
    %1098 = vmatprep.subr.mxu0 0.0
    %1099 = vmatpush1.msra.mxu0 0.0
    %1100 = vmatprep.subr.mxu0 0.0
    %1101 = vmatpush1.msra.mxu0 0.0
    %1102 = vmatprep.subr.mxu0 0.0
    %1103 = vmatpush1.msra.mxu0 0.0
    %1104 = vmatprep.subr.mxu0 0.0
    %1105 = vmatpush1.msra.mxu0 0.0
    %1106 = vmatprep.subr.mxu0 0.0
    %1107 = vmatpush1.msra.mxu0 0.0
    %1108 = vmatprep.subr.mxu0 0.0
    %1109 = vmatpush1.msra.mxu0 0.0
    %1110 = vmatprep.subr.mxu0 0.0
    %1111 = vmatpush1.msra.mxu0 0.0
    %1112 = vmatprep.subr.mxu0 0.0
    %1113 = vmatpush1.msra.mxu0 0.0
    %1114 = vmatprep.subr.mxu0 0.0
    %1115 = vmatpush1.msra.mxu0 0.0
    %1116 = vmatprep.subr.mxu0 0.0
    %1117 = vmatpush1.msra.mxu0 0.0
    %1118 = vmatprep.subr.mxu0 0.0
    %1119 = vmatpush1.msra.mxu0 0.0
    %1120 = vmatprep.subr.mxu0 0.0
    %1121 = vmatpush1.msra.mxu0 0.0
    %1122 = vmatprep.subr.mxu0 0.0
    %1123 = vmatpush1.msra.mxu0 0.0
    %1124 = vmatprep.subr.mxu0 0.0
    %1125 = vmatpush1.msra.mxu0 0.0
    %1126 = vmatprep.subr.mxu0 0.0
    %1127 = vmatpush1.msra.mxu0 0.0
    %1128 = vmatprep.subr.mxu0 0.0
    %1129 = vmatpush1.msra.mxu0 0.0
    %1130 = vmatprep.subr.mxu0 0.0
    %1131 = vmatpush1.msra.mxu0 0.0
    %1132 = vmatprep.subr.mxu0 0.0
    %1133 = vmatpush1.msra.mxu0 0.0
    %1134 = vmatprep.subr.mxu0 0.0
    %1135 = vmatpush1.msra.mxu0 0.0
    %1136 = vmatprep.mubr.f32.mxu0 0.0
    %1137 = vmatmul.mubr.f32.gmra.mrb[0].mxu0 %v1070
    %v1138 = vpop.f32.mrb[0].mxu0
    %v1139 = vadd.f32 0.0, %v1138
    %v1140 = vpop.f32.mrb[0].mxu0
    %1141 = vdwg.mxu0
    %v1143 = vsel %vm647, %v994, 0
    %1145 = vmatprep.subr.mxu0 0.0
    %1146 = vmatpush1.msra.mxu0 %v639
    %1147 = vmatprep.subr.mxu0 0.0
    %1148 = vmatpush1.msra.mxu0 0.0
    %1149 = vmatprep.subr.mxu0 0.0
    %1150 = vmatpush1.msra.mxu0 0.0
    %1151 = vmatprep.subr.mxu0 0.0
    %1152 = vmatpush1.msra.mxu0 0.0
    %1153 = vmatprep.subr.mxu0 0.0
    %1154 = vmatpush1.msra.mxu0 0.0
    %1155 = vmatprep.subr.mxu0 0.0
    %1156 = vmatpush1.msra.mxu0 0.0
    %1157 = vmatprep.subr.mxu0 0.0
    %1158 = vmatpush1.msra.mxu0 0.0
    %1159 = vmatprep.subr.mxu0 0.0
    %1160 = vmatpush1.msra.mxu0 0.0
    %1161 = vmatprep.subr.mxu0 0.0
    %1162 = vmatpush1.msra.mxu0 0.0
    %1163 = vmatprep.subr.mxu0 0.0
    %1164 = vmatpush1.msra.mxu0 0.0
    %1165 = vmatprep.subr.mxu0 0.0
    %1166 = vmatpush1.msra.mxu0 0.0
    %1167 = vmatprep.subr.mxu0 0.0
    %1168 = vmatpush1.msra.mxu0 0.0
    %1169 = vmatprep.subr.mxu0 0.0
    %1170 = vmatpush1.msra.mxu0 0.0
    %1171 = vmatprep.subr.mxu0 0.0
    %1172 = vmatpush1.msra.mxu0 0.0
    %1173 = vmatprep.subr.mxu0 0.0
    %1174 = vmatpush1.msra.mxu0 0.0
    %1175 = vmatprep.subr.mxu0 0.0
    %1176 = vmatpush1.msra.mxu0 0.0
    %1177 = vmatprep.subr.mxu0 0.0
    %1178 = vmatpush1.msra.mxu0 0.0
    %1179 = vmatprep.subr.mxu0 0.0
    %1180 = vmatpush1.msra.mxu0 0.0
    %1181 = vmatprep.subr.mxu0 0.0
    %1182 = vmatpush1.msra.mxu0 0.0
    %1183 = vmatprep.subr.mxu0 0.0
    %1184 = vmatpush1.msra.mxu0 0.0
    %1185 = vmatprep.subr.mxu0 0.0
    %1186 = vmatpush1.msra.mxu0 0.0
    %1187 = vmatprep.subr.mxu0 0.0
    %1188 = vmatpush1.msra.mxu0 0.0
    %1189 = vmatprep.subr.mxu0 0.0
    %1190 = vmatpush1.msra.mxu0 0.0
    %1191 = vmatprep.subr.mxu0 0.0
    %1192 = vmatpush1.msra.mxu0 0.0
    %1193 = vmatprep.subr.mxu0 0.0
    %1194 = vmatpush1.msra.mxu0 0.0
    %1195 = vmatprep.subr.mxu0 0.0
    %1196 = vmatpush1.msra.mxu0 0.0
    %1197 = vmatprep.subr.mxu0 0.0
    %1198 = vmatpush1.msra.mxu0 0.0
    %1199 = vmatprep.subr.mxu0 0.0
    %1200 = vmatpush1.msra.mxu0 0.0
    %1201 = vmatprep.subr.mxu0 0.0
    %1202 = vmatpush1.msra.mxu0 0.0
    %1203 = vmatprep.subr.mxu0 0.0
    %1204 = vmatpush1.msra.mxu0 0.0
    %1205 = vmatprep.subr.mxu0 0.0
    %1206 = vmatpush1.msra.mxu0 0.0
    %1207 = vmatprep.subr.mxu0 0.0
    %1208 = vmatpush1.msra.mxu0 0.0
    %1209 = vmatprep.mubr.f32.mxu0 0.0
    %1210 = vmatmul.mubr.f32.gmra.mrb[0].mxu0 %v1143
    %v1211 = vpop.f32.mrb[0].mxu0
    %v1212 = vadd.f32 0.0, %v1211
    %v1213 = vpop.f32.mrb[0].mxu0
    %1214 = vdwg.mxu0
    %v1216 = vsel %vm647, %v995, 0
    %1218 = vmatprep.subr.mxu0 0.0
    %1219 = vmatpush1.msra.mxu0 %v644
    %1220 = vmatprep.subr.mxu0 0.0
    %1221 = vmatpush1.msra.mxu0 0.0
    %1222 = vmatprep.subr.mxu0 0.0
    %1223 = vmatpush1.msra.mxu0 0.0
    %1224 = vmatprep.subr.mxu0 0.0
    %1225 = vmatpush1.msra.mxu0 0.0
    %1226 = vmatprep.subr.mxu0 0.0
    %1227 = vmatpush1.msra.mxu0 0.0
    %1228 = vmatprep.subr.mxu0 0.0
    %1229 = vmatpush1.msra.mxu0 0.0
    %1230 = vmatprep.subr.mxu0 0.0
    %1231 = vmatpush1.msra.mxu0 0.0
    %1232 = vmatprep.subr.mxu0 0.0
    %1233 = vmatpush1.msra.mxu0 0.0
    %1234 = vmatprep.subr.mxu0 0.0
    %1235 = vmatpush1.msra.mxu0 0.0
    %1236 = vmatprep.subr.mxu0 0.0
    %1237 = vmatpush1.msra.mxu0 0.0
    %1238 = vmatprep.subr.mxu0 0.0
    %1239 = vmatpush1.msra.mxu0 0.0
    %1240 = vmatprep.subr.mxu0 0.0
    %1241 = vmatpush1.msra.mxu0 0.0
    %1242 = vmatprep.subr.mxu0 0.0
    %1243 = vmatpush1.msra.mxu0 0.0
    %1244 = vmatprep.subr.mxu0 0.0
    %1245 = vmatpush1.msra.mxu0 0.0
    %1246 = vmatprep.subr.mxu0 0.0
    %1247 = vmatpush1.msra.mxu0 0.0
    %1248 = vmatprep.subr.mxu0 0.0
    %1249 = vmatpush1.msra.mxu0 0.0
    %1250 = vmatprep.subr.mxu0 0.0
    %1251 = vmatpush1.msra.mxu0 0.0
    %1252 = vmatprep.subr.mxu0 0.0
    %1253 = vmatpush1.msra.mxu0 0.0
    %1254 = vmatprep.subr.mxu0 0.0
    %1255 = vmatpush1.msra.mxu0 0.0
    %1256 = vmatprep.subr.mxu0 0.0
    %1257 = vmatpush1.msra.mxu0 0.0
    %1258 = vmatprep.subr.mxu0 0.0
    %1259 = vmatpush1.msra.mxu0 0.0
    %1260 = vmatprep.subr.mxu0 0.0
    %1261 = vmatpush1.msra.mxu0 0.0
    %1262 = vmatprep.subr.mxu0 0.0
    %1263 = vmatpush1.msra.mxu0 0.0
    %1264 = vmatprep.subr.mxu0 0.0
    %1265 = vmatpush1.msra.mxu0 0.0
    %1266 = vmatprep.subr.mxu0 0.0
    %1267 = vmatpush1.msra.mxu0 0.0
    %1268 = vmatprep.subr.mxu0 0.0
    %1269 = vmatpush1.msra.mxu0 0.0
    %1270 = vmatprep.subr.mxu0 0.0
    %1271 = vmatpush1.msra.mxu0 0.0
    %1272 = vmatprep.subr.mxu0 0.0
    %1273 = vmatpush1.msra.mxu0 0.0
    %1274 = vmatprep.subr.mxu0 0.0
    %1275 = vmatpush1.msra.mxu0 0.0
    %1276 = vmatprep.subr.mxu0 0.0
    %1277 = vmatpush1.msra.mxu0 0.0
    %1278 = vmatprep.subr.mxu0 0.0
    %1279 = vmatpush1.msra.mxu0 0.0
    %1280 = vmatprep.subr.mxu0 0.0
    %1281 = vmatpush1.msra.mxu0 0.0
    %1282 = vmatprep.mubr.f32.mxu0 0.0
    %1283 = vmatmul.mubr.f32.gmra.mrb[0].mxu0 %v1216
    %v1284 = vpop.f32.mrb[0].mxu0
    %v1285 = vadd.f32 0.0, %v1284
    %v1286 = vpop.f32.mrb[0].mxu0
    %1287 = vdwg.mxu0
    %1288 = vrot.lane.b32.xlu0 %v419, 120
    %v1289 = vpop.permute.xlu0 %1288
    %1290 = vrot.lane.b32.xlu0 %v524, 120
    %v1291 = vpop.permute.xlu0 %1290
    %v1292 = vsel %vm647, %v1289, 0
    %v1294 = vsel %vm647, %v1291, 0
    %1296 = vmatprep.subr.mxu0 0.0
    %1297 = vmatpush1.xpose.msra.mxu0 %v1294
    %1298 = vmatprep.subr.mxu0 0.0
    %1299 = vmatpush1.xpose.msra.mxu0 0.0
    %1300 = vmatprep.subr.mxu0 0.0
    %1301 = vmatpush1.xpose.msra.mxu0 0.0
    %1302 = vmatprep.subr.mxu0 0.0
    %1303 = vmatpush1.xpose.msra.mxu0 0.0
    %1304 = vmatprep.subr.mxu0 0.0
    %1305 = vmatpush1.xpose.msra.mxu0 0.0
    %1306 = vmatprep.subr.mxu0 0.0
    %1307 = vmatpush1.xpose.msra.mxu0 0.0
    %1308 = vmatprep.subr.mxu0 0.0
    %1309 = vmatpush1.xpose.msra.mxu0 0.0
    %1310 = vmatprep.subr.mxu0 0.0
    %1311 = vmatpush1.xpose.msra.mxu0 0.0
    %1312 = vmatprep.subr.mxu0 0.0
    %1313 = vmatpush1.xpose.msra.mxu0 0.0
    %1314 = vmatprep.subr.mxu0 0.0
    %1315 = vmatpush1.xpose.msra.mxu0 0.0
    %1316 = vmatprep.subr.mxu0 0.0
    %1317 = vmatpush1.xpose.msra.mxu0 0.0
    %1318 = vmatprep.subr.mxu0 0.0
    %1319 = vmatpush1.xpose.msra.mxu0 0.0
    %1320 = vmatprep.subr.mxu0 0.0
    %1321 = vmatpush1.xpose.msra.mxu0 0.0
    %1322 = vmatprep.subr.mxu0 0.0
    %1323 = vmatpush1.xpose.msra.mxu0 0.0
    %1324 = vmatprep.subr.mxu0 0.0
    %1325 = vmatpush1.xpose.msra.mxu0 0.0
    %1326 = vmatprep.subr.mxu0 0.0
    %1327 = vmatpush1.xpose.msra.mxu0 0.0
    %1328 = vmatprep.subr.mxu0 0.0
    %1329 = vmatpush1.xpose.msra.mxu0 0.0
    %1330 = vmatprep.subr.mxu0 0.0
    %1331 = vmatpush1.xpose.msra.mxu0 0.0
    %1332 = vmatprep.subr.mxu0 0.0
    %1333 = vmatpush1.xpose.msra.mxu0 0.0
    %1334 = vmatprep.subr.mxu0 0.0
    %1335 = vmatpush1.xpose.msra.mxu0 0.0
    %1336 = vmatprep.subr.mxu0 0.0
    %1337 = vmatpush1.xpose.msra.mxu0 0.0
    %1338 = vmatprep.subr.mxu0 0.0
    %1339 = vmatpush1.xpose.msra.mxu0 0.0
    %1340 = vmatprep.subr.mxu0 0.0
    %1341 = vmatpush1.xpose.msra.mxu0 0.0
    %1342 = vmatprep.subr.mxu0 0.0
    %1343 = vmatpush1.xpose.msra.mxu0 0.0
    %1344 = vmatprep.subr.mxu0 0.0
    %1345 = vmatpush1.xpose.msra.mxu0 0.0
    %1346 = vmatprep.subr.mxu0 0.0
    %1347 = vmatpush1.xpose.msra.mxu0 0.0
    %1348 = vmatprep.subr.mxu0 0.0
    %1349 = vmatpush1.xpose.msra.mxu0 0.0
    %1350 = vmatprep.subr.mxu0 0.0
    %1351 = vmatpush1.xpose.msra.mxu0 0.0
    %1352 = vmatprep.subr.mxu0 0.0
    %1353 = vmatpush1.xpose.msra.mxu0 0.0
    %1354 = vmatprep.subr.mxu0 0.0
    %1355 = vmatpush1.xpose.msra.mxu0 0.0
    %1356 = vmatprep.subr.mxu0 0.0
    %1357 = vmatpush1.xpose.msra.mxu0 0.0
    %1358 = vmatprep.subr.mxu0 0.0
    %1359 = vmatpush1.xpose.msra.mxu0 0.0
    %1360 = vmatprep.mubr.f32.mxu0 0.0
    %1361 = vmatmul.mubr.f32.gmra.mrb[0].mxu0 %v1292
    %v1362 = vpop.f32.mrb[0].mxu0
    %v1363 = vadd.f32 0.0, %v1362
    %v1364 = vpop.f32.mrb[0].mxu0
    %1365 = vdwg.mxu0
    %1366 = vrot.lane.b32.xlu0 %v424, 120
    %v1367 = vpop.permute.xlu0 %1366
    %1368 = vrot.lane.b32.xlu0 %v529, 120
    %v1369 = vpop.permute.xlu0 %1368
    %v1370 = vsel %vm647, %v1367, 0
    %v1372 = vsel %vm647, %v1369, 0
    %1374 = vmatprep.subr.mxu0 0.0
    %1375 = vmatpush1.xpose.msra.mxu0 %v1372
    %1376 = vmatprep.subr.mxu0 0.0
    %1377 = vmatpush1.xpose.msra.mxu0 0.0
    %1378 = vmatprep.subr.mxu0 0.0
    %1379 = vmatpush1.xpose.msra.mxu0 0.0
    %1380 = vmatprep.subr.mxu0 0.0
    %1381 = vmatpush1.xpose.msra.mxu0 0.0
    %1382 = vmatprep.subr.mxu0 0.0
    %1383 = vmatpush1.xpose.msra.mxu0 0.0
    %1384 = vmatprep.subr.mxu0 0.0
    %1385 = vmatpush1.xpose.msra.mxu0 0.0
    %1386 = vmatprep.subr.mxu0 0.0
    %1387 = vmatpush1.xpose.msra.mxu0 0.0
    %1388 = vmatprep.subr.mxu0 0.0
    %1389 = vmatpush1.xpose.msra.mxu0 0.0
    %1390 = vmatprep.subr.mxu0 0.0
    %1391 = vmatpush1.xpose.msra.mxu0 0.0
    %1392 = vmatprep.subr.mxu0 0.0
    %1393 = vmatpush1.xpose.msra.mxu0 0.0
    %1394 = vmatprep.subr.mxu0 0.0
    %1395 = vmatpush1.xpose.msra.mxu0 0.0
    %1396 = vmatprep.subr.mxu0 0.0
    %1397 = vmatpush1.xpose.msra.mxu0 0.0
    %1398 = vmatprep.subr.mxu0 0.0
    %1399 = vmatpush1.xpose.msra.mxu0 0.0
    %1400 = vmatprep.subr.mxu0 0.0
    %1401 = vmatpush1.xpose.msra.mxu0 0.0
    %1402 = vmatprep.subr.mxu0 0.0
    %1403 = vmatpush1.xpose.msra.mxu0 0.0
    %1404 = vmatprep.subr.mxu0 0.0
    %1405 = vmatpush1.xpose.msra.mxu0 0.0
    %1406 = vmatprep.subr.mxu0 0.0
    %1407 = vmatpush1.xpose.msra.mxu0 0.0
    %1408 = vmatprep.subr.mxu0 0.0
    %1409 = vmatpush1.xpose.msra.mxu0 0.0
    %1410 = vmatprep.subr.mxu0 0.0
    %1411 = vmatpush1.xpose.msra.mxu0 0.0
    %1412 = vmatprep.subr.mxu0 0.0
    %1413 = vmatpush1.xpose.msra.mxu0 0.0
    %1414 = vmatprep.subr.mxu0 0.0
    %1415 = vmatpush1.xpose.msra.mxu0 0.0
    %1416 = vmatprep.subr.mxu0 0.0
    %1417 = vmatpush1.xpose.msra.mxu0 0.0
    %1418 = vmatprep.subr.mxu0 0.0
    %1419 = vmatpush1.xpose.msra.mxu0 0.0
    %1420 = vmatprep.subr.mxu0 0.0
    %1421 = vmatpush1.xpose.msra.mxu0 0.0
    %1422 = vmatprep.subr.mxu0 0.0
    %1423 = vmatpush1.xpose.msra.mxu0 0.0
    %1424 = vmatprep.subr.mxu0 0.0
    %1425 = vmatpush1.xpose.msra.mxu0 0.0
    %1426 = vmatprep.subr.mxu0 0.0
    %1427 = vmatpush1.xpose.msra.mxu0 0.0
    %1428 = vmatprep.subr.mxu0 0.0
    %1429 = vmatpush1.xpose.msra.mxu0 0.0
    %1430 = vmatprep.subr.mxu0 0.0
    %1431 = vmatpush1.xpose.msra.mxu0 0.0
    %1432 = vmatprep.subr.mxu0 0.0
    %1433 = vmatpush1.xpose.msra.mxu0 0.0
    %1434 = vmatprep.subr.mxu0 0.0
    %1435 = vmatpush1.xpose.msra.mxu0 0.0
    %1436 = vmatprep.subr.mxu0 0.0
    %1437 = vmatpush1.xpose.msra.mxu0 0.0
    %1438 = vmatprep.mubr.f32.mxu0 0.0
    %1439 = vmatmul.mubr.f32.gmra.mrb[0].mxu0 %v1370
    %v1440 = vpop.f32.mrb[0].mxu0
    %v1441 = vadd.f32 0.0, %v1440
    %v1442 = vpop.f32.mrb[0].mxu0
    %1443 = vdwg.mxu0
    %1444 = vrot.lane.b32.xlu0 %v429, 120
    %v1445 = vpop.permute.xlu0 %1444
    %1446 = vrot.lane.b32.xlu0 %v534, 120
    %v1447 = vpop.permute.xlu0 %1446
    %v1448 = vsel %vm647, %v1445, 0
    %v1450 = vsel %vm647, %v1447, 0
    %1452 = vmatprep.subr.mxu0 0.0
    %1453 = vmatpush1.xpose.msra.mxu0 %v1450
    %1454 = vmatprep.subr.mxu0 0.0
    %1455 = vmatpush1.xpose.msra.mxu0 0.0
    %1456 = vmatprep.subr.mxu0 0.0
    %1457 = vmatpush1.xpose.msra.mxu0 0.0
    %1458 = vmatprep.subr.mxu0 0.0
    %1459 = vmatpush1.xpose.msra.mxu0 0.0
    %1460 = vmatprep.subr.mxu0 0.0
    %1461 = vmatpush1.xpose.msra.mxu0 0.0
    %1462 = vmatprep.subr.mxu0 0.0
    %1463 = vmatpush1.xpose.msra.mxu0 0.0
    %1464 = vmatprep.subr.mxu0 0.0
    %1465 = vmatpush1.xpose.msra.mxu0 0.0
    %1466 = vmatprep.subr.mxu0 0.0
    %1467 = vmatpush1.xpose.msra.mxu0 0.0
    %1468 = vmatprep.subr.mxu0 0.0
    %1469 = vmatpush1.xpose.msra.mxu0 0.0
    %1470 = vmatprep.subr.mxu0 0.0
    %1471 = vmatpush1.xpose.msra.mxu0 0.0
    %1472 = vmatprep.subr.mxu0 0.0
    %1473 = vmatpush1.xpose.msra.mxu0 0.0
    %1474 = vmatprep.subr.mxu0 0.0
    %1475 = vmatpush1.xpose.msra.mxu0 0.0
    %1476 = vmatprep.subr.mxu0 0.0
    %1477 = vmatpush1.xpose.msra.mxu0 0.0
    %1478 = vmatprep.subr.mxu0 0.0
    %1479 = vmatpush1.xpose.msra.mxu0 0.0
    %1480 = vmatprep.subr.mxu0 0.0
    %1481 = vmatpush1.xpose.msra.mxu0 0.0
    %1482 = vmatprep.subr.mxu0 0.0
    %1483 = vmatpush1.xpose.msra.mxu0 0.0
    %1484 = vmatprep.subr.mxu0 0.0
    %1485 = vmatpush1.xpose.msra.mxu0 0.0
    %1486 = vmatprep.subr.mxu0 0.0
    %1487 = vmatpush1.xpose.msra.mxu0 0.0
    %1488 = vmatprep.subr.mxu0 0.0
    %1489 = vmatpush1.xpose.msra.mxu0 0.0
    %1490 = vmatprep.subr.mxu0 0.0
    %1491 = vmatpush1.xpose.msra.mxu0 0.0
    %1492 = vmatprep.subr.mxu0 0.0
    %1493 = vmatpush1.xpose.msra.mxu0 0.0
    %1494 = vmatprep.subr.mxu0 0.0
    %1495 = vmatpush1.xpose.msra.mxu0 0.0
    %1496 = vmatprep.subr.mxu0 0.0
    %1497 = vmatpush1.xpose.msra.mxu0 0.0
    %1498 = vmatprep.subr.mxu0 0.0
    %1499 = vmatpush1.xpose.msra.mxu0 0.0
    %1500 = vmatprep.subr.mxu0 0.0
    %1501 = vmatpush1.xpose.msra.mxu0 0.0
    %1502 = vmatprep.subr.mxu0 0.0
    %1503 = vmatpush1.xpose.msra.mxu0 0.0
    %1504 = vmatprep.subr.mxu0 0.0
    %1505 = vmatpush1.xpose.msra.mxu0 0.0
    %1506 = vmatprep.subr.mxu0 0.0
    %1507 = vmatpush1.xpose.msra.mxu0 0.0
    %1508 = vmatprep.subr.mxu0 0.0
    %1509 = vmatpush1.xpose.msra.mxu0 0.0
    %1510 = vmatprep.subr.mxu0 0.0
    %1511 = vmatpush1.xpose.msra.mxu0 0.0
    %1512 = vmatprep.subr.mxu0 0.0
    %1513 = vmatpush1.xpose.msra.mxu0 0.0
    %1514 = vmatprep.subr.mxu0 0.0
    %1515 = vmatpush1.xpose.msra.mxu0 0.0
    %1516 = vmatprep.mubr.f32.mxu0 0.0
    %1517 = vmatmul.mubr.f32.gmra.mrb[0].mxu0 %v1448
    %v1518 = vpop.f32.mrb[0].mxu0
    %v1519 = vadd.f32 0.0, %v1518
    %v1520 = vpop.f32.mrb[0].mxu0
    %1521 = vdwg.mxu0
    %1522 = vrot.lane.b32.xlu0 %v434, 120
    %v1523 = vpop.permute.xlu0 %1522
    %1524 = vrot.lane.b32.xlu0 %v539, 120
    %v1525 = vpop.permute.xlu0 %1524
    %v1526 = vsel %vm647, %v1523, 0
    %v1528 = vsel %vm647, %v1525, 0
    %1530 = vmatprep.subr.mxu0 0.0
    %1531 = vmatpush1.xpose.msra.mxu0 %v1528
    %1532 = vmatprep.subr.mxu0 0.0
    %1533 = vmatpush1.xpose.msra.mxu0 0.0
    %1534 = vmatprep.subr.mxu0 0.0
    %1535 = vmatpush1.xpose.msra.mxu0 0.0
    %1536 = vmatprep.subr.mxu0 0.0
    %1537 = vmatpush1.xpose.msra.mxu0 0.0
    %1538 = vmatprep.subr.mxu0 0.0
    %1539 = vmatpush1.xpose.msra.mxu0 0.0
    %1540 = vmatprep.subr.mxu0 0.0
    %1541 = vmatpush1.xpose.msra.mxu0 0.0
    %1542 = vmatprep.subr.mxu0 0.0
    %1543 = vmatpush1.xpose.msra.mxu0 0.0
    %1544 = vmatprep.subr.mxu0 0.0
    %1545 = vmatpush1.xpose.msra.mxu0 0.0
    %1546 = vmatprep.subr.mxu0 0.0
    %1547 = vmatpush1.xpose.msra.mxu0 0.0
    %1548 = vmatprep.subr.mxu0 0.0
    %1549 = vmatpush1.xpose.msra.mxu0 0.0
    %1550 = vmatprep.subr.mxu0 0.0
    %1551 = vmatpush1.xpose.msra.mxu0 0.0
    %1552 = vmatprep.subr.mxu0 0.0
    %1553 = vmatpush1.xpose.msra.mxu0 0.0
    %1554 = vmatprep.subr.mxu0 0.0
    %1555 = vmatpush1.xpose.msra.mxu0 0.0
    %1556 = vmatprep.subr.mxu0 0.0
    %1557 = vmatpush1.xpose.msra.mxu0 0.0
    %1558 = vmatprep.subr.mxu0 0.0
    %1559 = vmatpush1.xpose.msra.mxu0 0.0
    %1560 = vmatprep.subr.mxu0 0.0
    %1561 = vmatpush1.xpose.msra.mxu0 0.0
    %1562 = vmatprep.subr.mxu0 0.0
    %1563 = vmatpush1.xpose.msra.mxu0 0.0
    %1564 = vmatprep.subr.mxu0 0.0
    %1565 = vmatpush1.xpose.msra.mxu0 0.0
    %1566 = vmatprep.subr.mxu0 0.0
    %1567 = vmatpush1.xpose.msra.mxu0 0.0
    %1568 = vmatprep.subr.mxu0 0.0
    %1569 = vmatpush1.xpose.msra.mxu0 0.0
    %1570 = vmatprep.subr.mxu0 0.0
    %1571 = vmatpush1.xpose.msra.mxu0 0.0
    %1572 = vmatprep.subr.mxu0 0.0
    %1573 = vmatpush1.xpose.msra.mxu0 0.0
    %1574 = vmatprep.subr.mxu0 0.0
    %1575 = vmatpush1.xpose.msra.mxu0 0.0
    %1576 = vmatprep.subr.mxu0 0.0
    %1577 = vmatpush1.xpose.msra.mxu0 0.0
    %1578 = vmatprep.subr.mxu0 0.0
    %1579 = vmatpush1.xpose.msra.mxu0 0.0
    %1580 = vmatprep.subr.mxu0 0.0
    %1581 = vmatpush1.xpose.msra.mxu0 0.0
    %1582 = vmatprep.subr.mxu0 0.0
    %1583 = vmatpush1.xpose.msra.mxu0 0.0
    %1584 = vmatprep.subr.mxu0 0.0
    %1585 = vmatpush1.xpose.msra.mxu0 0.0
    %1586 = vmatprep.subr.mxu0 0.0
    %1587 = vmatpush1.xpose.msra.mxu0 0.0
    %1588 = vmatprep.subr.mxu0 0.0
    %1589 = vmatpush1.xpose.msra.mxu0 0.0
    %1590 = vmatprep.subr.mxu0 0.0
    %1591 = vmatpush1.xpose.msra.mxu0 0.0
    %1592 = vmatprep.subr.mxu0 0.0
    %1593 = vmatpush1.xpose.msra.mxu0 0.0
    %1594 = vmatprep.mubr.f32.mxu0 0.0
    %1595 = vmatmul.mubr.f32.gmra.mrb[0].mxu0 %v1526
    %v1596 = vpop.f32.mrb[0].mxu0
    %v1597 = vadd.f32 0.0, %v1596
    %v1598 = vpop.f32.mrb[0].mxu0
    %1599 = vdwg.mxu0
    %v1600 = vsel %vm647, %v1363, -inf
    %1601 = vmax.xlane.f32.xlu0 %v1600
    %v1602 = vpop.xlane.xlu0 %1601
    %v1603 = vsel %vm647, %v1441, -inf
    %1604 = vmax.xlane.f32.xlu0 %v1603
    %v1605 = vpop.xlane.xlu0 %1604
    %v1606 = vsel %vm647, %v1519, -inf
    %1607 = vmax.xlane.f32.xlu0 %v1606
    %v1608 = vpop.xlane.xlu0 %1607
    %v1609 = vsel %vm647, %v1597, -inf
    %1610 = vmax.xlane.f32.xlu0 %v1609
    %v1611 = vpop.xlane.xlu0 %1610
    %v1612 = vsub.f32 %v1363, %v1602
    %v1613 = vsub.f32 %v1441, %v1605
    %v1614 = vsub.f32 %v1519, %v1608
    %v1615 = vsub.f32 %v1597, %v1611
    %v1616 = vmul.f32 %v1612, 1.442695
    %v1617 = vpow.pop %v1616
    %v1618 = vmul.f32 %v1613, 1.442695
    %v1619 = vpow.pop %v1618
    %v1620 = vmul.f32 %v1614, 1.442695
    %v1621 = vpow.pop %v1620
    %v1622 = vmul.f32 %v1615, 1.442695
    %v1623 = vpow.pop %v1622
    %v1624 = vsel %vm647, %v1617, 0.0
    %1625 = vadd.xlane.f32.xlu0 %v1624
    %v1626 = vpop.xlane.xlu0 %1625
    %v1627 = vsel %vm647, %v1619, 0.0
    %1628 = vadd.xlane.f32.xlu0 %v1627
    %v1629 = vpop.xlane.xlu0 %1628
    %v1630 = vsel %vm647, %v1621, 0.0
    %1631 = vadd.xlane.f32.xlu0 %v1630
    %v1632 = vpop.xlane.xlu0 %1631
    %v1633 = vsel %vm647, %v1623, 0.0
    %1634 = vadd.xlane.f32.xlu0 %v1633
    %v1635 = vpop.xlane.xlu0 %1634
    %v1636 = vrcp.pop %v1626
    %v1637 = vrcp.pop %v1629
    %v1638 = vrcp.pop %v1632
    %v1639 = vrcp.pop %v1635
    %v1640 = vmul.f32 %v1617, %v1636
    %v1641 = vmul.f32 %v1619, %v1637
    %v1642 = vmul.f32 %v1621, %v1638
    %v1643 = vmul.f32 %v1623, %v1639
    %1645 = vrot.lane.b32.xlu0 %v629, 120
    %v1646 = vpop.permute.xlu0 %1645
    %v1649 = vsel %vm647, %v1640, 0
    %1651 = vmatprep.subr.mxu0 0.0
    %1652 = vmatpush1.msra.mxu0 %v1646
    %1653 = vmatprep.subr.mxu0 0.0
    %1654 = vmatpush1.msra.mxu0 0.0
    %1655 = vmatprep.subr.mxu0 0.0
    %1656 = vmatpush1.msra.mxu0 0.0
    %1657 = vmatprep.subr.mxu0 0.0
    %1658 = vmatpush1.msra.mxu0 0.0
    %1659 = vmatprep.subr.mxu0 0.0
    %1660 = vmatpush1.msra.mxu0 0.0
    %1661 = vmatprep.subr.mxu0 0.0
    %1662 = vmatpush1.msra.mxu0 0.0
    %1663 = vmatprep.subr.mxu0 0.0
    %1664 = vmatpush1.msra.mxu0 0.0
    %1665 = vmatprep.subr.mxu0 0.0
    %1666 = vmatpush1.msra.mxu0 0.0
    %1667 = vmatprep.subr.mxu0 0.0
    %1668 = vmatpush1.msra.mxu0 0.0
    %1669 = vmatprep.subr.mxu0 0.0
    %1670 = vmatpush1.msra.mxu0 0.0
    %1671 = vmatprep.subr.mxu0 0.0
    %1672 = vmatpush1.msra.mxu0 0.0
    %1673 = vmatprep.subr.mxu0 0.0
    %1674 = vmatpush1.msra.mxu0 0.0
    %1675 = vmatprep.subr.mxu0 0.0
    %1676 = vmatpush1.msra.mxu0 0.0
    %1677 = vmatprep.subr.mxu0 0.0
    %1678 = vmatpush1.msra.mxu0 0.0
    %1679 = vmatprep.subr.mxu0 0.0
    %1680 = vmatpush1.msra.mxu0 0.0
    %1681 = vmatprep.subr.mxu0 0.0
    %1682 = vmatpush1.msra.mxu0 0.0
    %1683 = vmatprep.subr.mxu0 0.0
    %1684 = vmatpush1.msra.mxu0 0.0
    %1685 = vmatprep.subr.mxu0 0.0
    %1686 = vmatpush1.msra.mxu0 0.0
    %1687 = vmatprep.subr.mxu0 0.0
    %1688 = vmatpush1.msra.mxu0 0.0
    %1689 = vmatprep.subr.mxu0 0.0
    %1690 = vmatpush1.msra.mxu0 0.0
    %1691 = vmatprep.subr.mxu0 0.0
    %1692 = vmatpush1.msra.mxu0 0.0
    %1693 = vmatprep.subr.mxu0 0.0
    %1694 = vmatpush1.msra.mxu0 0.0
    %1695 = vmatprep.subr.mxu0 0.0
    %1696 = vmatpush1.msra.mxu0 0.0
    %1697 = vmatprep.subr.mxu0 0.0
    %1698 = vmatpush1.msra.mxu0 0.0
    %1699 = vmatprep.subr.mxu0 0.0
    %1700 = vmatpush1.msra.mxu0 0.0
    %1701 = vmatprep.subr.mxu0 0.0
    %1702 = vmatpush1.msra.mxu0 0.0
    %1703 = vmatprep.subr.mxu0 0.0
    %1704 = vmatpush1.msra.mxu0 0.0
    %1705 = vmatprep.subr.mxu0 0.0
    %1706 = vmatpush1.msra.mxu0 0.0
    %1707 = vmatprep.subr.mxu0 0.0
    %1708 = vmatpush1.msra.mxu0 0.0
    %1709 = vmatprep.subr.mxu0 0.0
    %1710 = vmatpush1.msra.mxu0 0.0
    %1711 = vmatprep.subr.mxu0 0.0
    %1712 = vmatpush1.msra.mxu0 0.0
    %1713 = vmatprep.subr.mxu0 0.0
    %1714 = vmatpush1.msra.mxu0 0.0
    %1715 = vmatprep.mubr.f32.mxu0 0.0
    %1716 = vmatmul.mubr.f32.gmra.mrb[0].mxu0 %v1649
    %v1717 = vpop.f32.mrb[0].mxu0
    %v1718 = vadd.f32 0.0, %v1717
    %v1719 = vpop.f32.mrb[0].mxu0
    %1720 = vdwg.mxu0
    %1722 = vrot.lane.b32.xlu0 %v634, 120
    %v1723 = vpop.permute.xlu0 %1722
    %v1726 = vsel %vm647, %v1641, 0
    %1728 = vmatprep.subr.mxu0 0.0
    %1729 = vmatpush1.msra.mxu0 %v1723
    %1730 = vmatprep.subr.mxu0 0.0
    %1731 = vmatpush1.msra.mxu0 0.0
    %1732 = vmatprep.subr.mxu0 0.0
    %1733 = vmatpush1.msra.mxu0 0.0
    %1734 = vmatprep.subr.mxu0 0.0
    %1735 = vmatpush1.msra.mxu0 0.0
    %1736 = vmatprep.subr.mxu0 0.0
    %1737 = vmatpush1.msra.mxu0 0.0
    %1738 = vmatprep.subr.mxu0 0.0
    %1739 = vmatpush1.msra.mxu0 0.0
    %1740 = vmatprep.subr.mxu0 0.0
    %1741 = vmatpush1.msra.mxu0 0.0
    %1742 = vmatprep.subr.mxu0 0.0
    %1743 = vmatpush1.msra.mxu0 0.0
    %1744 = vmatprep.subr.mxu0 0.0
    %1745 = vmatpush1.msra.mxu0 0.0
    %1746 = vmatprep.subr.mxu0 0.0
    %1747 = vmatpush1.msra.mxu0 0.0
    %1748 = vmatprep.subr.mxu0 0.0
    %1749 = vmatpush1.msra.mxu0 0.0
    %1750 = vmatprep.subr.mxu0 0.0
    %1751 = vmatpush1.msra.mxu0 0.0
    %1752 = vmatprep.subr.mxu0 0.0
    %1753 = vmatpush1.msra.mxu0 0.0
    %1754 = vmatprep.subr.mxu0 0.0
    %1755 = vmatpush1.msra.mxu0 0.0
    %1756 = vmatprep.subr.mxu0 0.0
    %1757 = vmatpush1.msra.mxu0 0.0
    %1758 = vmatprep.subr.mxu0 0.0
    %1759 = vmatpush1.msra.mxu0 0.0
    %1760 = vmatprep.subr.mxu0 0.0
    %1761 = vmatpush1.msra.mxu0 0.0
    %1762 = vmatprep.subr.mxu0 0.0
    %1763 = vmatpush1.msra.mxu0 0.0
    %1764 = vmatprep.subr.mxu0 0.0
    %1765 = vmatpush1.msra.mxu0 0.0
    %1766 = vmatprep.subr.mxu0 0.0
    %1767 = vmatpush1.msra.mxu0 0.0
    %1768 = vmatprep.subr.mxu0 0.0
    %1769 = vmatpush1.msra.mxu0 0.0
    %1770 = vmatprep.subr.mxu0 0.0
    %1771 = vmatpush1.msra.mxu0 0.0
    %1772 = vmatprep.subr.mxu0 0.0
    %1773 = vmatpush1.msra.mxu0 0.0
    %1774 = vmatprep.subr.mxu0 0.0
    %1775 = vmatpush1.msra.mxu0 0.0
    %1776 = vmatprep.subr.mxu0 0.0
    %1777 = vmatpush1.msra.mxu0 0.0
    %1778 = vmatprep.subr.mxu0 0.0
    %1779 = vmatpush1.msra.mxu0 0.0
    %1780 = vmatprep.subr.mxu0 0.0
    %1781 = vmatpush1.msra.mxu0 0.0
    %1782 = vmatprep.subr.mxu0 0.0
    %1783 = vmatpush1.msra.mxu0 0.0
    %1784 = vmatprep.subr.mxu0 0.0
    %1785 = vmatpush1.msra.mxu0 0.0
    %1786 = vmatprep.subr.mxu0 0.0
    %1787 = vmatpush1.msra.mxu0 0.0
    %1788 = vmatprep.subr.mxu0 0.0
    %1789 = vmatpush1.msra.mxu0 0.0
    %1790 = vmatprep.subr.mxu0 0.0
    %1791 = vmatpush1.msra.mxu0 0.0
    %1792 = vmatprep.mubr.f32.mxu0 0.0
    %1793 = vmatmul.mubr.f32.gmra.mrb[0].mxu0 %v1726
    %v1794 = vpop.f32.mrb[0].mxu0
    %v1795 = vadd.f32 0.0, %v1794
    %v1796 = vpop.f32.mrb[0].mxu0
    %1797 = vdwg.mxu0
    %1799 = vrot.lane.b32.xlu0 %v639, 120
    %v1800 = vpop.permute.xlu0 %1799
    %v1803 = vsel %vm647, %v1642, 0
    %1805 = vmatprep.subr.mxu0 0.0
    %1806 = vmatpush1.msra.mxu0 %v1800
    %1807 = vmatprep.subr.mxu0 0.0
    %1808 = vmatpush1.msra.mxu0 0.0
    %1809 = vmatprep.subr.mxu0 0.0
    %1810 = vmatpush1.msra.mxu0 0.0
    %1811 = vmatprep.subr.mxu0 0.0
    %1812 = vmatpush1.msra.mxu0 0.0
    %1813 = vmatprep.subr.mxu0 0.0
    %1814 = vmatpush1.msra.mxu0 0.0
    %1815 = vmatprep.subr.mxu0 0.0
    %1816 = vmatpush1.msra.mxu0 0.0
    %1817 = vmatprep.subr.mxu0 0.0
    %1818 = vmatpush1.msra.mxu0 0.0
    %1819 = vmatprep.subr.mxu0 0.0
    %1820 = vmatpush1.msra.mxu0 0.0
    %1821 = vmatprep.subr.mxu0 0.0
    %1822 = vmatpush1.msra.mxu0 0.0
    %1823 = vmatprep.subr.mxu0 0.0
    %1824 = vmatpush1.msra.mxu0 0.0
    %1825 = vmatprep.subr.mxu0 0.0
    %1826 = vmatpush1.msra.mxu0 0.0
    %1827 = vmatprep.subr.mxu0 0.0
    %1828 = vmatpush1.msra.mxu0 0.0
    %1829 = vmatprep.subr.mxu0 0.0
    %1830 = vmatpush1.msra.mxu0 0.0
    %1831 = vmatprep.subr.mxu0 0.0
    %1832 = vmatpush1.msra.mxu0 0.0
    %1833 = vmatprep.subr.mxu0 0.0
    %1834 = vmatpush1.msra.mxu0 0.0
    %1835 = vmatprep.subr.mxu0 0.0
    %1836 = vmatpush1.msra.mxu0 0.0
    %1837 = vmatprep.subr.mxu0 0.0
    %1838 = vmatpush1.msra.mxu0 0.0
    %1839 = vmatprep.subr.mxu0 0.0
    %1840 = vmatpush1.msra.mxu0 0.0
    %1841 = vmatprep.subr.mxu0 0.0
    %1842 = vmatpush1.msra.mxu0 0.0
    %1843 = vmatprep.subr.mxu0 0.0
    %1844 = vmatpush1.msra.mxu0 0.0
    %1845 = vmatprep.subr.mxu0 0.0
    %1846 = vmatpush1.msra.mxu0 0.0
    %1847 = vmatprep.subr.mxu0 0.0
    %1848 = vmatpush1.msra.mxu0 0.0
    %1849 = vmatprep.subr.mxu0 0.0
    %1850 = vmatpush1.msra.mxu0 0.0
    %1851 = vmatprep.subr.mxu0 0.0
    %1852 = vmatpush1.msra.mxu0 0.0
    %1853 = vmatprep.subr.mxu0 0.0
    %1854 = vmatpush1.msra.mxu0 0.0
    %1855 = vmatprep.subr.mxu0 0.0
    %1856 = vmatpush1.msra.mxu0 0.0
    %1857 = vmatprep.subr.mxu0 0.0
    %1858 = vmatpush1.msra.mxu0 0.0
    %1859 = vmatprep.subr.mxu0 0.0
    %1860 = vmatpush1.msra.mxu0 0.0
    %1861 = vmatprep.subr.mxu0 0.0
    %1862 = vmatpush1.msra.mxu0 0.0
    %1863 = vmatprep.subr.mxu0 0.0
    %1864 = vmatpush1.msra.mxu0 0.0
    %1865 = vmatprep.subr.mxu0 0.0
    %1866 = vmatpush1.msra.mxu0 0.0
    %1867 = vmatprep.subr.mxu0 0.0
    %1868 = vmatpush1.msra.mxu0 0.0
    %1869 = vmatprep.mubr.f32.mxu0 0.0
    %1870 = vmatmul.mubr.f32.gmra.mrb[0].mxu0 %v1803
    %v1871 = vpop.f32.mrb[0].mxu0
    %v1872 = vadd.f32 0.0, %v1871
    %v1873 = vpop.f32.mrb[0].mxu0
    %1874 = vdwg.mxu0
    %1876 = vrot.lane.b32.xlu0 %v644, 120
    %v1877 = vpop.permute.xlu0 %1876
    %v1880 = vsel %vm647, %v1643, 0
    %1882 = vmatprep.subr.mxu0 0.0
    %1883 = vmatpush1.msra.mxu0 %v1877
    %1884 = vmatprep.subr.mxu0 0.0
    %1885 = vmatpush1.msra.mxu0 0.0
    %1886 = vmatprep.subr.mxu0 0.0
    %1887 = vmatpush1.msra.mxu0 0.0
    %1888 = vmatprep.subr.mxu0 0.0
    %1889 = vmatpush1.msra.mxu0 0.0
    %1890 = vmatprep.subr.mxu0 0.0
    %1891 = vmatpush1.msra.mxu0 0.0
    %1892 = vmatprep.subr.mxu0 0.0
    %1893 = vmatpush1.msra.mxu0 0.0
    %1894 = vmatprep.subr.mxu0 0.0
    %1895 = vmatpush1.msra.mxu0 0.0
    %1896 = vmatprep.subr.mxu0 0.0
    %1897 = vmatpush1.msra.mxu0 0.0
    %1898 = vmatprep.subr.mxu0 0.0
    %1899 = vmatpush1.msra.mxu0 0.0
    %1900 = vmatprep.subr.mxu0 0.0
    %1901 = vmatpush1.msra.mxu0 0.0
    %1902 = vmatprep.subr.mxu0 0.0
    %1903 = vmatpush1.msra.mxu0 0.0
    %1904 = vmatprep.subr.mxu0 0.0
    %1905 = vmatpush1.msra.mxu0 0.0
    %1906 = vmatprep.subr.mxu0 0.0
    %1907 = vmatpush1.msra.mxu0 0.0
    %1908 = vmatprep.subr.mxu0 0.0
    %1909 = vmatpush1.msra.mxu0 0.0
    %1910 = vmatprep.subr.mxu0 0.0
    %1911 = vmatpush1.msra.mxu0 0.0
    %1912 = vmatprep.subr.mxu0 0.0
    %1913 = vmatpush1.msra.mxu0 0.0
    %1914 = vmatprep.subr.mxu0 0.0
    %1915 = vmatpush1.msra.mxu0 0.0
    %1916 = vmatprep.subr.mxu0 0.0
    %1917 = vmatpush1.msra.mxu0 0.0
    %1918 = vmatprep.subr.mxu0 0.0
    %1919 = vmatpush1.msra.mxu0 0.0
    %1920 = vmatprep.subr.mxu0 0.0
    %1921 = vmatpush1.msra.mxu0 0.0
    %1922 = vmatprep.subr.mxu0 0.0
    %1923 = vmatpush1.msra.mxu0 0.0
    %1924 = vmatprep.subr.mxu0 0.0
    %1925 = vmatpush1.msra.mxu0 0.0
    %1926 = vmatprep.subr.mxu0 0.0
    %1927 = vmatpush1.msra.mxu0 0.0
    %1928 = vmatprep.subr.mxu0 0.0
    %1929 = vmatpush1.msra.mxu0 0.0
    %1930 = vmatprep.subr.mxu0 0.0
    %1931 = vmatpush1.msra.mxu0 0.0
    %1932 = vmatprep.subr.mxu0 0.0
    %1933 = vmatpush1.msra.mxu0 0.0
    %1934 = vmatprep.subr.mxu0 0.0
    %1935 = vmatpush1.msra.mxu0 0.0
    %1936 = vmatprep.subr.mxu0 0.0
    %1937 = vmatpush1.msra.mxu0 0.0
    %1938 = vmatprep.subr.mxu0 0.0
    %1939 = vmatpush1.msra.mxu0 0.0
    %1940 = vmatprep.subr.mxu0 0.0
    %1941 = vmatpush1.msra.mxu0 0.0
    %1942 = vmatprep.subr.mxu0 0.0
    %1943 = vmatpush1.msra.mxu0 0.0
    %1944 = vmatprep.subr.mxu0 0.0
    %1945 = vmatpush1.msra.mxu0 0.0
    %1946 = vmatprep.mubr.f32.mxu0 0.0
    %1947 = vmatmul.mubr.f32.gmra.mrb[0].mxu0 %v1880
    %v1948 = vpop.f32.mrb[0].mxu0
    %v1949 = vadd.f32 0.0, %v1948
    %v1950 = vpop.f32.mrb[0].mxu0
    %1951 = vdwg.mxu0
    %1952 = vrot.lane.b32.xlu0 %v419, 112
    %v1953 = vpop.permute.xlu0 %1952
    %1954 = vrot.lane.b32.xlu0 %v524, 112
    %v1955 = vpop.permute.xlu0 %1954
    %v1956 = vsel %vm647, %v1953, 0
    %v1958 = vsel %vm647, %v1955, 0
    %1960 = vmatprep.subr.mxu0 0.0
    %1961 = vmatpush1.xpose.msra.mxu0 %v1958
    %1962 = vmatprep.subr.mxu0 0.0
    %1963 = vmatpush1.xpose.msra.mxu0 0.0
    %1964 = vmatprep.subr.mxu0 0.0
    %1965 = vmatpush1.xpose.msra.mxu0 0.0
    %1966 = vmatprep.subr.mxu0 0.0
    %1967 = vmatpush1.xpose.msra.mxu0 0.0
    %1968 = vmatprep.subr.mxu0 0.0
    %1969 = vmatpush1.xpose.msra.mxu0 0.0
    %1970 = vmatprep.subr.mxu0 0.0
    %1971 = vmatpush1.xpose.msra.mxu0 0.0
    %1972 = vmatprep.subr.mxu0 0.0
    %1973 = vmatpush1.xpose.msra.mxu0 0.0
    %1974 = vmatprep.subr.mxu0 0.0
    %1975 = vmatpush1.xpose.msra.mxu0 0.0
    %1976 = vmatprep.subr.mxu0 0.0
    %1977 = vmatpush1.xpose.msra.mxu0 0.0
    %1978 = vmatprep.subr.mxu0 0.0
    %1979 = vmatpush1.xpose.msra.mxu0 0.0
    %1980 = vmatprep.subr.mxu0 0.0
    %1981 = vmatpush1.xpose.msra.mxu0 0.0
    %1982 = vmatprep.subr.mxu0 0.0
    %1983 = vmatpush1.xpose.msra.mxu0 0.0
    %1984 = vmatprep.subr.mxu0 0.0
    %1985 = vmatpush1.xpose.msra.mxu0 0.0
    %1986 = vmatprep.subr.mxu0 0.0
    %1987 = vmatpush1.xpose.msra.mxu0 0.0
    %1988 = vmatprep.subr.mxu0 0.0
    %1989 = vmatpush1.xpose.msra.mxu0 0.0
    %1990 = vmatprep.subr.mxu0 0.0
    %1991 = vmatpush1.xpose.msra.mxu0 0.0
    %1992 = vmatprep.subr.mxu0 0.0
    %1993 = vmatpush1.xpose.msra.mxu0 0.0
    %1994 = vmatprep.subr.mxu0 0.0
    %1995 = vmatpush1.xpose.msra.mxu0 0.0
    %1996 = vmatprep.subr.mxu0 0.0
    %1997 = vmatpush1.xpose.msra.mxu0 0.0
    %1998 = vmatprep.subr.mxu0 0.0
    %1999 = vmatpush1.xpose.msra.mxu0 0.0
    %2000 = vmatprep.subr.mxu0 0.0
    %2001 = vmatpush1.xpose.msra.mxu0 0.0
    %2002 = vmatprep.subr.mxu0 0.0
    %2003 = vmatpush1.xpose.msra.mxu0 0.0
    %2004 = vmatprep.subr.mxu0 0.0
    %2005 = vmatpush1.xpose.msra.mxu0 0.0
    %2006 = vmatprep.subr.mxu0 0.0
    %2007 = vmatpush1.xpose.msra.mxu0 0.0
    %2008 = vmatprep.subr.mxu0 0.0
    %2009 = vmatpush1.xpose.msra.mxu0 0.0
    %2010 = vmatprep.subr.mxu0 0.0
    %2011 = vmatpush1.xpose.msra.mxu0 0.0
    %2012 = vmatprep.subr.mxu0 0.0
    %2013 = vmatpush1.xpose.msra.mxu0 0.0
    %2014 = vmatprep.subr.mxu0 0.0
    %2015 = vmatpush1.xpose.msra.mxu0 0.0
    %2016 = vmatprep.subr.mxu0 0.0
    %2017 = vmatpush1.xpose.msra.mxu0 0.0
    %2018 = vmatprep.subr.mxu0 0.0
    %2019 = vmatpush1.xpose.msra.mxu0 0.0
    %2020 = vmatprep.subr.mxu0 0.0
    %2021 = vmatpush1.xpose.msra.mxu0 0.0
    %2022 = vmatprep.subr.mxu0 0.0
    %2023 = vmatpush1.xpose.msra.mxu0 0.0
    %2024 = vmatprep.mubr.f32.mxu0 0.0
    %2025 = vmatmul.mubr.f32.gmra.mrb[0].mxu0 %v1956
    %v2026 = vpop.f32.mrb[0].mxu0
    %v2027 = vadd.f32 0.0, %v2026
    %v2028 = vpop.f32.mrb[0].mxu0
    %2029 = vdwg.mxu0
    %2030 = vrot.lane.b32.xlu0 %v424, 112
    %v2031 = vpop.permute.xlu0 %2030
    %2032 = vrot.lane.b32.xlu0 %v529, 112
    %v2033 = vpop.permute.xlu0 %2032
    %v2034 = vsel %vm647, %v2031, 0
    %v2036 = vsel %vm647, %v2033, 0
    %2038 = vmatprep.subr.mxu0 0.0
    %2039 = vmatpush1.xpose.msra.mxu0 %v2036
    %2040 = vmatprep.subr.mxu0 0.0
    %2041 = vmatpush1.xpose.msra.mxu0 0.0
    %2042 = vmatprep.subr.mxu0 0.0
    %2043 = vmatpush1.xpose.msra.mxu0 0.0
    %2044 = vmatprep.subr.mxu0 0.0
    %2045 = vmatpush1.xpose.msra.mxu0 0.0
    %2046 = vmatprep.subr.mxu0 0.0
    %2047 = vmatpush1.xpose.msra.mxu0 0.0
    %2048 = vmatprep.subr.mxu0 0.0
    %2049 = vmatpush1.xpose.msra.mxu0 0.0
    %2050 = vmatprep.subr.mxu0 0.0
    %2051 = vmatpush1.xpose.msra.mxu0 0.0
    %2052 = vmatprep.subr.mxu0 0.0
    %2053 = vmatpush1.xpose.msra.mxu0 0.0
    %2054 = vmatprep.subr.mxu0 0.0
    %2055 = vmatpush1.xpose.msra.mxu0 0.0
    %2056 = vmatprep.subr.mxu0 0.0
    %2057 = vmatpush1.xpose.msra.mxu0 0.0
    %2058 = vmatprep.subr.mxu0 0.0
    %2059 = vmatpush1.xpose.msra.mxu0 0.0
    %2060 = vmatprep.subr.mxu0 0.0
    %2061 = vmatpush1.xpose.msra.mxu0 0.0
    %2062 = vmatprep.subr.mxu0 0.0
    %2063 = vmatpush1.xpose.msra.mxu0 0.0
    %2064 = vmatprep.subr.mxu0 0.0
    %2065 = vmatpush1.xpose.msra.mxu0 0.0
    %2066 = vmatprep.subr.mxu0 0.0
    %2067 = vmatpush1.xpose.msra.mxu0 0.0
    %2068 = vmatprep.subr.mxu0 0.0
    %2069 = vmatpush1.xpose.msra.mxu0 0.0
    %2070 = vmatprep.subr.mxu0 0.0
    %2071 = vmatpush1.xpose.msra.mxu0 0.0
    %2072 = vmatprep.subr.mxu0 0.0
    %2073 = vmatpush1.xpose.msra.mxu0 0.0
    %2074 = vmatprep.subr.mxu0 0.0
    %2075 = vmatpush1.xpose.msra.mxu0 0.0
    %2076 = vmatprep.subr.mxu0 0.0
    %2077 = vmatpush1.xpose.msra.mxu0 0.0
    %2078 = vmatprep.subr.mxu0 0.0
    %2079 = vmatpush1.xpose.msra.mxu0 0.0
    %2080 = vmatprep.subr.mxu0 0.0
    %2081 = vmatpush1.xpose.msra.mxu0 0.0
    %2082 = vmatprep.subr.mxu0 0.0
    %2083 = vmatpush1.xpose.msra.mxu0 0.0
    %2084 = vmatprep.subr.mxu0 0.0
    %2085 = vmatpush1.xpose.msra.mxu0 0.0
    %2086 = vmatprep.subr.mxu0 0.0
    %2087 = vmatpush1.xpose.msra.mxu0 0.0
    %2088 = vmatprep.subr.mxu0 0.0
    %2089 = vmatpush1.xpose.msra.mxu0 0.0
    %2090 = vmatprep.subr.mxu0 0.0
    %2091 = vmatpush1.xpose.msra.mxu0 0.0
    %2092 = vmatprep.subr.mxu0 0.0
    %2093 = vmatpush1.xpose.msra.mxu0 0.0
    %2094 = vmatprep.subr.mxu0 0.0
    %2095 = vmatpush1.xpose.msra.mxu0 0.0
    %2096 = vmatprep.subr.mxu0 0.0
    %2097 = vmatpush1.xpose.msra.mxu0 0.0
    %2098 = vmatprep.subr.mxu0 0.0
    %2099 = vmatpush1.xpose.msra.mxu0 0.0
    %2100 = vmatprep.subr.mxu0 0.0
    %2101 = vmatpush1.xpose.msra.mxu0 0.0
    %2102 = vmatprep.mubr.f32.mxu0 0.0
    %2103 = vmatmul.mubr.f32.gmra.mrb[0].mxu0 %v2034
    %v2104 = vpop.f32.mrb[0].mxu0
    %v2105 = vadd.f32 0.0, %v2104
    %v2106 = vpop.f32.mrb[0].mxu0
    %2107 = vdwg.mxu0
    %2108 = vrot.lane.b32.xlu0 %v429, 112
    %v2109 = vpop.permute.xlu0 %2108
    %2110 = vrot.lane.b32.xlu0 %v534, 112
    %v2111 = vpop.permute.xlu0 %2110
    %v2112 = vsel %vm647, %v2109, 0
    %v2114 = vsel %vm647, %v2111, 0
    %2116 = vmatprep.subr.mxu0 0.0
    %2117 = vmatpush1.xpose.msra.mxu0 %v2114
    %2118 = vmatprep.subr.mxu0 0.0
    %2119 = vmatpush1.xpose.msra.mxu0 0.0
    %2120 = vmatprep.subr.mxu0 0.0
    %2121 = vmatpush1.xpose.msra.mxu0 0.0
    %2122 = vmatprep.subr.mxu0 0.0
    %2123 = vmatpush1.xpose.msra.mxu0 0.0
    %2124 = vmatprep.subr.mxu0 0.0
    %2125 = vmatpush1.xpose.msra.mxu0 0.0
    %2126 = vmatprep.subr.mxu0 0.0
    %2127 = vmatpush1.xpose.msra.mxu0 0.0
    %2128 = vmatprep.subr.mxu0 0.0
    %2129 = vmatpush1.xpose.msra.mxu0 0.0
    %2130 = vmatprep.subr.mxu0 0.0
    %2131 = vmatpush1.xpose.msra.mxu0 0.0
    %2132 = vmatprep.subr.mxu0 0.0
    %2133 = vmatpush1.xpose.msra.mxu0 0.0
    %2134 = vmatprep.subr.mxu0 0.0
    %2135 = vmatpush1.xpose.msra.mxu0 0.0
    %2136 = vmatprep.subr.mxu0 0.0
    %2137 = vmatpush1.xpose.msra.mxu0 0.0
    %2138 = vmatprep.subr.mxu0 0.0
    %2139 = vmatpush1.xpose.msra.mxu0 0.0
    %2140 = vmatprep.subr.mxu0 0.0
    %2141 = vmatpush1.xpose.msra.mxu0 0.0
    %2142 = vmatprep.subr.mxu0 0.0
    %2143 = vmatpush1.xpose.msra.mxu0 0.0
    %2144 = vmatprep.subr.mxu0 0.0
    %2145 = vmatpush1.xpose.msra.mxu0 0.0
    %2146 = vmatprep.subr.mxu0 0.0
    %2147 = vmatpush1.xpose.msra.mxu0 0.0
    %2148 = vmatprep.subr.mxu0 0.0
    %2149 = vmatpush1.xpose.msra.mxu0 0.0
    %2150 = vmatprep.subr.mxu0 0.0
    %2151 = vmatpush1.xpose.msra.mxu0 0.0
    %2152 = vmatprep.subr.mxu0 0.0
    %2153 = vmatpush1.xpose.msra.mxu0 0.0
    %2154 = vmatprep.subr.mxu0 0.0
    %2155 = vmatpush1.xpose.msra.mxu0 0.0
    %2156 = vmatprep.subr.mxu0 0.0
    %2157 = vmatpush1.xpose.msra.mxu0 0.0
    %2158 = vmatprep.subr.mxu0 0.0
    %2159 = vmatpush1.xpose.msra.mxu0 0.0
    %2160 = vmatprep.subr.mxu0 0.0
    %2161 = vmatpush1.xpose.msra.mxu0 0.0
    %2162 = vmatprep.subr.mxu0 0.0
    %2163 = vmatpush1.xpose.msra.mxu0 0.0
    %2164 = vmatprep.subr.mxu0 0.0
    %2165 = vmatpush1.xpose.msra.mxu0 0.0
    %2166 = vmatprep.subr.mxu0 0.0
    %2167 = vmatpush1.xpose.msra.mxu0 0.0
    %2168 = vmatprep.subr.mxu0 0.0
    %2169 = vmatpush1.xpose.msra.mxu0 0.0
    %2170 = vmatprep.subr.mxu0 0.0
    %2171 = vmatpush1.xpose.msra.mxu0 0.0
    %2172 = vmatprep.subr.mxu0 0.0
    %2173 = vmatpush1.xpose.msra.mxu0 0.0
    %2174 = vmatprep.subr.mxu0 0.0
    %2175 = vmatpush1.xpose.msra.mxu0 0.0
    %2176 = vmatprep.subr.mxu0 0.0
    %2177 = vmatpush1.xpose.msra.mxu0 0.0
    %2178 = vmatprep.subr.mxu0 0.0
    %2179 = vmatpush1.xpose.msra.mxu0 0.0
    %2180 = vmatprep.mubr.f32.mxu0 0.0
    %2181 = vmatmul.mubr.f32.gmra.mrb[0].mxu0 %v2112
    %v2182 = vpop.f32.mrb[0].mxu0
    %v2183 = vadd.f32 0.0, %v2182
    %v2184 = vpop.f32.mrb[0].mxu0
    %2185 = vdwg.mxu0
    %2186 = vrot.lane.b32.xlu0 %v434, 112
    %v2187 = vpop.permute.xlu0 %2186
    %2188 = vrot.lane.b32.xlu0 %v539, 112
    %v2189 = vpop.permute.xlu0 %2188
    %v2190 = vsel %vm647, %v2187, 0
    %v2192 = vsel %vm647, %v2189, 0
    %2194 = vmatprep.subr.mxu0 0.0
    %2195 = vmatpush1.xpose.msra.mxu0 %v2192
    %2196 = vmatprep.subr.mxu0 0.0
    %2197 = vmatpush1.xpose.msra.mxu0 0.0
    %2198 = vmatprep.subr.mxu0 0.0
    %2199 = vmatpush1.xpose.msra.mxu0 0.0
    %2200 = vmatprep.subr.mxu0 0.0
    %2201 = vmatpush1.xpose.msra.mxu0 0.0
    %2202 = vmatprep.subr.mxu0 0.0
    %2203 = vmatpush1.xpose.msra.mxu0 0.0
    %2204 = vmatprep.subr.mxu0 0.0
    %2205 = vmatpush1.xpose.msra.mxu0 0.0
    %2206 = vmatprep.subr.mxu0 0.0
    %2207 = vmatpush1.xpose.msra.mxu0 0.0
    %2208 = vmatprep.subr.mxu0 0.0
    %2209 = vmatpush1.xpose.msra.mxu0 0.0
    %2210 = vmatprep.subr.mxu0 0.0
    %2211 = vmatpush1.xpose.msra.mxu0 0.0
    %2212 = vmatprep.subr.mxu0 0.0
    %2213 = vmatpush1.xpose.msra.mxu0 0.0
    %2214 = vmatprep.subr.mxu0 0.0
    %2215 = vmatpush1.xpose.msra.mxu0 0.0
    %2216 = vmatprep.subr.mxu0 0.0
    %2217 = vmatpush1.xpose.msra.mxu0 0.0
    %2218 = vmatprep.subr.mxu0 0.0
    %2219 = vmatpush1.xpose.msra.mxu0 0.0
    %2220 = vmatprep.subr.mxu0 0.0
    %2221 = vmatpush1.xpose.msra.mxu0 0.0
    %2222 = vmatprep.subr.mxu0 0.0
    %2223 = vmatpush1.xpose.msra.mxu0 0.0
    %2224 = vmatprep.subr.mxu0 0.0
    %2225 = vmatpush1.xpose.msra.mxu0 0.0
    %2226 = vmatprep.subr.mxu0 0.0
    %2227 = vmatpush1.xpose.msra.mxu0 0.0
    %2228 = vmatprep.subr.mxu0 0.0
    %2229 = vmatpush1.xpose.msra.mxu0 0.0
    %2230 = vmatprep.subr.mxu0 0.0
    %2231 = vmatpush1.xpose.msra.mxu0 0.0
    %2232 = vmatprep.subr.mxu0 0.0
    %2233 = vmatpush1.xpose.msra.mxu0 0.0
    %2234 = vmatprep.subr.mxu0 0.0
    %2235 = vmatpush1.xpose.msra.mxu0 0.0
    %2236 = vmatprep.subr.mxu0 0.0
    %2237 = vmatpush1.xpose.msra.mxu0 0.0
    %2238 = vmatprep.subr.mxu0 0.0
    %2239 = vmatpush1.xpose.msra.mxu0 0.0
    %2240 = vmatprep.subr.mxu0 0.0
    %2241 = vmatpush1.xpose.msra.mxu0 0.0
    %2242 = vmatprep.subr.mxu0 0.0
    %2243 = vmatpush1.xpose.msra.mxu0 0.0
    %2244 = vmatprep.subr.mxu0 0.0
    %2245 = vmatpush1.xpose.msra.mxu0 0.0
    %2246 = vmatprep.subr.mxu0 0.0
    %2247 = vmatpush1.xpose.msra.mxu0 0.0
    %2248 = vmatprep.subr.mxu0 0.0
    %2249 = vmatpush1.xpose.msra.mxu0 0.0
    %2250 = vmatprep.subr.mxu0 0.0
    %2251 = vmatpush1.xpose.msra.mxu0 0.0
    %2252 = vmatprep.subr.mxu0 0.0
    %2253 = vmatpush1.xpose.msra.mxu0 0.0
    %2254 = vmatprep.subr.mxu0 0.0
    %2255 = vmatpush1.xpose.msra.mxu0 0.0
    %2256 = vmatprep.subr.mxu0 0.0
    %2257 = vmatpush1.xpose.msra.mxu0 0.0
    %2258 = vmatprep.mubr.f32.mxu0 0.0
    %2259 = vmatmul.mubr.f32.gmra.mrb[0].mxu0 %v2190
    %v2260 = vpop.f32.mrb[0].mxu0
    %v2261 = vadd.f32 0.0, %v2260
    %v2262 = vpop.f32.mrb[0].mxu0
    %2263 = vdwg.mxu0
    %v2264 = vsel %vm647, %v2027, -inf
    %2265 = vmax.xlane.f32.xlu0 %v2264
    %v2266 = vpop.xlane.xlu0 %2265
    %v2267 = vsel %vm647, %v2105, -inf
    %2268 = vmax.xlane.f32.xlu0 %v2267
    %v2269 = vpop.xlane.xlu0 %2268
    %v2270 = vsel %vm647, %v2183, -inf
    %2271 = vmax.xlane.f32.xlu0 %v2270
    %v2272 = vpop.xlane.xlu0 %2271
    %v2273 = vsel %vm647, %v2261, -inf
    %2274 = vmax.xlane.f32.xlu0 %v2273
    %v2275 = vpop.xlane.xlu0 %2274
    %v2276 = vsub.f32 %v2027, %v2266
    %v2277 = vsub.f32 %v2105, %v2269
    %v2278 = vsub.f32 %v2183, %v2272
    %v2279 = vsub.f32 %v2261, %v2275
    %v2280 = vmul.f32 %v2276, 1.442695
    %v2281 = vpow.pop %v2280
    %v2282 = vmul.f32 %v2277, 1.442695
    %v2283 = vpow.pop %v2282
    %v2284 = vmul.f32 %v2278, 1.442695
    %v2285 = vpow.pop %v2284
    %v2286 = vmul.f32 %v2279, 1.442695
    %v2287 = vpow.pop %v2286
    %v2288 = vsel %vm647, %v2281, 0.0
    %2289 = vadd.xlane.f32.xlu0 %v2288
    %v2290 = vpop.xlane.xlu0 %2289
    %v2291 = vsel %vm647, %v2283, 0.0
    %2292 = vadd.xlane.f32.xlu0 %v2291
    %v2293 = vpop.xlane.xlu0 %2292
    %v2294 = vsel %vm647, %v2285, 0.0
    %2295 = vadd.xlane.f32.xlu0 %v2294
    %v2296 = vpop.xlane.xlu0 %2295
    %v2297 = vsel %vm647, %v2287, 0.0
    %2298 = vadd.xlane.f32.xlu0 %v2297
    %v2299 = vpop.xlane.xlu0 %2298
    %v2300 = vrcp.pop %v2290
    %v2301 = vrcp.pop %v2293
    %v2302 = vrcp.pop %v2296
    %v2303 = vrcp.pop %v2299
    %v2304 = vmul.f32 %v2281, %v2300
    %v2305 = vmul.f32 %v2283, %v2301
    %v2306 = vmul.f32 %v2285, %v2302
    %v2307 = vmul.f32 %v2287, %v2303
    %2308 = vrot.lane.b32.xlu0 %v629, 112
    %v2309 = vpop.permute.xlu0 %2308
    %v2312 = vsel %vm647, %v2304, 0
    %2314 = vmatprep.subr.mxu0 0.0
    %2315 = vmatpush1.msra.mxu0 %v2309
    %2316 = vmatprep.subr.mxu0 0.0
    %2317 = vmatpush1.msra.mxu0 0.0
    %2318 = vmatprep.subr.mxu0 0.0
    %2319 = vmatpush1.msra.mxu0 0.0
    %2320 = vmatprep.subr.mxu0 0.0
    %2321 = vmatpush1.msra.mxu0 0.0
    %2322 = vmatprep.subr.mxu0 0.0
    %2323 = vmatpush1.msra.mxu0 0.0
    %2324 = vmatprep.subr.mxu0 0.0
    %2325 = vmatpush1.msra.mxu0 0.0
    %2326 = vmatprep.subr.mxu0 0.0
    %2327 = vmatpush1.msra.mxu0 0.0
    %2328 = vmatprep.subr.mxu0 0.0
    %2329 = vmatpush1.msra.mxu0 0.0
    %2330 = vmatprep.subr.mxu0 0.0
    %2331 = vmatpush1.msra.mxu0 0.0
    %2332 = vmatprep.subr.mxu0 0.0
    %2333 = vmatpush1.msra.mxu0 0.0
    %2334 = vmatprep.subr.mxu0 0.0
    %2335 = vmatpush1.msra.mxu0 0.0
    %2336 = vmatprep.subr.mxu0 0.0
    %2337 = vmatpush1.msra.mxu0 0.0
    %2338 = vmatprep.subr.mxu0 0.0
    %2339 = vmatpush1.msra.mxu0 0.0
    %2340 = vmatprep.subr.mxu0 0.0
    %2341 = vmatpush1.msra.mxu0 0.0
    %2342 = vmatprep.subr.mxu0 0.0
    %2343 = vmatpush1.msra.mxu0 0.0
    %2344 = vmatprep.subr.mxu0 0.0
    %2345 = vmatpush1.msra.mxu0 0.0
    %2346 = vmatprep.subr.mxu0 0.0
    %2347 = vmatpush1.msra.mxu0 0.0
    %2348 = vmatprep.subr.mxu0 0.0
    %2349 = vmatpush1.msra.mxu0 0.0
    %2350 = vmatprep.subr.mxu0 0.0
    %2351 = vmatpush1.msra.mxu0 0.0
    %2352 = vmatprep.subr.mxu0 0.0
    %2353 = vmatpush1.msra.mxu0 0.0
    %2354 = vmatprep.subr.mxu0 0.0
    %2355 = vmatpush1.msra.mxu0 0.0
    %2356 = vmatprep.subr.mxu0 0.0
    %2357 = vmatpush1.msra.mxu0 0.0
    %2358 = vmatprep.subr.mxu0 0.0
    %2359 = vmatpush1.msra.mxu0 0.0
    %2360 = vmatprep.subr.mxu0 0.0
    %2361 = vmatpush1.msra.mxu0 0.0
    %2362 = vmatprep.subr.mxu0 0.0
    %2363 = vmatpush1.msra.mxu0 0.0
    %2364 = vmatprep.subr.mxu0 0.0
    %2365 = vmatpush1.msra.mxu0 0.0
    %2366 = vmatprep.subr.mxu0 0.0
    %2367 = vmatpush1.msra.mxu0 0.0
    %2368 = vmatprep.subr.mxu0 0.0
    %2369 = vmatpush1.msra.mxu0 0.0
    %2370 = vmatprep.subr.mxu0 0.0
    %2371 = vmatpush1.msra.mxu0 0.0
    %2372 = vmatprep.subr.mxu0 0.0
    %2373 = vmatpush1.msra.mxu0 0.0
    %2374 = vmatprep.subr.mxu0 0.0
    %2375 = vmatpush1.msra.mxu0 0.0
    %2376 = vmatprep.subr.mxu0 0.0
    %2377 = vmatpush1.msra.mxu0 0.0
    %2378 = vmatprep.mubr.f32.mxu0 0.0
    %2379 = vmatmul.mubr.f32.gmra.mrb[0].mxu0 %v2312
    %v2380 = vpop.f32.mrb[0].mxu0
    %v2381 = vadd.f32 0.0, %v2380
    %v2382 = vpop.f32.mrb[0].mxu0
    %2383 = vdwg.mxu0
    %2384 = vrot.lane.b32.xlu0 %v634, 112
    %v2385 = vpop.permute.xlu0 %2384
    %v2388 = vsel %vm647, %v2305, 0
    %2390 = vmatprep.subr.mxu0 0.0
    %2391 = vmatpush1.msra.mxu0 %v2385
    %2392 = vmatprep.subr.mxu0 0.0
    %2393 = vmatpush1.msra.mxu0 0.0
    %2394 = vmatprep.subr.mxu0 0.0
    %2395 = vmatpush1.msra.mxu0 0.0
    %2396 = vmatprep.subr.mxu0 0.0
    %2397 = vmatpush1.msra.mxu0 0.0
    %2398 = vmatprep.subr.mxu0 0.0
    %2399 = vmatpush1.msra.mxu0 0.0
    %2400 = vmatprep.subr.mxu0 0.0
    %2401 = vmatpush1.msra.mxu0 0.0
    %2402 = vmatprep.subr.mxu0 0.0
    %2403 = vmatpush1.msra.mxu0 0.0
    %2404 = vmatprep.subr.mxu0 0.0
    %2405 = vmatpush1.msra.mxu0 0.0
    %2406 = vmatprep.subr.mxu0 0.0
    %2407 = vmatpush1.msra.mxu0 0.0
    %2408 = vmatprep.subr.mxu0 0.0
    %2409 = vmatpush1.msra.mxu0 0.0
    %2410 = vmatprep.subr.mxu0 0.0
    %2411 = vmatpush1.msra.mxu0 0.0
    %2412 = vmatprep.subr.mxu0 0.0
    %2413 = vmatpush1.msra.mxu0 0.0
    %2414 = vmatprep.subr.mxu0 0.0
    %2415 = vmatpush1.msra.mxu0 0.0
    %2416 = vmatprep.subr.mxu0 0.0
    %2417 = vmatpush1.msra.mxu0 0.0
    %2418 = vmatprep.subr.mxu0 0.0
    %2419 = vmatpush1.msra.mxu0 0.0
    %2420 = vmatprep.subr.mxu0 0.0
    %2421 = vmatpush1.msra.mxu0 0.0
    %2422 = vmatprep.subr.mxu0 0.0
    %2423 = vmatpush1.msra.mxu0 0.0
    %2424 = vmatprep.subr.mxu0 0.0
    %2425 = vmatpush1.msra.mxu0 0.0
    %2426 = vmatprep.subr.mxu0 0.0
    %2427 = vmatpush1.msra.mxu0 0.0
    %2428 = vmatprep.subr.mxu0 0.0
    %2429 = vmatpush1.msra.mxu0 0.0
    %2430 = vmatprep.subr.mxu0 0.0
    %2431 = vmatpush1.msra.mxu0 0.0
    %2432 = vmatprep.subr.mxu0 0.0
    %2433 = vmatpush1.msra.mxu0 0.0
    %2434 = vmatprep.subr.mxu0 0.0
    %2435 = vmatpush1.msra.mxu0 0.0
    %2436 = vmatprep.subr.mxu0 0.0
    %2437 = vmatpush1.msra.mxu0 0.0
    %2438 = vmatprep.subr.mxu0 0.0
    %2439 = vmatpush1.msra.mxu0 0.0
    %2440 = vmatprep.subr.mxu0 0.0
    %2441 = vmatpush1.msra.mxu0 0.0
    %2442 = vmatprep.subr.mxu0 0.0
    %2443 = vmatpush1.msra.mxu0 0.0
    %2444 = vmatprep.subr.mxu0 0.0
    %2445 = vmatpush1.msra.mxu0 0.0
    %2446 = vmatprep.subr.mxu0 0.0
    %2447 = vmatpush1.msra.mxu0 0.0
    %2448 = vmatprep.subr.mxu0 0.0
    %2449 = vmatpush1.msra.mxu0 0.0
    %2450 = vmatprep.subr.mxu0 0.0
    %2451 = vmatpush1.msra.mxu0 0.0
    %2452 = vmatprep.subr.mxu0 0.0
    %2453 = vmatpush1.msra.mxu0 0.0
    %2454 = vmatprep.mubr.f32.mxu0 0.0
    %2455 = vmatmul.mubr.f32.gmra.mrb[0].mxu0 %v2388
    %v2456 = vpop.f32.mrb[0].mxu0
    %v2457 = vadd.f32 0.0, %v2456
    %v2458 = vpop.f32.mrb[0].mxu0
    %2459 = vdwg.mxu0
    %2460 = vrot.lane.b32.xlu0 %v639, 112
    %v2461 = vpop.permute.xlu0 %2460
    %v2464 = vsel %vm647, %v2306, 0
    %2466 = vmatprep.subr.mxu0 0.0
    %2467 = vmatpush1.msra.mxu0 %v2461
    %2468 = vmatprep.subr.mxu0 0.0
    %2469 = vmatpush1.msra.mxu0 0.0
    %2470 = vmatprep.subr.mxu0 0.0
    %2471 = vmatpush1.msra.mxu0 0.0
    %2472 = vmatprep.subr.mxu0 0.0
    %2473 = vmatpush1.msra.mxu0 0.0
    %2474 = vmatprep.subr.mxu0 0.0
    %2475 = vmatpush1.msra.mxu0 0.0
    %2476 = vmatprep.subr.mxu0 0.0
    %2477 = vmatpush1.msra.mxu0 0.0
    %2478 = vmatprep.subr.mxu0 0.0
    %2479 = vmatpush1.msra.mxu0 0.0
    %2480 = vmatprep.subr.mxu0 0.0
    %2481 = vmatpush1.msra.mxu0 0.0
    %2482 = vmatprep.subr.mxu0 0.0
    %2483 = vmatpush1.msra.mxu0 0.0
    %2484 = vmatprep.subr.mxu0 0.0
    %2485 = vmatpush1.msra.mxu0 0.0
    %2486 = vmatprep.subr.mxu0 0.0
    %2487 = vmatpush1.msra.mxu0 0.0
    %2488 = vmatprep.subr.mxu0 0.0
    %2489 = vmatpush1.msra.mxu0 0.0
    %2490 = vmatprep.subr.mxu0 0.0
    %2491 = vmatpush1.msra.mxu0 0.0
    %2492 = vmatprep.subr.mxu0 0.0
    %2493 = vmatpush1.msra.mxu0 0.0
    %2494 = vmatprep.subr.mxu0 0.0
    %2495 = vmatpush1.msra.mxu0 0.0
    %2496 = vmatprep.subr.mxu0 0.0
    %2497 = vmatpush1.msra.mxu0 0.0
    %2498 = vmatprep.subr.mxu0 0.0
    %2499 = vmatpush1.msra.mxu0 0.0
    %2500 = vmatprep.subr.mxu0 0.0
    %2501 = vmatpush1.msra.mxu0 0.0
    %2502 = vmatprep.subr.mxu0 0.0
    %2503 = vmatpush1.msra.mxu0 0.0
    %2504 = vmatprep.subr.mxu0 0.0
    %2505 = vmatpush1.msra.mxu0 0.0
    %2506 = vmatprep.subr.mxu0 0.0
    %2507 = vmatpush1.msra.mxu0 0.0
    %2508 = vmatprep.subr.mxu0 0.0
    %2509 = vmatpush1.msra.mxu0 0.0
    %2510 = vmatprep.subr.mxu0 0.0
    %2511 = vmatpush1.msra.mxu0 0.0
    %2512 = vmatprep.subr.mxu0 0.0
    %2513 = vmatpush1.msra.mxu0 0.0
    %2514 = vmatprep.subr.mxu0 0.0
    %2515 = vmatpush1.msra.mxu0 0.0
    %2516 = vmatprep.subr.mxu0 0.0
    %2517 = vmatpush1.msra.mxu0 0.0
    %2518 = vmatprep.subr.mxu0 0.0
    %2519 = vmatpush1.msra.mxu0 0.0
    %2520 = vmatprep.subr.mxu0 0.0
    %2521 = vmatpush1.msra.mxu0 0.0
    %2522 = vmatprep.subr.mxu0 0.0
    %2523 = vmatpush1.msra.mxu0 0.0
    %2524 = vmatprep.subr.mxu0 0.0
    %2525 = vmatpush1.msra.mxu0 0.0
    %2526 = vmatprep.subr.mxu0 0.0
    %2527 = vmatpush1.msra.mxu0 0.0
    %2528 = vmatprep.subr.mxu0 0.0
    %2529 = vmatpush1.msra.mxu0 0.0
    %2530 = vmatprep.mubr.f32.mxu0 0.0
    %2531 = vmatmul.mubr.f32.gmra.mrb[0].mxu0 %v2464
    %v2532 = vpop.f32.mrb[0].mxu0
    %v2533 = vadd.f32 0.0, %v2532
    %v2534 = vpop.f32.mrb[0].mxu0
    %2535 = vdwg.mxu0
    %2536 = vrot.lane.b32.xlu0 %v644, 112
    %v2537 = vpop.permute.xlu0 %2536
    %v2540 = vsel %vm647, %v2307, 0
    %2542 = vmatprep.subr.mxu0 0.0
    %2543 = vmatpush1.msra.mxu0 %v2537
    %2544 = vmatprep.subr.mxu0 0.0
    %2545 = vmatpush1.msra.mxu0 0.0
    %2546 = vmatprep.subr.mxu0 0.0
    %2547 = vmatpush1.msra.mxu0 0.0
    %2548 = vmatprep.subr.mxu0 0.0
    %2549 = vmatpush1.msra.mxu0 0.0
    %2550 = vmatprep.subr.mxu0 0.0
    %2551 = vmatpush1.msra.mxu0 0.0
    %2552 = vmatprep.subr.mxu0 0.0
    %2553 = vmatpush1.msra.mxu0 0.0
    %2554 = vmatprep.subr.mxu0 0.0
    %2555 = vmatpush1.msra.mxu0 0.0
    %2556 = vmatprep.subr.mxu0 0.0
    %2557 = vmatpush1.msra.mxu0 0.0
    %2558 = vmatprep.subr.mxu0 0.0
    %2559 = vmatpush1.msra.mxu0 0.0
    %2560 = vmatprep.subr.mxu0 0.0
    %2561 = vmatpush1.msra.mxu0 0.0
    %2562 = vmatprep.subr.mxu0 0.0
    %2563 = vmatpush1.msra.mxu0 0.0
    %2564 = vmatprep.subr.mxu0 0.0
    %2565 = vmatpush1.msra.mxu0 0.0
    %2566 = vmatprep.subr.mxu0 0.0
    %2567 = vmatpush1.msra.mxu0 0.0
    %2568 = vmatprep.subr.mxu0 0.0
    %2569 = vmatpush1.msra.mxu0 0.0
    %2570 = vmatprep.subr.mxu0 0.0
    %2571 = vmatpush1.msra.mxu0 0.0
    %2572 = vmatprep.subr.mxu0 0.0
    %2573 = vmatpush1.msra.mxu0 0.0
    %2574 = vmatprep.subr.mxu0 0.0
    %2575 = vmatpush1.msra.mxu0 0.0
    %2576 = vmatprep.subr.mxu0 0.0
    %2577 = vmatpush1.msra.mxu0 0.0
    %2578 = vmatprep.subr.mxu0 0.0
    %2579 = vmatpush1.msra.mxu0 0.0
    %2580 = vmatprep.subr.mxu0 0.0
    %2581 = vmatpush1.msra.mxu0 0.0
    %2582 = vmatprep.subr.mxu0 0.0
    %2583 = vmatpush1.msra.mxu0 0.0
    %2584 = vmatprep.subr.mxu0 0.0
    %2585 = vmatpush1.msra.mxu0 0.0
    %2586 = vmatprep.subr.mxu0 0.0
    %2587 = vmatpush1.msra.mxu0 0.0
    %2588 = vmatprep.subr.mxu0 0.0
    %2589 = vmatpush1.msra.mxu0 0.0
    %2590 = vmatprep.subr.mxu0 0.0
    %2591 = vmatpush1.msra.mxu0 0.0
    %2592 = vmatprep.subr.mxu0 0.0
    %2593 = vmatpush1.msra.mxu0 0.0
    %2594 = vmatprep.subr.mxu0 0.0
    %2595 = vmatpush1.msra.mxu0 0.0
    %2596 = vmatprep.subr.mxu0 0.0
    %2597 = vmatpush1.msra.mxu0 0.0
    %2598 = vmatprep.subr.mxu0 0.0
    %2599 = vmatpush1.msra.mxu0 0.0
    %2600 = vmatprep.subr.mxu0 0.0
    %2601 = vmatpush1.msra.mxu0 0.0
    %2602 = vmatprep.subr.mxu0 0.0
    %2603 = vmatpush1.msra.mxu0 0.0
    %2604 = vmatprep.subr.mxu0 0.0
    %2605 = vmatpush1.msra.mxu0 0.0
    %2606 = vmatprep.mubr.f32.mxu0 0.0
    %2607 = vmatmul.mubr.f32.gmra.mrb[0].mxu0 %v2540
    %v2608 = vpop.f32.mrb[0].mxu0
    %v2609 = vadd.f32 0.0, %v2608
    %v2610 = vpop.f32.mrb[0].mxu0
    %2611 = vdwg.mxu0
    %2612 = vrot.lane.b32.xlu0 %v419, 104
    %v2613 = vpop.permute.xlu0 %2612
    %2614 = vrot.lane.b32.xlu0 %v524, 104
    %v2615 = vpop.permute.xlu0 %2614
    %v2616 = vsel %vm647, %v2613, 0
    %v2618 = vsel %vm647, %v2615, 0
    %2620 = vmatprep.subr.mxu0 0.0
    %2621 = vmatpush1.xpose.msra.mxu0 %v2618
    %2622 = vmatprep.subr.mxu0 0.0
    %2623 = vmatpush1.xpose.msra.mxu0 0.0
    %2624 = vmatprep.subr.mxu0 0.0
    %2625 = vmatpush1.xpose.msra.mxu0 0.0
    %2626 = vmatprep.subr.mxu0 0.0
    %2627 = vmatpush1.xpose.msra.mxu0 0.0
    %2628 = vmatprep.subr.mxu0 0.0
    %2629 = vmatpush1.xpose.msra.mxu0 0.0
    %2630 = vmatprep.subr.mxu0 0.0
    %2631 = vmatpush1.xpose.msra.mxu0 0.0
    %2632 = vmatprep.subr.mxu0 0.0
    %2633 = vmatpush1.xpose.msra.mxu0 0.0
    %2634 = vmatprep.subr.mxu0 0.0
    %2635 = vmatpush1.xpose.msra.mxu0 0.0
    %2636 = vmatprep.subr.mxu0 0.0
    %2637 = vmatpush1.xpose.msra.mxu0 0.0
    %2638 = vmatprep.subr.mxu0 0.0
    %2639 = vmatpush1.xpose.msra.mxu0 0.0
    %2640 = vmatprep.subr.mxu0 0.0
    %2641 = vmatpush1.xpose.msra.mxu0 0.0
    %2642 = vmatprep.subr.mxu0 0.0
    %2643 = vmatpush1.xpose.msra.mxu0 0.0
    %2644 = vmatprep.subr.mxu0 0.0
    %2645 = vmatpush1.xpose.msra.mxu0 0.0
    %2646 = vmatprep.subr.mxu0 0.0
    %2647 = vmatpush1.xpose.msra.mxu0 0.0
    %2648 = vmatprep.subr.mxu0 0.0
    %2649 = vmatpush1.xpose.msra.mxu0 0.0
    %2650 = vmatprep.subr.mxu0 0.0
    %2651 = vmatpush1.xpose.msra.mxu0 0.0
    %2652 = vmatprep.subr.mxu0 0.0
    %2653 = vmatpush1.xpose.msra.mxu0 0.0
    %2654 = vmatprep.subr.mxu0 0.0
    %2655 = vmatpush1.xpose.msra.mxu0 0.0
    %2656 = vmatprep.subr.mxu0 0.0
    %2657 = vmatpush1.xpose.msra.mxu0 0.0
    %2658 = vmatprep.subr.mxu0 0.0
    %2659 = vmatpush1.xpose.msra.mxu0 0.0
    %2660 = vmatprep.subr.mxu0 0.0
    %2661 = vmatpush1.xpose.msra.mxu0 0.0
    %2662 = vmatprep.subr.mxu0 0.0
    %2663 = vmatpush1.xpose.msra.mxu0 0.0
    %2664 = vmatprep.subr.mxu0 0.0
    %2665 = vmatpush1.xpose.msra.mxu0 0.0
    %2666 = vmatprep.subr.mxu0 0.0
    %2667 = vmatpush1.xpose.msra.mxu0 0.0
    %2668 = vmatprep.subr.mxu0 0.0
    %2669 = vmatpush1.xpose.msra.mxu0 0.0
    %2670 = vmatprep.subr.mxu0 0.0
    %2671 = vmatpush1.xpose.msra.mxu0 0.0
    %2672 = vmatprep.subr.mxu0 0.0
    %2673 = vmatpush1.xpose.msra.mxu0 0.0
    %2674 = vmatprep.subr.mxu0 0.0
    %2675 = vmatpush1.xpose.msra.mxu0 0.0
    %2676 = vmatprep.subr.mxu0 0.0
    %2677 = vmatpush1.xpose.msra.mxu0 0.0
    %2678 = vmatprep.subr.mxu0 0.0
    %2679 = vmatpush1.xpose.msra.mxu0 0.0
    %2680 = vmatprep.subr.mxu0 0.0
    %2681 = vmatpush1.xpose.msra.mxu0 0.0
    %2682 = vmatprep.subr.mxu0 0.0
    %2683 = vmatpush1.xpose.msra.mxu0 0.0
    %2684 = vmatprep.mubr.f32.mxu0 0.0
    %2685 = vmatmul.mubr.f32.gmra.mrb[0].mxu0 %v2616
    %v2686 = vpop.f32.mrb[0].mxu0
    %v2687 = vadd.f32 0.0, %v2686
    %v2688 = vpop.f32.mrb[0].mxu0
    %2689 = vdwg.mxu0
    %2690 = vrot.lane.b32.xlu0 %v424, 104
    %v2691 = vpop.permute.xlu0 %2690
    %2692 = vrot.lane.b32.xlu0 %v529, 104
    %v2693 = vpop.permute.xlu0 %2692
    %v2694 = vsel %vm647, %v2691, 0
    %v2696 = vsel %vm647, %v2693, 0
    %2698 = vmatprep.subr.mxu0 0.0
    %2699 = vmatpush1.xpose.msra.mxu0 %v2696
    %2700 = vmatprep.subr.mxu0 0.0
    %2701 = vmatpush1.xpose.msra.mxu0 0.0
    %2702 = vmatprep.subr.mxu0 0.0
    %2703 = vmatpush1.xpose.msra.mxu0 0.0
    %2704 = vmatprep.subr.mxu0 0.0
    %2705 = vmatpush1.xpose.msra.mxu0 0.0
    %2706 = vmatprep.subr.mxu0 0.0
    %2707 = vmatpush1.xpose.msra.mxu0 0.0
    %2708 = vmatprep.subr.mxu0 0.0
    %2709 = vmatpush1.xpose.msra.mxu0 0.0
    %2710 = vmatprep.subr.mxu0 0.0
    %2711 = vmatpush1.xpose.msra.mxu0 0.0
    %2712 = vmatprep.subr.mxu0 0.0
    %2713 = vmatpush1.xpose.msra.mxu0 0.0
    %2714 = vmatprep.subr.mxu0 0.0
    %2715 = vmatpush1.xpose.msra.mxu0 0.0
    %2716 = vmatprep.subr.mxu0 0.0
    %2717 = vmatpush1.xpose.msra.mxu0 0.0
    %2718 = vmatprep.subr.mxu0 0.0
    %2719 = vmatpush1.xpose.msra.mxu0 0.0
    %2720 = vmatprep.subr.mxu0 0.0
    %2721 = vmatpush1.xpose.msra.mxu0 0.0
    %2722 = vmatprep.subr.mxu0 0.0
    %2723 = vmatpush1.xpose.msra.mxu0 0.0
    %2724 = vmatprep.subr.mxu0 0.0
    %2725 = vmatpush1.xpose.msra.mxu0 0.0
    %2726 = vmatprep.subr.mxu0 0.0
    %2727 = vmatpush1.xpose.msra.mxu0 0.0
    %2728 = vmatprep.subr.mxu0 0.0
    %2729 = vmatpush1.xpose.msra.mxu0 0.0
    %2730 = vmatprep.subr.mxu0 0.0
    %2731 = vmatpush1.xpose.msra.mxu0 0.0
    %2732 = vmatprep.subr.mxu0 0.0
    %2733 = vmatpush1.xpose.msra.mxu0 0.0
    %2734 = vmatprep.subr.mxu0 0.0
    %2735 = vmatpush1.xpose.msra.mxu0 0.0
    %2736 = vmatprep.subr.mxu0 0.0
    %2737 = vmatpush1.xpose.msra.mxu0 0.0
    %2738 = vmatprep.subr.mxu0 0.0
    %2739 = vmatpush1.xpose.msra.mxu0 0.0
    %2740 = vmatprep.subr.mxu0 0.0
    %2741 = vmatpush1.xpose.msra.mxu0 0.0
    %2742 = vmatprep.subr.mxu0 0.0
    %2743 = vmatpush1.xpose.msra.mxu0 0.0
    %2744 = vmatprep.subr.mxu0 0.0
    %2745 = vmatpush1.xpose.msra.mxu0 0.0
    %2746 = vmatprep.subr.mxu0 0.0
    %2747 = vmatpush1.xpose.msra.mxu0 0.0
    %2748 = vmatprep.subr.mxu0 0.0
    %2749 = vmatpush1.xpose.msra.mxu0 0.0
    %2750 = vmatprep.subr.mxu0 0.0
    %2751 = vmatpush1.xpose.msra.mxu0 0.0
    %2752 = vmatprep.subr.mxu0 0.0
    %2753 = vmatpush1.xpose.msra.mxu0 0.0
    %2754 = vmatprep.subr.mxu0 0.0
    %2755 = vmatpush1.xpose.msra.mxu0 0.0
    %2756 = vmatprep.subr.mxu0 0.0
    %2757 = vmatpush1.xpose.msra.mxu0 0.0
    %2758 = vmatprep.subr.mxu0 0.0
    %2759 = vmatpush1.xpose.msra.mxu0 0.0
    %2760 = vmatprep.subr.mxu0 0.0
    %2761 = vmatpush1.xpose.msra.mxu0 0.0
    %2762 = vmatprep.mubr.f32.mxu0 0.0
    %2763 = vmatmul.mubr.f32.gmra.mrb[0].mxu0 %v2694
    %v2764 = vpop.f32.mrb[0].mxu0
    %v2765 = vadd.f32 0.0, %v2764
    %v2766 = vpop.f32.mrb[0].mxu0
    %2767 = vdwg.mxu0
    %2768 = vrot.lane.b32.xlu0 %v429, 104
    %v2769 = vpop.permute.xlu0 %2768
    %2770 = vrot.lane.b32.xlu0 %v534, 104
    %v2771 = vpop.permute.xlu0 %2770
    %v2772 = vsel %vm647, %v2769, 0
    %v2774 = vsel %vm647, %v2771, 0
    %2776 = vmatprep.subr.mxu0 0.0
    %2777 = vmatpush1.xpose.msra.mxu0 %v2774
    %2778 = vmatprep.subr.mxu0 0.0
    %2779 = vmatpush1.xpose.msra.mxu0 0.0
    %2780 = vmatprep.subr.mxu0 0.0
    %2781 = vmatpush1.xpose.msra.mxu0 0.0
    %2782 = vmatprep.subr.mxu0 0.0
    %2783 = vmatpush1.xpose.msra.mxu0 0.0
    %2784 = vmatprep.subr.mxu0 0.0
    %2785 = vmatpush1.xpose.msra.mxu0 0.0
    %2786 = vmatprep.subr.mxu0 0.0
    %2787 = vmatpush1.xpose.msra.mxu0 0.0
    %2788 = vmatprep.subr.mxu0 0.0
    %2789 = vmatpush1.xpose.msra.mxu0 0.0
    %2790 = vmatprep.subr.mxu0 0.0
    %2791 = vmatpush1.xpose.msra.mxu0 0.0
    %2792 = vmatprep.subr.mxu0 0.0
    %2793 = vmatpush1.xpose.msra.mxu0 0.0
    %2794 = vmatprep.subr.mxu0 0.0
    %2795 = vmatpush1.xpose.msra.mxu0 0.0
    %2796 = vmatprep.subr.mxu0 0.0
    %2797 = vmatpush1.xpose.msra.mxu0 0.0
    %2798 = vmatprep.subr.mxu0 0.0
    %2799 = vmatpush1.xpose.msra.mxu0 0.0
    %2800 = vmatprep.subr.mxu0 0.0
    %2801 = vmatpush1.xpose.msra.mxu0 0.0
    %2802 = vmatprep.subr.mxu0 0.0
    %2803 = vmatpush1.xpose.msra.mxu0 0.0
    %2804 = vmatprep.subr.mxu0 0.0
    %2805 = vmatpush1.xpose.msra.mxu0 0.0
    %2806 = vmatprep.subr.mxu0 0.0
    %2807 = vmatpush1.xpose.msra.mxu0 0.0
    %2808 = vmatprep.subr.mxu0 0.0
    %2809 = vmatpush1.xpose.msra.mxu0 0.0
    %2810 = vmatprep.subr.mxu0 0.0
    %2811 = vmatpush1.xpose.msra.mxu0 0.0
    %2812 = vmatprep.subr.mxu0 0.0
    %2813 = vmatpush1.xpose.msra.mxu0 0.0
    %2814 = vmatprep.subr.mxu0 0.0
    %2815 = vmatpush1.xpose.msra.mxu0 0.0
    %2816 = vmatprep.subr.mxu0 0.0
    %2817 = vmatpush1.xpose.msra.mxu0 0.0
    %2818 = vmatprep.subr.mxu0 0.0
    %2819 = vmatpush1.xpose.msra.mxu0 0.0
    %2820 = vmatprep.subr.mxu0 0.0
    %2821 = vmatpush1.xpose.msra.mxu0 0.0
    %2822 = vmatprep.subr.mxu0 0.0
    %2823 = vmatpush1.xpose.msra.mxu0 0.0
    %2824 = vmatprep.subr.mxu0 0.0
    %2825 = vmatpush1.xpose.msra.mxu0 0.0
    %2826 = vmatprep.subr.mxu0 0.0
    %2827 = vmatpush1.xpose.msra.mxu0 0.0
    %2828 = vmatprep.subr.mxu0 0.0
    %2829 = vmatpush1.xpose.msra.mxu0 0.0
    %2830 = vmatprep.subr.mxu0 0.0
    %2831 = vmatpush1.xpose.msra.mxu0 0.0
    %2832 = vmatprep.subr.mxu0 0.0
    %2833 = vmatpush1.xpose.msra.mxu0 0.0
    %2834 = vmatprep.subr.mxu0 0.0
    %2835 = vmatpush1.xpose.msra.mxu0 0.0
    %2836 = vmatprep.subr.mxu0 0.0
    %2837 = vmatpush1.xpose.msra.mxu0 0.0
    %2838 = vmatprep.subr.mxu0 0.0
    %2839 = vmatpush1.xpose.msra.mxu0 0.0
    %2840 = vmatprep.mubr.f32.mxu0 0.0
    %2841 = vmatmul.mubr.f32.gmra.mrb[0].mxu0 %v2772
    %v2842 = vpop.f32.mrb[0].mxu0
    %v2843 = vadd.f32 0.0, %v2842
    %v2844 = vpop.f32.mrb[0].mxu0
    %2845 = vdwg.mxu0
    %2846 = vrot.lane.b32.xlu0 %v434, 104
    %v2847 = vpop.permute.xlu0 %2846
    %2848 = vrot.lane.b32.xlu0 %v539, 104
    %v2849 = vpop.permute.xlu0 %2848
    %v2850 = vsel %vm647, %v2847, 0
    %v2852 = vsel %vm647, %v2849, 0
    %2854 = vmatprep.subr.mxu0 0.0
    %2855 = vmatpush1.xpose.msra.mxu0 %v2852
    %2856 = vmatprep.subr.mxu0 0.0
    %2857 = vmatpush1.xpose.msra.mxu0 0.0
    %2858 = vmatprep.subr.mxu0 0.0
    %2859 = vmatpush1.xpose.msra.mxu0 0.0
    %2860 = vmatprep.subr.mxu0 0.0
    %2861 = vmatpush1.xpose.msra.mxu0 0.0
    %2862 = vmatprep.subr.mxu0 0.0
    %2863 = vmatpush1.xpose.msra.mxu0 0.0
    %2864 = vmatprep.subr.mxu0 0.0
    %2865 = vmatpush1.xpose.msra.mxu0 0.0
    %2866 = vmatprep.subr.mxu0 0.0
    %2867 = vmatpush1.xpose.msra.mxu0 0.0
    %2868 = vmatprep.subr.mxu0 0.0
    %2869 = vmatpush1.xpose.msra.mxu0 0.0
    %2870 = vmatprep.subr.mxu0 0.0
    %2871 = vmatpush1.xpose.msra.mxu0 0.0
    %2872 = vmatprep.subr.mxu0 0.0
    %2873 = vmatpush1.xpose.msra.mxu0 0.0
    %2874 = vmatprep.subr.mxu0 0.0
    %2875 = vmatpush1.xpose.msra.mxu0 0.0
    %2876 = vmatprep.subr.mxu0 0.0
    %2877 = vmatpush1.xpose.msra.mxu0 0.0
    %2878 = vmatprep.subr.mxu0 0.0
    %2879 = vmatpush1.xpose.msra.mxu0 0.0
    %2880 = vmatprep.subr.mxu0 0.0
    %2881 = vmatpush1.xpose.msra.mxu0 0.0
    %2882 = vmatprep.subr.mxu0 0.0
    %2883 = vmatpush1.xpose.msra.mxu0 0.0
    %2884 = vmatprep.subr.mxu0 0.0
    %2885 = vmatpush1.xpose.msra.mxu0 0.0
    %2886 = vmatprep.subr.mxu0 0.0
    %2887 = vmatpush1.xpose.msra.mxu0 0.0
    %2888 = vmatprep.subr.mxu0 0.0
    %2889 = vmatpush1.xpose.msra.mxu0 0.0
    %2890 = vmatprep.subr.mxu0 0.0
    %2891 = vmatpush1.xpose.msra.mxu0 0.0
    %2892 = vmatprep.subr.mxu0 0.0
    %2893 = vmatpush1.xpose.msra.mxu0 0.0
    %2894 = vmatprep.subr.mxu0 0.0
    %2895 = vmatpush1.xpose.msra.mxu0 0.0
    %2896 = vmatprep.subr.mxu0 0.0
    %2897 = vmatpush1.xpose.msra.mxu0 0.0
    %2898 = vmatprep.subr.mxu0 0.0
    %2899 = vmatpush1.xpose.msra.mxu0 0.0
    %2900 = vmatprep.subr.mxu0 0.0
    %2901 = vmatpush1.xpose.msra.mxu0 0.0
    %2902 = vmatprep.subr.mxu0 0.0
    %2903 = vmatpush1.xpose.msra.mxu0 0.0
    %2904 = vmatprep.subr.mxu0 0.0
    %2905 = vmatpush1.xpose.msra.mxu0 0.0
    %2906 = vmatprep.subr.mxu0 0.0
    %2907 = vmatpush1.xpose.msra.mxu0 0.0
    %2908 = vmatprep.subr.mxu0 0.0
    %2909 = vmatpush1.xpose.msra.mxu0 0.0
    %2910 = vmatprep.subr.mxu0 0.0
    %2911 = vmatpush1.xpose.msra.mxu0 0.0
    %2912 = vmatprep.subr.mxu0 0.0
    %2913 = vmatpush1.xpose.msra.mxu0 0.0
    %2914 = vmatprep.subr.mxu0 0.0
    %2915 = vmatpush1.xpose.msra.mxu0 0.0
    %2916 = vmatprep.subr.mxu0 0.0
    %2917 = vmatpush1.xpose.msra.mxu0 0.0
    %2918 = vmatprep.mubr.f32.mxu0 0.0
    %2919 = vmatmul.mubr.f32.gmra.mrb[0].mxu0 %v2850
    %v2920 = vpop.f32.mrb[0].mxu0
    %v2921 = vadd.f32 0.0, %v2920
    %v2922 = vpop.f32.mrb[0].mxu0
    %2923 = vdwg.mxu0
    %v2924 = vsel %vm647, %v2687, -inf
    %2925 = vmax.xlane.f32.xlu0 %v2924
    %v2926 = vpop.xlane.xlu0 %2925
    %v2927 = vsel %vm647, %v2765, -inf
    %2928 = vmax.xlane.f32.xlu0 %v2927
    %v2929 = vpop.xlane.xlu0 %2928
    %v2930 = vsel %vm647, %v2843, -inf
    %2931 = vmax.xlane.f32.xlu0 %v2930
    %v2932 = vpop.xlane.xlu0 %2931
    %v2933 = vsel %vm647, %v2921, -inf
    %2934 = vmax.xlane.f32.xlu0 %v2933
    %v2935 = vpop.xlane.xlu0 %2934
    %v2936 = vsub.f32 %v2687, %v2926
    %v2937 = vsub.f32 %v2765, %v2929
    %v2938 = vsub.f32 %v2843, %v2932
    %v2939 = vsub.f32 %v2921, %v2935
    %v2940 = vmul.f32 %v2936, 1.442695
    %v2941 = vpow.pop %v2940
    %v2942 = vmul.f32 %v2937, 1.442695
    %v2943 = vpow.pop %v2942
    %v2944 = vmul.f32 %v2938, 1.442695
    %v2945 = vpow.pop %v2944
    %v2946 = vmul.f32 %v2939, 1.442695
    %v2947 = vpow.pop %v2946
    %v2948 = vsel %vm647, %v2941, 0.0
    %2949 = vadd.xlane.f32.xlu0 %v2948
    %v2950 = vpop.xlane.xlu0 %2949
    %v2951 = vsel %vm647, %v2943, 0.0
    %2952 = vadd.xlane.f32.xlu0 %v2951
    %v2953 = vpop.xlane.xlu0 %2952
    %v2954 = vsel %vm647, %v2945, 0.0
    %2955 = vadd.xlane.f32.xlu0 %v2954
    %v2956 = vpop.xlane.xlu0 %2955
    %v2957 = vsel %vm647, %v2947, 0.0
    %2958 = vadd.xlane.f32.xlu0 %v2957
    %v2959 = vpop.xlane.xlu0 %2958
    %v2960 = vrcp.pop %v2950
    %v2961 = vrcp.pop %v2953
    %v2962 = vrcp.pop %v2956
    %v2963 = vrcp.pop %v2959
    %v2964 = vmul.f32 %v2941, %v2960
    %v2965 = vmul.f32 %v2943, %v2961
    %v2966 = vmul.f32 %v2945, %v2962
    %v2967 = vmul.f32 %v2947, %v2963
    %2968 = vrot.lane.b32.xlu0 %v629, 104
    %v2969 = vpop.permute.xlu0 %2968
    %v2972 = vsel %vm647, %v2964, 0
    %2974 = vmatprep.subr.mxu0 0.0
    %2975 = vmatpush1.msra.mxu0 %v2969
    %2976 = vmatprep.subr.mxu0 0.0
    %2977 = vmatpush1.msra.mxu0 0.0
    %2978 = vmatprep.subr.mxu0 0.0
    %2979 = vmatpush1.msra.mxu0 0.0
    %2980 = vmatprep.subr.mxu0 0.0
    %2981 = vmatpush1.msra.mxu0 0.0
    %2982 = vmatprep.subr.mxu0 0.0
    %2983 = vmatpush1.msra.mxu0 0.0
    %2984 = vmatprep.subr.mxu0 0.0
    %2985 = vmatpush1.msra.mxu0 0.0
    %2986 = vmatprep.subr.mxu0 0.0
    %2987 = vmatpush1.msra.mxu0 0.0
    %2988 = vmatprep.subr.mxu0 0.0
    %2989 = vmatpush1.msra.mxu0 0.0
    %2990 = vmatprep.subr.mxu0 0.0
    %2991 = vmatpush1.msra.mxu0 0.0
    %2992 = vmatprep.subr.mxu0 0.0
    %2993 = vmatpush1.msra.mxu0 0.0
    %2994 = vmatprep.subr.mxu0 0.0
    %2995 = vmatpush1.msra.mxu0 0.0
    %2996 = vmatprep.subr.mxu0 0.0
    %2997 = vmatpush1.msra.mxu0 0.0
    %2998 = vmatprep.subr.mxu0 0.0
    %2999 = vmatpush1.msra.mxu0 0.0
    %3000 = vmatprep.subr.mxu0 0.0
    %3001 = vmatpush1.msra.mxu0 0.0
    %3002 = vmatprep.subr.mxu0 0.0
    %3003 = vmatpush1.msra.mxu0 0.0
    %3004 = vmatprep.subr.mxu0 0.0
    %3005 = vmatpush1.msra.mxu0 0.0
    %3006 = vmatprep.subr.mxu0 0.0
    %3007 = vmatpush1.msra.mxu0 0.0
    %3008 = vmatprep.subr.mxu0 0.0
    %3009 = vmatpush1.msra.mxu0 0.0
    %3010 = vmatprep.subr.mxu0 0.0
    %3011 = vmatpush1.msra.mxu0 0.0
    %3012 = vmatprep.subr.mxu0 0.0
    %3013 = vmatpush1.msra.mxu0 0.0
    %3014 = vmatprep.subr.mxu0 0.0
    %3015 = vmatpush1.msra.mxu0 0.0
    %3016 = vmatprep.subr.mxu0 0.0
    %3017 = vmatpush1.msra.mxu0 0.0
    %3018 = vmatprep.subr.mxu0 0.0
    %3019 = vmatpush1.msra.mxu0 0.0
    %3020 = vmatprep.subr.mxu0 0.0
    %3021 = vmatpush1.msra.mxu0 0.0
    %3022 = vmatprep.subr.mxu0 0.0
    %3023 = vmatpush1.msra.mxu0 0.0
    %3024 = vmatprep.subr.mxu0 0.0
    %3025 = vmatpush1.msra.mxu0 0.0
    %3026 = vmatprep.subr.mxu0 0.0
    %3027 = vmatpush1.msra.mxu0 0.0
    %3028 = vmatprep.subr.mxu0 0.0
    %3029 = vmatpush1.msra.mxu0 0.0
    %3030 = vmatprep.subr.mxu0 0.0
    %3031 = vmatpush1.msra.mxu0 0.0
    %3032 = vmatprep.subr.mxu0 0.0
    %3033 = vmatpush1.msra.mxu0 0.0
    %3034 = vmatprep.subr.mxu0 0.0
    %3035 = vmatpush1.msra.mxu0 0.0
    %3036 = vmatprep.subr.mxu0 0.0
    %3037 = vmatpush1.msra.mxu0 0.0
    %3038 = vmatprep.mubr.f32.mxu0 0.0
    %3039 = vmatmul.mubr.f32.gmra.mrb[0].mxu0 %v2972
    %v3040 = vpop.f32.mrb[0].mxu0
    %v3041 = vadd.f32 0.0, %v3040
    %v3042 = vpop.f32.mrb[0].mxu0
    %3043 = vdwg.mxu0
    %3044 = vrot.lane.b32.xlu0 %v634, 104
    %v3045 = vpop.permute.xlu0 %3044
    %v3048 = vsel %vm647, %v2965, 0
    %3050 = vmatprep.subr.mxu0 0.0
    %3051 = vmatpush1.msra.mxu0 %v3045
    %3052 = vmatprep.subr.mxu0 0.0
    %3053 = vmatpush1.msra.mxu0 0.0
    %3054 = vmatprep.subr.mxu0 0.0
    %3055 = vmatpush1.msra.mxu0 0.0
    %3056 = vmatprep.subr.mxu0 0.0
    %3057 = vmatpush1.msra.mxu0 0.0
    %3058 = vmatprep.subr.mxu0 0.0
    %3059 = vmatpush1.msra.mxu0 0.0
    %3060 = vmatprep.subr.mxu0 0.0
    %3061 = vmatpush1.msra.mxu0 0.0
    %3062 = vmatprep.subr.mxu0 0.0
    %3063 = vmatpush1.msra.mxu0 0.0
    %3064 = vmatprep.subr.mxu0 0.0
    %3065 = vmatpush1.msra.mxu0 0.0
    %3066 = vmatprep.subr.mxu0 0.0
    %3067 = vmatpush1.msra.mxu0 0.0
    %3068 = vmatprep.subr.mxu0 0.0
    %3069 = vmatpush1.msra.mxu0 0.0
    %3070 = vmatprep.subr.mxu0 0.0
    %3071 = vmatpush1.msra.mxu0 0.0
    %3072 = vmatprep.subr.mxu0 0.0
    %3073 = vmatpush1.msra.mxu0 0.0
    %3074 = vmatprep.subr.mxu0 0.0
    %3075 = vmatpush1.msra.mxu0 0.0
    %3076 = vmatprep.subr.mxu0 0.0
    %3077 = vmatpush1.msra.mxu0 0.0
    %3078 = vmatprep.subr.mxu0 0.0
    %3079 = vmatpush1.msra.mxu0 0.0
    %3080 = vmatprep.subr.mxu0 0.0
    %3081 = vmatpush1.msra.mxu0 0.0
    %3082 = vmatprep.subr.mxu0 0.0
    %3083 = vmatpush1.msra.mxu0 0.0
    %3084 = vmatprep.subr.mxu0 0.0
    %3085 = vmatpush1.msra.mxu0 0.0
    %3086 = vmatprep.subr.mxu0 0.0
    %3087 = vmatpush1.msra.mxu0 0.0
    %3088 = vmatprep.subr.mxu0 0.0
    %3089 = vmatpush1.msra.mxu0 0.0
    %3090 = vmatprep.subr.mxu0 0.0
    %3091 = vmatpush1.msra.mxu0 0.0
    %3092 = vmatprep.subr.mxu0 0.0
    %3093 = vmatpush1.msra.mxu0 0.0
    %3094 = vmatprep.subr.mxu0 0.0
    %3095 = vmatpush1.msra.mxu0 0.0
    %3096 = vmatprep.subr.mxu0 0.0
    %3097 = vmatpush1.msra.mxu0 0.0
    %3098 = vmatprep.subr.mxu0 0.0
    %3099 = vmatpush1.msra.mxu0 0.0
    %3100 = vmatprep.subr.mxu0 0.0
    %3101 = vmatpush1.msra.mxu0 0.0
    %3102 = vmatprep.subr.mxu0 0.0
    %3103 = vmatpush1.msra.mxu0 0.0
    %3104 = vmatprep.subr.mxu0 0.0
    %3105 = vmatpush1.msra.mxu0 0.0
    %3106 = vmatprep.subr.mxu0 0.0
    %3107 = vmatpush1.msra.mxu0 0.0
    %3108 = vmatprep.subr.mxu0 0.0
    %3109 = vmatpush1.msra.mxu0 0.0
    %3110 = vmatprep.subr.mxu0 0.0
    %3111 = vmatpush1.msra.mxu0 0.0
    %3112 = vmatprep.subr.mxu0 0.0
    %3113 = vmatpush1.msra.mxu0 0.0
    %3114 = vmatprep.mubr.f32.mxu0 0.0
    %3115 = vmatmul.mubr.f32.gmra.mrb[0].mxu0 %v3048
    %v3116 = vpop.f32.mrb[0].mxu0
    %v3117 = vadd.f32 0.0, %v3116
    %v3118 = vpop.f32.mrb[0].mxu0
    %3119 = vdwg.mxu0
    %3120 = vrot.lane.b32.xlu0 %v639, 104
    %v3121 = vpop.permute.xlu0 %3120
    %v3124 = vsel %vm647, %v2966, 0
    %3126 = vmatprep.subr.mxu0 0.0
    %3127 = vmatpush1.msra.mxu0 %v3121
    %3128 = vmatprep.subr.mxu0 0.0
    %3129 = vmatpush1.msra.mxu0 0.0
    %3130 = vmatprep.subr.mxu0 0.0
    %3131 = vmatpush1.msra.mxu0 0.0
    %3132 = vmatprep.subr.mxu0 0.0
    %3133 = vmatpush1.msra.mxu0 0.0
    %3134 = vmatprep.subr.mxu0 0.0
    %3135 = vmatpush1.msra.mxu0 0.0
    %3136 = vmatprep.subr.mxu0 0.0
    %3137 = vmatpush1.msra.mxu0 0.0
    %3138 = vmatprep.subr.mxu0 0.0
    %3139 = vmatpush1.msra.mxu0 0.0
    %3140 = vmatprep.subr.mxu0 0.0
    %3141 = vmatpush1.msra.mxu0 0.0
    %3142 = vmatprep.subr.mxu0 0.0
    %3143 = vmatpush1.msra.mxu0 0.0
    %3144 = vmatprep.subr.mxu0 0.0
    %3145 = vmatpush1.msra.mxu0 0.0
    %3146 = vmatprep.subr.mxu0 0.0
    %3147 = vmatpush1.msra.mxu0 0.0
    %3148 = vmatprep.subr.mxu0 0.0
    %3149 = vmatpush1.msra.mxu0 0.0
    %3150 = vmatprep.subr.mxu0 0.0
    %3151 = vmatpush1.msra.mxu0 0.0
    %3152 = vmatprep.subr.mxu0 0.0
    %3153 = vmatpush1.msra.mxu0 0.0
    %3154 = vmatprep.subr.mxu0 0.0
    %3155 = vmatpush1.msra.mxu0 0.0
    %3156 = vmatprep.subr.mxu0 0.0
    %3157 = vmatpush1.msra.mxu0 0.0
    %3158 = vmatprep.subr.mxu0 0.0
    %3159 = vmatpush1.msra.mxu0 0.0
    %3160 = vmatprep.subr.mxu0 0.0
    %3161 = vmatpush1.msra.mxu0 0.0
    %3162 = vmatprep.subr.mxu0 0.0
    %3163 = vmatpush1.msra.mxu0 0.0
    %3164 = vmatprep.subr.mxu0 0.0
    %3165 = vmatpush1.msra.mxu0 0.0
    %3166 = vmatprep.subr.mxu0 0.0
    %3167 = vmatpush1.msra.mxu0 0.0
    %3168 = vmatprep.subr.mxu0 0.0
    %3169 = vmatpush1.msra.mxu0 0.0
    %3170 = vmatprep.subr.mxu0 0.0
    %3171 = vmatpush1.msra.mxu0 0.0
    %3172 = vmatprep.subr.mxu0 0.0
    %3173 = vmatpush1.msra.mxu0 0.0
    %3174 = vmatprep.subr.mxu0 0.0
    %3175 = vmatpush1.msra.mxu0 0.0
    %3176 = vmatprep.subr.mxu0 0.0
    %3177 = vmatpush1.msra.mxu0 0.0
    %3178 = vmatprep.subr.mxu0 0.0
    %3179 = vmatpush1.msra.mxu0 0.0
    %3180 = vmatprep.subr.mxu0 0.0
    %3181 = vmatpush1.msra.mxu0 0.0
    %3182 = vmatprep.subr.mxu0 0.0
    %3183 = vmatpush1.msra.mxu0 0.0
    %3184 = vmatprep.subr.mxu0 0.0
    %3185 = vmatpush1.msra.mxu0 0.0
    %3186 = vmatprep.subr.mxu0 0.0
    %3187 = vmatpush1.msra.mxu0 0.0
    %3188 = vmatprep.subr.mxu0 0.0
    %3189 = vmatpush1.msra.mxu0 0.0
    %3190 = vmatprep.mubr.f32.mxu0 0.0
    %3191 = vmatmul.mubr.f32.gmra.mrb[0].mxu0 %v3124
    %v3192 = vpop.f32.mrb[0].mxu0
    %v3193 = vadd.f32 0.0, %v3192
    %v3194 = vpop.f32.mrb[0].mxu0
    %3195 = vdwg.mxu0
    %3196 = vrot.lane.b32.xlu0 %v644, 104
    %v3197 = vpop.permute.xlu0 %3196
    %v3200 = vsel %vm647, %v2967, 0
    %3202 = vmatprep.subr.mxu0 0.0
    %3203 = vmatpush1.msra.mxu0 %v3197
    %3204 = vmatprep.subr.mxu0 0.0
    %3205 = vmatpush1.msra.mxu0 0.0
    %3206 = vmatprep.subr.mxu0 0.0
    %3207 = vmatpush1.msra.mxu0 0.0
    %3208 = vmatprep.subr.mxu0 0.0
    %3209 = vmatpush1.msra.mxu0 0.0
    %3210 = vmatprep.subr.mxu0 0.0
    %3211 = vmatpush1.msra.mxu0 0.0
    %3212 = vmatprep.subr.mxu0 0.0
    %3213 = vmatpush1.msra.mxu0 0.0
    %3214 = vmatprep.subr.mxu0 0.0
    %3215 = vmatpush1.msra.mxu0 0.0
    %3216 = vmatprep.subr.mxu0 0.0
    %3217 = vmatpush1.msra.mxu0 0.0
    %3218 = vmatprep.subr.mxu0 0.0
    %3219 = vmatpush1.msra.mxu0 0.0
    %3220 = vmatprep.subr.mxu0 0.0
    %3221 = vmatpush1.msra.mxu0 0.0
    %3222 = vmatprep.subr.mxu0 0.0
    %3223 = vmatpush1.msra.mxu0 0.0
    %3224 = vmatprep.subr.mxu0 0.0
    %3225 = vmatpush1.msra.mxu0 0.0
    %3226 = vmatprep.subr.mxu0 0.0
    %3227 = vmatpush1.msra.mxu0 0.0
    %3228 = vmatprep.subr.mxu0 0.0
    %3229 = vmatpush1.msra.mxu0 0.0
    %3230 = vmatprep.subr.mxu0 0.0
    %3231 = vmatpush1.msra.mxu0 0.0
    %3232 = vmatprep.subr.mxu0 0.0
    %3233 = vmatpush1.msra.mxu0 0.0
    %3234 = vmatprep.subr.mxu0 0.0
    %3235 = vmatpush1.msra.mxu0 0.0
    %3236 = vmatprep.subr.mxu0 0.0
    %3237 = vmatpush1.msra.mxu0 0.0
    %3238 = vmatprep.subr.mxu0 0.0
    %3239 = vmatpush1.msra.mxu0 0.0
    %3240 = vmatprep.subr.mxu0 0.0
    %3241 = vmatpush1.msra.mxu0 0.0
    %3242 = vmatprep.subr.mxu0 0.0
    %3243 = vmatpush1.msra.mxu0 0.0
    %3244 = vmatprep.subr.mxu0 0.0
    %3245 = vmatpush1.msra.mxu0 0.0
    %3246 = vmatprep.subr.mxu0 0.0
    %3247 = vmatpush1.msra.mxu0 0.0
    %3248 = vmatprep.subr.mxu0 0.0
    %3249 = vmatpush1.msra.mxu0 0.0
    %3250 = vmatprep.subr.mxu0 0.0
    %3251 = vmatpush1.msra.mxu0 0.0
    %3252 = vmatprep.subr.mxu0 0.0
    %3253 = vmatpush1.msra.mxu0 0.0
    %3254 = vmatprep.subr.mxu0 0.0
    %3255 = vmatpush1.msra.mxu0 0.0
    %3256 = vmatprep.subr.mxu0 0.0
    %3257 = vmatpush1.msra.mxu0 0.0
    %3258 = vmatprep.subr.mxu0 0.0
    %3259 = vmatpush1.msra.mxu0 0.0
    %3260 = vmatprep.subr.mxu0 0.0
    %3261 = vmatpush1.msra.mxu0 0.0
    %3262 = vmatprep.subr.mxu0 0.0
    %3263 = vmatpush1.msra.mxu0 0.0
    %3264 = vmatprep.subr.mxu0 0.0
    %3265 = vmatpush1.msra.mxu0 0.0
    %3266 = vmatprep.mubr.f32.mxu0 0.0
    %3267 = vmatmul.mubr.f32.gmra.mrb[0].mxu0 %v3200
    %v3268 = vpop.f32.mrb[0].mxu0
    %v3269 = vadd.f32 0.0, %v3268
    %v3270 = vpop.f32.mrb[0].mxu0
    %3271 = vdwg.mxu0
    %3276 = vrot.lane.b32.xlu0 %v1718, 8
    %v3277 = vpop.permute.xlu0 %3276
    %3278 = vrot.lane.b32.xlu0 %v1795, 8
    %v3279 = vpop.permute.xlu0 %3278
    %3280 = vrot.lane.b32.xlu0 %v1872, 8
    %v3281 = vpop.permute.xlu0 %3280
    %3282 = vrot.lane.b32.xlu0 %v1949, 8
    %v3283 = vpop.permute.xlu0 %3282
    %3292 = vrot.lane.b32.xlu0 %v2381, 16
    %v3293 = vpop.permute.xlu0 %3292
    %3294 = vrot.lane.b32.xlu0 %v2457, 16
    %v3295 = vpop.permute.xlu0 %3294
    %3296 = vrot.lane.b32.xlu0 %v2533, 16
    %v3297 = vpop.permute.xlu0 %3296
    %3298 = vrot.lane.b32.xlu0 %v2609, 16
    %v3299 = vpop.permute.xlu0 %3298
    %3308 = vrot.lane.b32.xlu0 %v3041, 24
    %v3309 = vpop.permute.xlu0 %3308
    %3310 = vrot.lane.b32.xlu0 %v3117, 24
    %v3311 = vpop.permute.xlu0 %3310
    %3312 = vrot.lane.b32.xlu0 %v3193, 24
    %v3313 = vpop.permute.xlu0 %3312
    %3314 = vrot.lane.b32.xlu0 %v3269, 24
    %v3315 = vpop.permute.xlu0 %3314
    %v3320 = vsel %vm647, %v1066, %v3277
    %v3321 = vsel %vm647, %v1139, %v3279
    %v3322 = vsel %vm647, %v1212, %v3281
    %v3323 = vsel %vm647, %v1285, %v3283
    %v3324 = vsel %vm143, %v3320, %v3293
    %v3325 = vsel %vm143, %v3321, %v3295
    %v3326 = vsel %vm143, %v3322, %v3297
    %v3327 = vsel %vm143, %v3323, %v3299
    %vm3328 = vcmask 195584
    %v3329 = vsel %vm3328, %v3324, %v3309
    %v3330 = vsel %vm3328, %v3325, %v3311
    %v3331 = vsel %vm3328, %v3326, %v3313
    %v3332 = vsel %vm3328, %v3327, %v3315
    %v3333 = vld [vmem:[%s2 + $0xa0] sm:$0xff]
    %v3334 = vld [vmem:[%s2 + $0xa8] sm:$0xff]
    %v3335 = vld [vmem:[%s2 + $0xb0] sm:$0xff]
    %v3336 = vld [vmem:[%s2 + $0xb8] sm:$0xff]
    %v3337 = vlaneseq
    %v3338 = vshrl.u32 %v3337, 7
    %v3339 = vsub.s32 6, %v3338
    %v3340 = vrot.slane %v21, %v3339
    %v3342 = vsel %vm39, %v3329, 0
    %v3345 = vsel %vm39, %v3330, 0
    %v3348 = vsel %vm39, %v3331, 0
    %v3351 = vsel %vm39, %v3332, 0
    %3353 = vmatprep.subr.mxu0 0.0
    %3354 = vmatpush1.msra.mxu0 %v3333
    %3355 = vmatprep.subr.mxu0 0.0
    %3356 = vmatpush1.msra.mxu0 %v3334
    %3357 = vmatprep.subr.mxu0 0.0
    %3358 = vmatpush1.msra.mxu0 %v3335
    %3359 = vmatprep.subr.mxu0 0.0
    %3360 = vmatpush1.msra.mxu0 %v3336
    %3361 = vmatprep.subr.mxu0 0.0
    %3362 = vmatpush1.msra.mxu0 0.0
    %3363 = vmatprep.subr.mxu0 0.0
    %3364 = vmatpush1.msra.mxu0 0.0
    %3365 = vmatprep.subr.mxu0 0.0
    %3366 = vmatpush1.msra.mxu0 0.0
    %3367 = vmatprep.subr.mxu0 0.0
    %3368 = vmatpush1.msra.mxu0 0.0
    %3369 = vmatprep.subr.mxu0 0.0
    %3370 = vmatpush1.msra.mxu0 0.0
    %3371 = vmatprep.subr.mxu0 0.0
    %3372 = vmatpush1.msra.mxu0 0.0
    %3373 = vmatprep.subr.mxu0 0.0
    %3374 = vmatpush1.msra.mxu0 0.0
    %3375 = vmatprep.subr.mxu0 0.0
    %3376 = vmatpush1.msra.mxu0 0.0
    %3377 = vmatprep.subr.mxu0 0.0
    %3378 = vmatpush1.msra.mxu0 0.0
    %3379 = vmatprep.subr.mxu0 0.0
    %3380 = vmatpush1.msra.mxu0 0.0
    %3381 = vmatprep.subr.mxu0 0.0
    %3382 = vmatpush1.msra.mxu0 0.0
    %3383 = vmatprep.subr.mxu0 0.0
    %3384 = vmatpush1.msra.mxu0 0.0
    %3385 = vmatprep.subr.mxu0 0.0
    %3386 = vmatpush1.msra.mxu0 0.0
    %3387 = vmatprep.subr.mxu0 0.0
    %3388 = vmatpush1.msra.mxu0 0.0
    %3389 = vmatprep.subr.mxu0 0.0
    %3390 = vmatpush1.msra.mxu0 0.0
    %3391 = vmatprep.subr.mxu0 0.0
    %3392 = vmatpush1.msra.mxu0 0.0
    %3393 = vmatprep.subr.mxu0 0.0
    %3394 = vmatpush1.msra.mxu0 0.0
    %3395 = vmatprep.subr.mxu0 0.0
    %3396 = vmatpush1.msra.mxu0 0.0
    %3397 = vmatprep.subr.mxu0 0.0
    %3398 = vmatpush1.msra.mxu0 0.0
    %3399 = vmatprep.subr.mxu0 0.0
    %3400 = vmatpush1.msra.mxu0 0.0
    %3401 = vmatprep.subr.mxu0 0.0
    %3402 = vmatpush1.msra.mxu0 0.0
    %3403 = vmatprep.subr.mxu0 0.0
    %3404 = vmatpush1.msra.mxu0 0.0
    %3405 = vmatprep.subr.mxu0 0.0
    %3406 = vmatpush1.msra.mxu0 0.0
    %3407 = vmatprep.subr.mxu0 0.0
    %3408 = vmatpush1.msra.mxu0 0.0
    %3409 = vmatprep.subr.mxu0 0.0
    %3410 = vmatpush1.msra.mxu0 0.0
    %3411 = vmatprep.subr.mxu0 0.0
    %3412 = vmatpush1.msra.mxu0 0.0
    %3413 = vmatprep.subr.mxu0 0.0
    %3414 = vmatpush1.msra.mxu0 0.0
    %3415 = vmatprep.subr.mxu0 0.0
    %3416 = vmatpush1.msra.mxu0 0.0
    %3417 = vmatprep.mubr.f32.mxu0 0.0
    %3418 = vmatmul.mubr.f32.gmra.mrb[0].mxu0 %v3342
    %v3419 = vpop.f32.mrb[0].mxu0
    %v3420 = vadd.f32 %v3340, %v3419
    %v3421 = vpop.f32.mrb[0].mxu0
    %3422 = vmatprep.mubr.f32.mxu0 0.0
    %3423 = vmatmul.mubr.f32.gmra.mrb[0].mxu0 %v3345
    %v3424 = vpop.f32.mrb[0].mxu0
    %v3425 = vadd.f32 %v3340, %v3424
    %v3426 = vpop.f32.mrb[0].mxu0
    %3427 = vmatprep.mubr.f32.mxu0 0.0
    %3428 = vmatmul.mubr.f32.gmra.mrb[0].mxu0 %v3348
    %v3429 = vpop.f32.mrb[0].mxu0
    %v3430 = vadd.f32 %v3340, %v3429
    %v3431 = vpop.f32.mrb[0].mxu0
    %3432 = vmatprep.mubr.f32.mxu0 0.0
    %3433 = vmatmul.mubr.f32.gmra.mrb[0].mxu0 %v3351
    %v3434 = vpop.f32.mrb[0].mxu0
    %v3435 = vadd.f32 %v3340, %v3434
    %v3436 = vpop.f32.mrb[0].mxu0
    %3437 = vdwg.mxu0
    %v3438 = vadd.f32 %v3420, %v23
    %v3439 = vadd.f32 %v3425, %v24
    %v3440 = vadd.f32 %v3430, %v25
    %v3441 = vadd.f32 %v3435, %v26
    %v3442 = vsel %vm39, %v3438, 0.0
    %3443 = vadd.xlane.f32.xlu0 %v3442
    %v3444 = vpop.xlane.xlu0 %3443
    %v3445 = vsel %vm39, %v3439, 0.0
    %3446 = vadd.xlane.f32.xlu0 %v3445
    %v3447 = vpop.xlane.xlu0 %3446
    %v3448 = vsel %vm39, %v3440, 0.0
    %3449 = vadd.xlane.f32.xlu0 %v3448
    %v3450 = vpop.xlane.xlu0 %3449
    %v3451 = vsel %vm39, %v3441, 0.0
    %3452 = vadd.xlane.f32.xlu0 %v3451
    %v3453 = vpop.xlane.xlu0 %3452
    %v3454 = vrcp.pop 32.0
    %v3455 = vmul.f32 %v3444, %v3454
    %v3456 = vmul.f32 %v3447, %v3454
    %v3457 = vmul.f32 %v3450, %v3454
    %v3458 = vmul.f32 %v3453, %v3454
    %v3459 = vsub.f32 %v3438, %v3455
    %v3460 = vsub.f32 %v3439, %v3456
    %v3461 = vsub.f32 %v3440, %v3457
    %v3462 = vsub.f32 %v3441, %v3458
    %v3463 = vmul.f32 %v3459, %v3459
    %v3464 = vmul.f32 %v3460, %v3460
    %v3465 = vmul.f32 %v3461, %v3461
    %v3466 = vmul.f32 %v3462, %v3462
    %v3467 = vsel %vm39, %v3463, 0.0
    %3468 = vadd.xlane.f32.xlu0 %v3467
    %v3469 = vpop.xlane.xlu0 %3468
    %v3470 = vsel %vm39, %v3464, 0.0
    %3471 = vadd.xlane.f32.xlu0 %v3470
    %v3472 = vpop.xlane.xlu0 %3471
    %v3473 = vsel %vm39, %v3465, 0.0
    %3474 = vadd.xlane.f32.xlu0 %v3473
    %v3475 = vpop.xlane.xlu0 %3474
    %v3476 = vsel %vm39, %v3466, 0.0
    %3477 = vadd.xlane.f32.xlu0 %v3476
    %v3478 = vpop.xlane.xlu0 %3477
    %v3479 = vmul.f32 %v3469, %v3454
    %v3480 = vmul.f32 %v3472, %v3454
    %v3481 = vmul.f32 %v3475, %v3454
    %v3482 = vmul.f32 %v3478, %v3454
    %v3483 = vadd.f32 %v3479, 1e-05
    %v3484 = vadd.f32 %v3480, 1e-05
    %v3485 = vadd.f32 %v3481, 1e-05
    %v3486 = vadd.f32 %v3482, 1e-05
    %v3487 = vrsqrt.pop %v3483
    %v3488 = vrsqrt.pop %v3484
    %v3489 = vrsqrt.pop %v3485
    %v3490 = vrsqrt.pop %v3486
    %v3491 = vmul.f32 %v3459, %v3487
    %v3492 = vmul.f32 %v3460, %v3488
    %v3493 = vmul.f32 %v3461, %v3489
    %v3494 = vmul.f32 %v3462, %v3490
    %v3495 = vlaneseq
    %v3496 = vshrl.u32 %v3495, 7
    %v3497 = vsub.s32 7, %v3496
    %v3498 = vrot.slane %v21, %v3497
    %v3499 = vmul.f32 %v3491, %v3498
    %v3500 = vmul.f32 %v3492, %v3498
    %v3501 = vmul.f32 %v3493, %v3498
    %v3502 = vmul.f32 %v3494, %v3498
    %v3503 = vlaneseq
    %v3504 = vshrl.u32 %v3503, 7
    %v3505 = vsub.s32 0, %v3504
    %v3506 = vrot.slane %v22, %v3505
    %v3507 = vadd.f32 %v3499, %v3506
    %v3508 = vadd.f32 %v3500, %v3506
    %v3509 = vadd.f32 %v3501, %v3506
    %v3510 = vadd.f32 %v3502, %v3506
    %v3511 = vld [vmem:[%s3] sm:$0xff]
    %v3512 = vld [vmem:[%s3 + $0x8] sm:$0xff]
    %v3513 = vld [vmem:[%s3 + $0x10] sm:$0xff]
    %v3514 = vld [vmem:[%s3 + $0x18] sm:$0xff]
    %v3515 = vlaneseq
    %v3516 = vshrl.u32 %v3515, 7
    %v3517 = vsub.s32 1, %v3516
    %v3518 = vrot.slane %v22, %v3517
    %v3520 = vsel %vm39, %v3507, 0
    %v3523 = vsel %vm39, %v3508, 0
    %v3526 = vsel %vm39, %v3509, 0
    %v3529 = vsel %vm39, %v3510, 0
    %3531 = vmatprep.subr.mxu0 0.0
    %3532 = vmatpush1.msra.mxu0 %v3511
    %3533 = vmatprep.subr.mxu0 0.0
    %3534 = vmatpush1.msra.mxu0 %v3512
    %3535 = vmatprep.subr.mxu0 0.0
    %3536 = vmatpush1.msra.mxu0 %v3513
    %3537 = vmatprep.subr.mxu0 0.0
    %3538 = vmatpush1.msra.mxu0 %v3514
    %3539 = vmatprep.subr.mxu0 0.0
    %3540 = vmatpush1.msra.mxu0 0.0
    %3541 = vmatprep.subr.mxu0 0.0
    %3542 = vmatpush1.msra.mxu0 0.0
    %3543 = vmatprep.subr.mxu0 0.0
    %3544 = vmatpush1.msra.mxu0 0.0
    %3545 = vmatprep.subr.mxu0 0.0
    %3546 = vmatpush1.msra.mxu0 0.0
    %3547 = vmatprep.subr.mxu0 0.0
    %3548 = vmatpush1.msra.mxu0 0.0
    %3549 = vmatprep.subr.mxu0 0.0
    %3550 = vmatpush1.msra.mxu0 0.0
    %3551 = vmatprep.subr.mxu0 0.0
    %3552 = vmatpush1.msra.mxu0 0.0
    %3553 = vmatprep.subr.mxu0 0.0
    %3554 = vmatpush1.msra.mxu0 0.0
    %3555 = vmatprep.subr.mxu0 0.0
    %3556 = vmatpush1.msra.mxu0 0.0
    %3557 = vmatprep.subr.mxu0 0.0
    %3558 = vmatpush1.msra.mxu0 0.0
    %3559 = vmatprep.subr.mxu0 0.0
    %3560 = vmatpush1.msra.mxu0 0.0
    %3561 = vmatprep.subr.mxu0 0.0
    %3562 = vmatpush1.msra.mxu0 0.0
    %3563 = vmatprep.subr.mxu0 0.0
    %3564 = vmatpush1.msra.mxu0 0.0
    %3565 = vmatprep.subr.mxu0 0.0
    %3566 = vmatpush1.msra.mxu0 0.0
    %3567 = vmatprep.subr.mxu0 0.0
    %3568 = vmatpush1.msra.mxu0 0.0
    %3569 = vmatprep.subr.mxu0 0.0
    %3570 = vmatpush1.msra.mxu0 0.0
    %3571 = vmatprep.subr.mxu0 0.0
    %3572 = vmatpush1.msra.mxu0 0.0
    %3573 = vmatprep.subr.mxu0 0.0
    %3574 = vmatpush1.msra.mxu0 0.0
    %3575 = vmatprep.subr.mxu0 0.0
    %3576 = vmatpush1.msra.mxu0 0.0
    %3577 = vmatprep.subr.mxu0 0.0
    %3578 = vmatpush1.msra.mxu0 0.0
    %3579 = vmatprep.subr.mxu0 0.0
    %3580 = vmatpush1.msra.mxu0 0.0
    %3581 = vmatprep.subr.mxu0 0.0
    %3582 = vmatpush1.msra.mxu0 0.0
    %3583 = vmatprep.subr.mxu0 0.0
    %3584 = vmatpush1.msra.mxu0 0.0
    %3585 = vmatprep.subr.mxu0 0.0
    %3586 = vmatpush1.msra.mxu0 0.0
    %3587 = vmatprep.subr.mxu0 0.0
    %3588 = vmatpush1.msra.mxu0 0.0
    %3589 = vmatprep.subr.mxu0 0.0
    %3590 = vmatpush1.msra.mxu0 0.0
    %3591 = vmatprep.subr.mxu0 0.0
    %3592 = vmatpush1.msra.mxu0 0.0
    %3593 = vmatprep.subr.mxu0 0.0
    %3594 = vmatpush1.msra.mxu0 0.0
    %3595 = vmatprep.mubr.f32.mxu0 0.0
    %3596 = vmatmul.mubr.f32.gmra.mrb[0].mxu0 %v3520
    %v3597 = vpop.f32.mrb[0].mxu0
    %v3598 = vadd.f32 %v3518, %v3597
    %v3599 = vpop.f32.mrb[0].mxu0
    %3600 = vmatprep.mubr.f32.mxu0 0.0
    %3601 = vmatmul.mubr.f32.gmra.mrb[0].mxu0 %v3523
    %v3602 = vpop.f32.mrb[0].mxu0
    %v3603 = vadd.f32 %v3518, %v3602
    %v3604 = vpop.f32.mrb[0].mxu0
    %3605 = vmatprep.mubr.f32.mxu0 0.0
    %3606 = vmatmul.mubr.f32.gmra.mrb[0].mxu0 %v3526
    %v3607 = vpop.f32.mrb[0].mxu0
    %v3608 = vadd.f32 %v3518, %v3607
    %v3609 = vpop.f32.mrb[0].mxu0
    %3610 = vmatprep.mubr.f32.mxu0 0.0
    %3611 = vmatmul.mubr.f32.gmra.mrb[0].mxu0 %v3529
    %v3612 = vpop.f32.mrb[0].mxu0
    %v3613 = vadd.f32 %v3518, %v3612
    %v3614 = vpop.f32.mrb[0].mxu0
    %3615 = vdwg.mxu0
    %v3616 = vmul.f32 %v3598, 0.5
    %v3617 = vmul.f32 %v3603, 0.5
    %v3618 = vmul.f32 %v3608, 0.5
    %v3619 = vmul.f32 %v3613, 0.5
    %v3620 = vmul.f32 %v3598, 0.044715
    %v3621 = vmul.f32 %v3603, 0.044715
    %v3622 = vmul.f32 %v3608, 0.044715
    %v3623 = vmul.f32 %v3613, 0.044715
    %v3624 = vmul.f32 %v3620, %v3598
    %v3625 = vmul.f32 %v3621, %v3603
    %v3626 = vmul.f32 %v3622, %v3608
    %v3627 = vmul.f32 %v3623, %v3613
    %v3628 = vmul.f32 %v3624, %v3598
    %v3629 = vmul.f32 %v3625, %v3603
    %v3630 = vmul.f32 %v3626, %v3608
    %v3631 = vmul.f32 %v3627, %v3613
    %v3632 = vadd.f32 %v3598, %v3628
    %v3633 = vadd.f32 %v3603, %v3629
    %v3634 = vadd.f32 %v3608, %v3630
    %v3635 = vadd.f32 %v3613, %v3631
    %v3636 = vmul.f32 %v3632, 0.7978846
    %v3637 = vmul.f32 %v3633, 0.7978846
    %v3638 = vmul.f32 %v3634, 0.7978846
    %v3639 = vmul.f32 %v3635, 0.7978846
    %v3640 = vtanh.pop %v3636
    %v3641 = vtanh.pop %v3637
    %v3642 = vtanh.pop %v3638
    %v3643 = vtanh.pop %v3639
    %v3644 = vadd.f32 %v3640, 1.0
    %v3645 = vadd.f32 %v3641, 1.0
    %v3646 = vadd.f32 %v3642, 1.0
    %v3647 = vadd.f32 %v3643, 1.0
    %v3648 = vmul.f32 %v3616, %v3644
    %v3649 = vmul.f32 %v3617, %v3645
    %v3650 = vmul.f32 %v3618, %v3646
    %v3651 = vmul.f32 %v3619, %v3647
    %v3652 = vld [vmem:[%s2 + $0xc0] sm:$0xff]
    %v3653 = vld [vmem:[%s2 + $0xc8] sm:$0xff]
    %v3654 = vld [vmem:[%s2 + $0xd0] sm:$0xff]
    %v3655 = vld [vmem:[%s2 + $0xd8] sm:$0xff]
    %v3656 = vld [vmem:[%s2 + $0xe0] sm:$0xff]
    %v3657 = vld [vmem:[%s2 + $0xe8] sm:$0xff]
    %v3658 = vld [vmem:[%s2 + $0xf0] sm:$0xff]
    %v3659 = vld [vmem:[%s2 + $0xf8] sm:$0xff]
    %v3660 = vlaneseq
    %v3661 = vshrl.u32 %v3660, 7
    %v3662 = vsub.s32 2, %v3661
    %v3663 = vrot.slane %v22, %v3662
    %vm3664 = vcmask 523264
    %v3666 = vsel %vm3664, %v3648, 0
    %v3669 = vsel %vm3664, %v3649, 0
    %v3672 = vsel %vm3664, %v3650, 0
    %v3675 = vsel %vm3664, %v3651, 0
    %3677 = vmatprep.subr.mxu0 0.0
    %3678 = vmatpush1.msra.mxu0 %v3652
    %3679 = vmatprep.subr.mxu0 0.0
    %3680 = vmatpush1.msra.mxu0 %v3653
    %3681 = vmatprep.subr.mxu0 0.0
    %3682 = vmatpush1.msra.mxu0 %v3654
    %3683 = vmatprep.subr.mxu0 0.0
    %3684 = vmatpush1.msra.mxu0 %v3655
    %3685 = vmatprep.subr.mxu0 0.0
    %3686 = vmatpush1.msra.mxu0 %v3656
    %3687 = vmatprep.subr.mxu0 0.0
    %3688 = vmatpush1.msra.mxu0 %v3657
    %3689 = vmatprep.subr.mxu0 0.0
    %3690 = vmatpush1.msra.mxu0 %v3658
    %3691 = vmatprep.subr.mxu0 0.0
    %3692 = vmatpush1.msra.mxu0 %v3659
    %3693 = vmatprep.subr.mxu0 0.0
    %3694 = vmatpush1.msra.mxu0 0.0
    %3695 = vmatprep.subr.mxu0 0.0
    %3696 = vmatpush1.msra.mxu0 0.0
    %3697 = vmatprep.subr.mxu0 0.0
    %3698 = vmatpush1.msra.mxu0 0.0
    %3699 = vmatprep.subr.mxu0 0.0
    %3700 = vmatpush1.msra.mxu0 0.0
    %3701 = vmatprep.subr.mxu0 0.0
    %3702 = vmatpush1.msra.mxu0 0.0
    %3703 = vmatprep.subr.mxu0 0.0
    %3704 = vmatpush1.msra.mxu0 0.0
    %3705 = vmatprep.subr.mxu0 0.0
    %3706 = vmatpush1.msra.mxu0 0.0
    %3707 = vmatprep.subr.mxu0 0.0
    %3708 = vmatpush1.msra.mxu0 0.0
    %3709 = vmatprep.subr.mxu0 0.0
    %3710 = vmatpush1.msra.mxu0 0.0
    %3711 = vmatprep.subr.mxu0 0.0
    %3712 = vmatpush1.msra.mxu0 0.0
    %3713 = vmatprep.subr.mxu0 0.0
    %3714 = vmatpush1.msra.mxu0 0.0
    %3715 = vmatprep.subr.mxu0 0.0
    %3716 = vmatpush1.msra.mxu0 0.0
    %3717 = vmatprep.subr.mxu0 0.0
    %3718 = vmatpush1.msra.mxu0 0.0
    %3719 = vmatprep.subr.mxu0 0.0
    %3720 = vmatpush1.msra.mxu0 0.0
    %3721 = vmatprep.subr.mxu0 0.0
    %3722 = vmatpush1.msra.mxu0 0.0
    %3723 = vmatprep.subr.mxu0 0.0
    %3724 = vmatpush1.msra.mxu0 0.0
    %3725 = vmatprep.subr.mxu0 0.0
    %3726 = vmatpush1.msra.mxu0 0.0
    %3727 = vmatprep.subr.mxu0 0.0
    %3728 = vmatpush1.msra.mxu0 0.0
    %3729 = vmatprep.subr.mxu0 0.0
    %3730 = vmatpush1.msra.mxu0 0.0
    %3731 = vmatprep.subr.mxu0 0.0
    %3732 = vmatpush1.msra.mxu0 0.0
    %3733 = vmatprep.subr.mxu0 0.0
    %3734 = vmatpush1.msra.mxu0 0.0
    %3735 = vmatprep.subr.mxu0 0.0
    %3736 = vmatpush1.msra.mxu0 0.0
    %3737 = vmatprep.subr.mxu0 0.0
    %3738 = vmatpush1.msra.mxu0 0.0
    %3739 = vmatprep.subr.mxu0 0.0
    %3740 = vmatpush1.msra.mxu0 0.0
    %3741 = vmatprep.mubr.f32.mxu0 0.0
    %3742 = vmatmul.mubr.f32.gmra.mrb[0].mxu0 %v3666
    %v3743 = vpop.f32.mrb[0].mxu0
    %v3744 = vadd.f32 %v3663, %v3743
    %v3745 = vpop.f32.mrb[0].mxu0
    %3746 = vmatprep.mubr.f32.mxu0 0.0
    %3747 = vmatmul.mubr.f32.gmra.mrb[0].mxu0 %v3669
    %v3748 = vpop.f32.mrb[0].mxu0
    %v3749 = vadd.f32 %v3663, %v3748
    %v3750 = vpop.f32.mrb[0].mxu0
    %3751 = vmatprep.mubr.f32.mxu0 0.0
    %3752 = vmatmul.mubr.f32.gmra.mrb[0].mxu0 %v3672
    %v3753 = vpop.f32.mrb[0].mxu0
    %v3754 = vadd.f32 %v3663, %v3753
    %v3755 = vpop.f32.mrb[0].mxu0
    %3756 = vmatprep.mubr.f32.mxu0 0.0
    %3757 = vmatmul.mubr.f32.gmra.mrb[0].mxu0 %v3675
    %v3758 = vpop.f32.mrb[0].mxu0
    %v3759 = vadd.f32 %v3663, %v3758
    %v3760 = vpop.f32.mrb[0].mxu0
    %3761 = vdwg.mxu0
    %v3762 = vadd.f32 %v3507, %v3744
    %v3763 = vadd.f32 %v3508, %v3749
    %v3764 = vadd.f32 %v3509, %v3754
    %v3765 = vadd.f32 %v3510, %v3759
    %v3766 = vsel %vm39, %v3762, 0.0
    %3767 = vadd.xlane.f32.xlu0 %v3766
    %v3768 = vpop.xlane.xlu0 %3767
    %v3769 = vsel %vm39, %v3763, 0.0
    %3770 = vadd.xlane.f32.xlu0 %v3769
    %v3771 = vpop.xlane.xlu0 %3770
    %v3772 = vsel %vm39, %v3764, 0.0
    %3773 = vadd.xlane.f32.xlu0 %v3772
    %v3774 = vpop.xlane.xlu0 %3773
    %v3775 = vsel %vm39, %v3765, 0.0
    %3776 = vadd.xlane.f32.xlu0 %v3775
    %v3777 = vpop.xlane.xlu0 %3776
    %v3778 = vmul.f32 %v3768, %v3454
    %v3779 = vmul.f32 %v3771, %v3454
    %v3780 = vmul.f32 %v3774, %v3454
    %v3781 = vmul.f32 %v3777, %v3454
    %v3782 = vsub.f32 %v3762, %v3778
    %v3783 = vsub.f32 %v3763, %v3779
    %v3784 = vsub.f32 %v3764, %v3780
    %v3785 = vsub.f32 %v3765, %v3781
    %v3786 = vmul.f32 %v3782, %v3782
    %v3787 = vmul.f32 %v3783, %v3783
    %v3788 = vmul.f32 %v3784, %v3784
    %v3789 = vmul.f32 %v3785, %v3785
    %v3790 = vsel %vm39, %v3786, 0.0
    %3791 = vadd.xlane.f32.xlu0 %v3790
    %v3792 = vpop.xlane.xlu0 %3791
    %v3793 = vsel %vm39, %v3787, 0.0
    %3794 = vadd.xlane.f32.xlu0 %v3793
    %v3795 = vpop.xlane.xlu0 %3794
    %v3796 = vsel %vm39, %v3788, 0.0
    %3797 = vadd.xlane.f32.xlu0 %v3796
    %v3798 = vpop.xlane.xlu0 %3797
    %v3799 = vsel %vm39, %v3789, 0.0
    %3800 = vadd.xlane.f32.xlu0 %v3799
    %v3801 = vpop.xlane.xlu0 %3800
    %v3802 = vmul.f32 %v3792, %v3454
    %v3803 = vmul.f32 %v3795, %v3454
    %v3804 = vmul.f32 %v3798, %v3454
    %v3805 = vmul.f32 %v3801, %v3454
    %v3806 = vadd.f32 %v3802, 1e-05
    %v3807 = vadd.f32 %v3803, 1e-05
    %v3808 = vadd.f32 %v3804, 1e-05
    %v3809 = vadd.f32 %v3805, 1e-05
    %v3810 = vrsqrt.pop %v3806
    %v3811 = vrsqrt.pop %v3807
    %v3812 = vrsqrt.pop %v3808
    %v3813 = vrsqrt.pop %v3809
    %v3814 = vmul.f32 %v3782, %v3810
    %v3815 = vmul.f32 %v3783, %v3811
    %v3816 = vmul.f32 %v3784, %v3812
    %v3817 = vmul.f32 %v3785, %v3813
    %v3818 = vlaneseq
    %v3819 = vshrl.u32 %v3818, 7
    %v3820 = vsub.s32 3, %v3819
    %v3821 = vrot.slane %v22, %v3820
    %v3822 = vmul.f32 %v3814, %v3821
    %v3823 = vmul.f32 %v3815, %v3821
    %v3824 = vmul.f32 %v3816, %v3821
    %v3825 = vmul.f32 %v3817, %v3821
    %v3826 = vlaneseq
    %v3827 = vshrl.u32 %v3826, 7
    %v3828 = vsub.s32 4, %v3827
    %v3829 = vrot.slane %v22, %v3828
    %v3830 = vadd.f32 %v3822, %v3829
    %v3831 = vadd.f32 %v3823, %v3829
    %v3832 = vadd.f32 %v3824, %v3829
    %v3833 = vadd.f32 %v3825, %v3829
    %v3834 = vsel %vm39, %v3830, 0.0
    %v3835 = vsel %vm39, %v3831, 0.0
    %v3836 = vsel %vm39, %v3832, 0.0
    %v3837 = vsel %vm39, %v3833, 0.0
    %3838 = vst [vmem:[#allocation2] sm:$0xff] %v3834
    %3839 = vst [vmem:[#allocation2 + $0x8] sm:$0xff] %v3835
    %3840 = vst [vmem:[#allocation2 + $0x10] sm:$0xff] %v3836
    %3841 = vst [vmem:[#allocation2 + $0x18] sm:$0xff] %v3837
    // Predicated region
    $region22: #{tpu_custom_call.1} parent=1 // pred_check
      _
    $region23: #{tpu_custom_call.1} parent=1 // pred_check_branch
      %3843 = sbr.rel (0) target = $region25
    $region24: #{tpu_custom_call.1} parent=1 // pred_region
      %s3845 = ssub.s32 512, 512
      %3846 = vsyncadd [#allocation3], %s3845
      %s3847 = sshll.u32 [#allocation2], 4
      %s3848 = int_to_ptr.vmem [resolvable:$true] %s3847
      %3853 = dma.vmem_to_hbm [thread:$0]  %s3848, 512, %s5, [#allocation3], 128, 128, 8
    $region25: #{tpu_custom_call.1} parent=1 // pred_fallthru
      _
    // Predicated region
    $region26: #{tpu_custom_call.1} parent=1 // pred_check
      _
    $region27: #{tpu_custom_call.1} parent=1 // pred_check_branch
      %3855 = sbr.rel (0) target = $region29
    $region28: #{tpu_custom_call.1} parent=1 // pred_region
      %3856 = dma.done [#allocation3], 512
    $region29: #{tpu_custom_call.1} parent=1 // pred_fallthru
      _
    %3857 = vsyncpa [#allocation3], 1

</llo_original>
